<compile_context>
chip_gen: v5e
topology: v5e:2x2
jax: 0.10.0
libtpu: 0.0.40
codegen_flags: <defaults>
</compile_context>

<pallas_src>
import numpy as np
import jax
import jax.numpy as jnp
from jax.experimental import pallas as pl
from jax.experimental.pallas import tpu as pltpu

# ----------------------------- small synthetic config -----------------------------
B, T = 2, 16
CHROMA_DIM = 24          # cfg.chromagram_dim
HIDDEN = 32              # hidden_size
VOCOS_DIM = 32           # cfg.{encoder,decoder}.vocos_dim
VOCOS_INTER = 64         # cfg.{encoder,decoder}.vocos_intermediate_dim
VOCOS_LAYERS = 2         # cfg.{encoder,decoder}.vocos_num_layers
CODEBOOK_SIZE = 64
CODEBOOK_DIM = 8
NUM_QUANTIZERS = 1
COMMITMENT = 0.15
CODEBOOK_LOSS_WEIGHT = 1.0
LN_EPS = 1e-6            # Vocos LayerNorm eps
KSIZE = 7                # Vocos conv kernel size (padding = 3)
PAD = (KSIZE - 1) // 2
LANES = 128              # lane width of the parameter slabs


# ============================ host-side parameter packing ==========================

class _MatSlab:
    """Packs 2-D matrices row-wise into one (R, 128) f32 slab.  Every matrix starts at
    an 8-aligned sublane offset, so in-kernel static slices stay tile-aligned."""

    def __init__(self):
        self._chunks, self.index, self._off = [], {}, 0

    def add(self, name, arr):
        a = np.asarray(arr, np.float32)
        r, c = a.shape
        rp = ((r + 7) // 8) * 8
        buf = np.zeros((rp, LANES), np.float32)
        buf[:r, :c] = a
        self._chunks.append(buf)
        self.index[name] = (self._off, r, c)
        self._off += rp

    def finish(self):
        return jnp.asarray(np.concatenate(self._chunks, axis=0)), self.index


class _VecSlab:
    """Packs 1-D vectors (biases / gains / gammas) one per 128-lane row."""

    def __init__(self):
        self._rows, self.index = [], {}

    def add(self, name, vec):
        v = np.asarray(vec, np.float32).reshape(-1)
        row = np.zeros((LANES,), np.float32)
        row[: v.shape[0]] = v
        self.index[name] = (len(self._rows), v.shape[0])
        self._rows.append(row)

    def finish(self):
        n = len(self._rows)
        npad = ((n + 7) // 8) * 8
        slab = np.zeros((npad, LANES), np.float32)
        slab[:n] = np.stack(self._rows, axis=0)
        return jnp.asarray(slab), self.index


def _stacked_shifts(Bb, Tt):
    """(K*M, M) 0/1 matrix.  Row k*M + i selects x[i + k - PAD] within the same
    length-Tt segment of the flattened (B*T, C) layout and zero otherwise, so one
    matmul produces every 'same'-padded tap (halo + batch boundary handled)."""
    M = Bb * Tt
    s = np.zeros((KSIZE * M, M), np.float32)
    for k in range(KSIZE):
        d = k - PAD
        for i in range(M):
            j = i + d
            if 0 <= j < M and (i // Tt) == (j // Tt):
                s[k * M + i, j] = 1.0
    return s


def pack_params(params, Bb, Tt):
    """Pack every weight into two contiguous slabs (matrices + vectors)."""
    ws, vs = _MatSlab(), _VecSlab()
    ws.add("shifts", _stacked_shifts(Bb, Tt))
    ws.add("chroma_in_w", params["chroma_in_w"])
    vs.add("chroma_in_b", params["chroma_in_b"])
    for tag, bp in (("enc", params["encoder"]), ("dec", params["decoder"])):
        K, cin, cout = bp["embed_w"].shape
        ws.add(f"{tag}.embed_w", np.asarray(bp["embed_w"]).reshape(K * cin, cout))
        vs.add(f"{tag}.embed_b", bp["embed_b"])
        vs.add(f"{tag}.norm_g", bp["norm_g"])
        vs.add(f"{tag}.norm_b", bp["norm_b"])
        vs.add(f"{tag}.final_g", bp["final_g"])
        vs.add(f"{tag}.final_b", bp["final_b"])
        for l, blk in enumerate(bp["blocks"]):
            pre = f"{tag}.b{l}."
            ws.add(pre + "dw_w", blk["dw_w"])
            vs.add(pre + "dw_b", blk["dw_b"])
            vs.add(pre + "ln_g", blk["ln_g"])
            vs.add(pre + "ln_b", blk["ln_b"])
            ws.add(pre + "pw1_w", blk["pw1_w"])
            vs.add(pre + "pw1_b", blk["pw1_b"])
            ws.add(pre + "pw2_w", blk["pw2_w"])
            vs.add(pre + "pw2_b", blk["pw2_b"])
            vs.add(pre + "gamma", blk["gamma"])
    ws.add("enc_out_w", params["enc_out_w"]);  vs.add("enc_out_b", params["enc_out_b"])
    ws.add("vq_in_w", params["vq_in_w"]);      vs.add("vq_in_b", params["vq_in_b"])
    ws.add("codebook", params["codebook"])
    ws.add("vq_out_w", params["vq_out_w"]);    vs.add("vq_out_b", params["vq_out_b"])
    ws.add("dec_out_w", params["dec_out_w"]);  vs.add("dec_out_b", params["dec_out_b"])
    ws.add("out_w", params["out_w"]);          vs.add("out_b", params["out_b"])
    w_slab, w_idx = ws.finish()
    v_slab, v_idx = vs.finish()
    return (w_slab, v_slab), (w_idx, v_idx)


# =============================== fused forward pass ================================

def make_coco_forward(w_idx, v_idx, Bb, Tt):
    """Returns a jitted forward(chroma, w_slab, v_slab) -> (rec, codebook_loss, indices)
    that runs the entire CocoStyle forward in a single Pallas kernel."""
    M = Bb * Tt

    def kernel(x_ref, w_ref, v_ref, rec_ref, loss_ref, idx_ref):
        # ---- static slab slicing (free) ----
        def W(name):
            off, r, c = w_idx[name]
            return w_ref[off:off + r, 0:c]

        def V(name):
            i, c = v_idx[name]
            return v_ref[i:i + 1, 0:c]

        def mxu(a, b):
            # bf16 operands -> single-pass MXU matmul, f32 accumulation.
            return jnp.dot(a.astype(jnp.bfloat16), b.astype(jnp.bfloat16),
                           preferred_element_type=jnp.float32)

        def linear(x, wn, bn):
            return mxu(x, W(wn)) + V(bn)

        def layernorm(x, gn, bn):
            mu = jnp.mean(x, axis=-1, keepdims=True)
            var = jnp.mean((x - mu) ** 2, axis=-1, keepdims=True)
            return (x - mu) * jax.lax.rsqrt(var + LN_EPS) * V(gn) + V(bn)

        shifts = W("shifts")                               # (K*M, M), exactly 0/1 in bf16

        def stacked_taps(x):
            # ONE MXU push for all 7 taps: row k*M + i of the result is x[i + k - PAD]
            # (zero-filled at the 'same' halo and at batch boundaries).
            return mxu(shifts, x)                          # (K*M, C)

        def conv_full(x, tag):
            # 'same' Conv1d (Cin -> Cout) as a single im2col matmul; im2col lives in vregs.
            s = stacked_taps(x)
            im2col = jnp.concatenate([s[k * M:(k + 1) * M, :] for k in range(KSIZE)],
                                     axis=1)               # (M, K*Cin), no VMEM scratch
            return mxu(im2col, W(f"{tag}.embed_w")) + V(f"{tag}.embed_b")

        def conv_dw(x, pre):
            # depthwise 'same' Conv1d: taps from one MXU push, 7 VPU multiply-adds.
            s = stacked_taps(x)
            dw = W(pre + "dw_w")                           # (K, C), loaded once per block
            acc = V(pre + "dw_b")
            for k in range(KSIZE):
                acc = acc + s[k * M:(k + 1) * M, :] * dw[k:k + 1, :]
            return acc

        def backbone(x, tag):                              # VocosBackbone
            h = conv_full(x, tag)
            h = layernorm(h, f"{tag}.norm_g", f"{tag}.norm_b")
            for l in range(VOCOS_LAYERS):                  # ConvNeXt blocks
                pre = f"{tag}.b{l}."
                y = conv_dw(h, pre)
                y = layernorm(y, pre + "ln_g", pre + "ln_b")
                # tanh-GELU runs on the EUP; torch nn.GELU is exact-erf (tiny numeric delta).
                y = jax.nn.gelu(linear(y, pre + "pw1_w", pre + "pw1_b"), approximate=True)
                h = h + V(pre + "gamma") * linear(y, pre + "pw2_w", pre + "pw2_b")
            return layernorm(h, f"{tag}.final_g", f"{tag}.final_b")

        # ----- chromagram_input_layer + encoder (VocosBackbone + Linear) -----
        x = linear(x_ref[...], "chroma_in_w", "chroma_in_b")          # (M, H)
        h = backbone(x, "enc")
        h = linear(h, "enc_out_w", "enc_out_b")                       # (M, H)

        # ----- FactorizedVectorQuantize: l2-normalized lookup, raw-codebook decode -----
        z_e = linear(h, "vq_in_w", "vq_in_b")                         # (M, D)
        cb = W("codebook")                                            # (Kc, D)
        # TODO(synk): torch F.normalize clamps the norm at 1e-12; rsqrt(sumsq+1e-24) differs
        # only for near-zero vectors.
        en = z_e * jax.lax.rsqrt(jnp.sum(z_e * z_e, axis=-1, keepdims=True) + 1e-24)
        cn = cb * jax.lax.rsqrt(jnp.sum(cb * cb, axis=-1, keepdims=True) + 1e-24)
        scores = jax.lax.dot_general(en, cn, (((1,), (1,)), ((), ())),
                                     preferred_element_type=jnp.float32)   # (M, Kc) f32
        kc = scores.shape[1]
        smax = jnp.max(scores, axis=-1, keepdims=True)
        iota = jax.lax.broadcasted_iota(jnp.int32, scores.shape, 1)
        idx = jnp.min(jnp.where(scores >= smax, iota, kc),
                      axis=-1, keepdims=True)                          # first-max tie-break
        idx_ref[...] = idx.astype(jnp.int32)
        z_q = jnp.dot((iota == idx).astype(jnp.float32), cb,
                      preferred_element_type=jnp.float32)              # (M, D)

        # codebook + commitment loss (equal batch lengths -> mean of per-batch means == global mean)
        d2 = (z_e - z_q) ** 2
        tot = jnp.sum(jnp.sum(d2, axis=-1, keepdims=True), axis=0, keepdims=True)  # (1, 1)
        loss_ref[...] = (COMMITMENT + CODEBOOK_LOSS_WEIGHT) * tot / float(d2.size)

        # ----- decoder (VocosBackbone + Linear) + chromagram_output_layer -----
        q = linear(z_q, "vq_out_w", "vq_out_b")                        # (M, H)
        h = backbone(q, "dec")
        h = linear(h, "dec_out_w", "dec_out_b")                        # (M, H)
        rec_ref[...] = linear(h, "out_w", "out_b")                     # (M, CHROMA_DIM)

    def forward(chroma, w_slab, v_slab):
        x2d = chroma.reshape(M, CHROMA_DIM)
        out_shape = (
            jax.ShapeDtypeStruct((M, CHROMA_DIM), jnp.float32),
            jax.ShapeDtypeStruct((1, 1), jnp.float32),
            jax.ShapeDtypeStruct((M, 1), jnp.int32),
        )
        rec2d, loss, idx = pl.pallas_call(
            kernel,
            out_shape=out_shape,
            grid=(1,),
            in_specs=[
                pl.BlockSpec(x2d.shape, lambda i: (0, 0)),
                pl.BlockSpec(w_slab.shape, lambda i: (0, 0)),
                pl.BlockSpec(v_slab.shape, lambda i: (0, 0)),
            ],
            out_specs=(
                pl.BlockSpec((M, CHROMA_DIM), lambda i: (0, 0)),
                pl.BlockSpec((1, 1), lambda i: (0, 0)),
                pl.BlockSpec((M, 1), lambda i: (0, 0)),
            ),
            compiler_params=pltpu.CompilerParams(dimension_semantics=("arbitrary",)),
        )(x2d, w_slab, v_slab)

        chroma_rec = rec2d.reshape(Bb, Tt, CHROMA_DIM)
        codebook_loss = loss[0, 0]
        all_indices = idx[:, 0].reshape(NUM_QUANTIZERS, Bb, Tt)        # (N=1, B, T)
        return chroma_rec, codebook_loss, all_indices

    return jax.jit(forward)


# ================================== parameter init ==================================

def init_params(key):
    keys = iter(jax.random.split(key, 256))

    def tn(shape, std=0.02):
        # nn.init.trunc_normal_(std=0.02); biases zeroed by init_weights
        return (std * jax.random.truncated_normal(next(keys), -2.0, 2.0, shape)).astype(jnp.float32)

    def backbone(in_ch):
        p = {
            "embed_w": tn((KSIZE, in_ch, VOCOS_DIM)),
            "embed_b": jnp.zeros((VOCOS_DIM,), jnp.float32),
            "norm_g": jnp.ones((VOCOS_DIM,), jnp.float32),
            "norm_b": jnp.zeros((VOCOS_DIM,), jnp.float32),
            "final_g": jnp.ones((VOCOS_DIM,), jnp.float32),
            "final_b": jnp.zeros((VOCOS_DIM,), jnp.float32),
            "blocks": [],
        }
        for _ in range(VOCOS_LAYERS):
            p["blocks"].append({
                "dw_w": tn((KSIZE, VOCOS_DIM)),
                "dw_b": jnp.zeros((VOCOS_DIM,), jnp.float32),
                "ln_g": jnp.ones((VOCOS_DIM,), jnp.float32),
                "ln_b": jnp.zeros((VOCOS_DIM,), jnp.float32),
                "pw1_w": tn((VOCOS_DIM, VOCOS_INTER)),
                "pw1_b": jnp.zeros((VOCOS_INTER,), jnp.float32),
                "pw2_w": tn((VOCOS_INTER, VOCOS_DIM)),
                "pw2_b": jnp.zeros((VOCOS_DIM,), jnp.float32),
                "gamma": jnp.full((VOCOS_DIM,), 1.0 / VOCOS_LAYERS, jnp.float32),
            })
        return p

    return {
        "chroma_in_w": tn((CHROMA_DIM, HIDDEN)),
        "chroma_in_b": jnp.zeros((HIDDEN,), jnp.float32),
        "encoder": backbone(HIDDEN),
        "enc_out_w": tn((VOCOS_DIM, HIDDEN)),
        "enc_out_b": jnp.zeros((HIDDEN,), jnp.float32),
        # FVQ projections (weight-norm folded into a plain weight — forward-equivalent)
        "vq_in_w": tn((HIDDEN, CODEBOOK_DIM)),
        "vq_in_b": jnp.zeros((CODEBOOK_DIM,), jnp.float32),
        "codebook": jax.random.normal(next(keys), (CODEBOOK_SIZE, CODEBOOK_DIM), jnp.float32),
        "vq_out_w": tn((CODEBOOK_DIM, HIDDEN)),
        "vq_out_b": jnp.zeros((HIDDEN,), jnp.float32),
        "decoder": backbone(HIDDEN),
        "dec_out_w": tn((VOCOS_DIM, HIDDEN)),
        "dec_out_b": jnp.zeros((HIDDEN,), jnp.float32),
        "out_w": tn((HIDDEN, CHROMA_DIM)),
        "out_b": jnp.zeros((CHROMA_DIM,), jnp.float32),
    }


# ======================================= main =======================================

if __name__ == "__main__":
    key = jax.random.PRNGKey(0)
    pkey, xkey = jax.random.split(key)
    params = init_params(pkey)
    chromagram_feats = jax.random.normal(xkey, (B, T, CHROMA_DIM), jnp.float32)

    # one-time host-side packing into 2 contiguous slabs (3 kernel inputs total)
    (w_slab, v_slab), (w_idx, v_idx) = pack_params(params, B, T)
    fwd = make_coco_forward(w_idx, v_idx, B, T)

    chroma_rec, codebook_loss, all_indices = fwd(chromagram_feats, w_slab, v_slab)
    jax.block_until_ready((chroma_rec, codebook_loss, all_indices))

    assert chroma_rec.shape == (B, T, CHROMA_DIM)
    assert all_indices.shape == (NUM_QUANTIZERS, B, T)
    assert codebook_loss.shape == ()
    assert bool(jnp.isfinite(chroma_rec).all()) and bool(jnp.isfinite(codebook_loss))
    # TODO(synk): straight-through estimator / quantizer-dropout affect gradients only;
    # this script reproduces the inference forward pass.
    print("KERNEL_OK")
</pallas_src>

<mosaic_0001>
module attributes {stable_mosaic.version = 11 : i64} {
  func.func @kernel(%arg0: i32, %arg1: memref<32x24xf32, #tpu.memory_space<vmem>>, %arg2: memref<1312x128xf32, #tpu.memory_space<vmem>>, %arg3: memref<40x128xf32, #tpu.memory_space<vmem>>, %arg4: memref<32x24xf32, #tpu.memory_space<vmem>>, %arg5: memref<1x1xf32, #tpu.memory_space<vmem>>, %arg6: memref<32x1xi32, #tpu.memory_space<vmem>>) attributes {dimension_semantics = [#tpu.dimension_semantics<arbitrary>], iteration_bounds = array<i64: 1>, scalar_prefetch = 0 : i64, scratch_operands = 0 : i64, tpu.core_type = #tpu.core_type<tc>, window_params = [{pipeline_mode = #tpu.pipeline_mode<synchronous>, transform_indices = @transform_0, window_bounds = array<i64: 32, 24>}, {pipeline_mode = #tpu.pipeline_mode<synchronous>, transform_indices = @transform_1, window_bounds = array<i64: 1312, 128>}, {pipeline_mode = #tpu.pipeline_mode<synchronous>, transform_indices = @transform_2, window_bounds = array<i64: 40, 128>}, {pipeline_mode = #tpu.pipeline_mode<synchronous>, transform_indices = @transform_3, window_bounds = array<i64: 32, 24>}, {pipeline_mode = #tpu.pipeline_mode<synchronous>, transform_indices = @transform_4, window_bounds = array<i64: 1, 1>}, {pipeline_mode = #tpu.pipeline_mode<synchronous>, transform_indices = @transform_5, window_bounds = array<i64: 32, 1>}]} {
    %c0 = arith.constant 0 : index
    %c0_0 = arith.constant 0 : index
    %0 = vector.load %arg2[%c0, %c0_0] : memref<1312x128xf32, #tpu.memory_space<vmem>>, vector<224x32xf32>
    %c0_1 = arith.constant 0 : index
    %c0_2 = arith.constant 0 : index
    %1 = vector.load %arg1[%c0_1, %c0_2] : memref<32x24xf32, #tpu.memory_space<vmem>>, vector<32x24xf32>
    %c224 = arith.constant 224 : index
    %c0_3 = arith.constant 0 : index
    %2 = vector.load %arg2[%c224, %c0_3] : memref<1312x128xf32, #tpu.memory_space<vmem>>, vector<24x32xf32>
    %3 = arith.truncf %1 : vector<32x24xf32> to vector<32x24xbf16>
    %4 = arith.truncf %2 : vector<24x32xf32> to vector<24x32xbf16>
    %cst = arith.constant dense<0.000000e+00> : vector<32x32xf32>
    %5 = tpu.matmul %3, %4, %cst {dimension_numbers = #tpu.dot_dimension_numbers<[1], [0], [0], [1], [0, 0, 1, 1], [], []>} : vector<32x24xbf16>, vector<24x32xbf16>, vector<32x32xf32> -> vector<32x32xf32>
    %c0_4 = arith.constant 0 : index
    %c0_5 = arith.constant 0 : index
    %6 = vector.load %arg3[%c0_4, %c0_5] : memref<40x128xf32, #tpu.memory_space<vmem>>, vector<1x32xf32>
    %7 = vector.broadcast %6 : vector<1x32xf32> to vector<32x32xf32>
    %8 = arith.addf %5, %7 : vector<32x32xf32>
    %9 = arith.truncf %0 : vector<224x32xf32> to vector<224x32xbf16>
    %10 = arith.truncf %8 : vector<32x32xf32> to vector<32x32xbf16>
    %cst_6 = arith.constant dense<0.000000e+00> : vector<224x32xf32>
    %11 = tpu.matmul %9, %10, %cst_6 {dimension_numbers = #tpu.dot_dimension_numbers<[1], [0], [0], [1], [0, 0, 1, 1], [], []>} : vector<224x32xbf16>, vector<32x32xbf16>, vector<224x32xf32> -> vector<224x32xf32>
    %12 = vector.extract_strided_slice %11 {offsets = [0, 0], sizes = [32, 32], strides = [1, 1]} : vector<224x32xf32> to vector<32x32xf32>
    %13 = vector.extract_strided_slice %11 {offsets = [32, 0], sizes = [32, 32], strides = [1, 1]} : vector<224x32xf32> to vector<32x32xf32>
    %14 = vector.extract_strided_slice %11 {offsets = [64, 0], sizes = [32, 32], strides = [1, 1]} : vector<224x32xf32> to vector<32x32xf32>
    %15 = vector.extract_strided_slice %11 {offsets = [96, 0], sizes = [32, 32], strides = [1, 1]} : vector<224x32xf32> to vector<32x32xf32>
    %16 = vector.extract_strided_slice %11 {offsets = [128, 0], sizes = [32, 32], strides = [1, 1]} : vector<224x32xf32> to vector<32x32xf32>
    %17 = vector.extract_strided_slice %11 {offsets = [160, 0], sizes = [32, 32], strides = [1, 1]} : vector<224x32xf32> to vector<32x32xf32>
    %18 = vector.extract_strided_slice %11 {offsets = [192, 0], sizes = [32, 32], strides = [1, 1]} : vector<224x32xf32> to vector<32x32xf32>
    %19 = tpu.concatenate %12, %13, %14, %15, %16, %17, %18 in 1 : vector<32x32xf32>, vector<32x32xf32>, vector<32x32xf32>, vector<32x32xf32>, vector<32x32xf32>, vector<32x32xf32>, vector<32x32xf32> -> vector<32x224xf32>
    %c248 = arith.constant 248 : index
    %c0_7 = arith.constant 0 : index
    %20 = vector.load %arg2[%c248, %c0_7] : memref<1312x128xf32, #tpu.memory_space<vmem>>, vector<224x32xf32>
    %21 = arith.truncf %19 : vector<32x224xf32> to vector<32x224xbf16>
    %22 = arith.truncf %20 : vector<224x32xf32> to vector<224x32xbf16>
    %cst_8 = arith.constant dense<0.000000e+00> : vector<32x32xf32>
    %23 = tpu.matmul %21, %22, %cst_8 {dimension_numbers = #tpu.dot_dimension_numbers<[1], [0], [0], [1], [0, 0, 1, 1], [], []>} : vector<32x224xbf16>, vector<224x32xbf16>, vector<32x32xf32> -> vector<32x32xf32>
    %c1 = arith.constant 1 : index
    %c0_9 = arith.constant 0 : index
    %24 = vector.load %arg3[%c1, %c0_9] : memref<40x128xf32, #tpu.memory_space<vmem>>, vector<1x32xf32>
    %25 = vector.broadcast %24 : vector<1x32xf32> to vector<32x32xf32>
    %26 = arith.addf %23, %25 : vector<32x32xf32>
    %cst_10 = arith.constant dense<0.000000e+00> : vector<32xf32>
    %27 = vector.multi_reduction <add>, %26, %cst_10 [1] : vector<32x32xf32> to vector<32xf32>
    %28 = vector.shape_cast %27 : vector<32xf32> to vector<32x1xf32>
    %cst_11 = arith.constant 3.200000e+01 : f32
    %29 = vector.broadcast %cst_11 : f32 to vector<32x1xf32>
    %30 = arith.divf %28, %29 : vector<32x1xf32>
    %31 = vector.broadcast %30 : vector<32x1xf32> to vector<32x32xf32>
    %32 = arith.subf %26, %31 : vector<32x32xf32>
    %33 = arith.mulf %32, %32 : vector<32x32xf32>
    %cst_12 = arith.constant dense<0.000000e+00> : vector<32xf32>
    %34 = vector.multi_reduction <add>, %33, %cst_12 [1] : vector<32x32xf32> to vector<32xf32>
    %35 = vector.shape_cast %34 : vector<32xf32> to vector<32x1xf32>
    %cst_13 = arith.constant 3.200000e+01 : f32
    %36 = vector.broadcast %cst_13 : f32 to vector<32x1xf32>
    %37 = arith.divf %35, %36 : vector<32x1xf32>
    %38 = vector.broadcast %30 : vector<32x1xf32> to vector<32x32xf32>
    %39 = arith.subf %26, %38 : vector<32x32xf32>
    %cst_14 = arith.constant 9.99999997E-7 : f32
    %40 = vector.broadcast %cst_14 : f32 to vector<32x1xf32>
    %41 = arith.addf %37, %40 : vector<32x1xf32>
    %42 = math.rsqrt %41 : vector<32x1xf32>
    %43 = vector.broadcast %42 : vector<32x1xf32> to vector<32x32xf32>
    %44 = arith.mulf %39, %43 : vector<32x32xf32>
    %c2 = arith.constant 2 : index
    %c0_15 = arith.constant 0 : index
    %45 = vector.load %arg3[%c2, %c0_15] : memref<40x128xf32, #tpu.memory_space<vmem>>, vector<1x32xf32>
    %46 = vector.broadcast %45 : vector<1x32xf32> to vector<32x32xf32>
    %47 = arith.mulf %44, %46 : vector<32x32xf32>
    %c3 = arith.constant 3 : index
    %c0_16 = arith.constant 0 : index
    %48 = vector.load %arg3[%c3, %c0_16] : memref<40x128xf32, #tpu.memory_space<vmem>>, vector<1x32xf32>
    %49 = vector.broadcast %48 : vector<1x32xf32> to vector<32x32xf32>
    %50 = arith.addf %47, %49 : vector<32x32xf32>
    %51 = arith.truncf %0 : vector<224x32xf32> to vector<224x32xbf16>
    %52 = arith.truncf %50 : vector<32x32xf32> to vector<32x32xbf16>
    %cst_17 = arith.constant dense<0.000000e+00> : vector<224x32xf32>
    %53 = tpu.matmul %51, %52, %cst_17 {dimension_numbers = #tpu.dot_dimension_numbers<[1], [0], [0], [1], [0, 0, 1, 1], [], []>} : vector<224x32xbf16>, vector<32x32xbf16>, vector<224x32xf32> -> vector<224x32xf32>
    %c472 = arith.constant 472 : index
    %c0_18 = arith.constant 0 : index
    %54 = vector.load %arg2[%c472, %c0_18] : memref<1312x128xf32, #tpu.memory_space<vmem>>, vector<7x32xf32>
    %c6 = arith.constant 6 : index
    %c0_19 = arith.constant 0 : index
    %55 = vector.load %arg3[%c6, %c0_19] : memref<40x128xf32, #tpu.memory_space<vmem>>, vector<1x32xf32>
    %56 = vector.extract_strided_slice %53 {offsets = [0, 0], sizes = [32, 32], strides = [1, 1]} : vector<224x32xf32> to vector<32x32xf32>
    %57 = vector.extract_strided_slice %54 {offsets = [0, 0], sizes = [1, 32], strides = [1, 1]} : vector<7x32xf32> to vector<1x32xf32>
    %58 = vector.broadcast %57 : vector<1x32xf32> to vector<32x32xf32>
    %59 = arith.mulf %56, %58 : vector<32x32xf32>
    %60 = vector.broadcast %55 : vector<1x32xf32> to vector<32x32xf32>
    %61 = arith.addf %60, %59 : vector<32x32xf32>
    %62 = vector.extract_strided_slice %53 {offsets = [32, 0], sizes = [32, 32], strides = [1, 1]} : vector<224x32xf32> to vector<32x32xf32>
    %63 = vector.extract_strided_slice %54 {offsets = [1, 0], sizes = [1, 32], strides = [1, 1]} : vector<7x32xf32> to vector<1x32xf32>
    %64 = vector.broadcast %63 : vector<1x32xf32> to vector<32x32xf32>
    %65 = arith.mulf %62, %64 : vector<32x32xf32>
    %66 = arith.addf %61, %65 : vector<32x32xf32>
    %67 = vector.extract_strided_slice %53 {offsets = [64, 0], sizes = [32, 32], strides = [1, 1]} : vector<224x32xf32> to vector<32x32xf32>
    %68 = vector.extract_strided_slice %54 {offsets = [2, 0], sizes = [1, 32], strides = [1, 1]} : vector<7x32xf32> to vector<1x32xf32>
    %69 = vector.broadcast %68 : vector<1x32xf32> to vector<32x32xf32>
    %70 = arith.mulf %67, %69 : vector<32x32xf32>
    %71 = arith.addf %66, %70 : vector<32x32xf32>
    %72 = vector.extract_strided_slice %53 {offsets = [96, 0], sizes = [32, 32], strides = [1, 1]} : vector<224x32xf32> to vector<32x32xf32>
    %73 = vector.extract_strided_slice %54 {offsets = [3, 0], sizes = [1, 32], strides = [1, 1]} : vector<7x32xf32> to vector<1x32xf32>
    %74 = vector.broadcast %73 : vector<1x32xf32> to vector<32x32xf32>
    %75 = arith.mulf %72, %74 : vector<32x32xf32>
    %76 = arith.addf %71, %75 : vector<32x32xf32>
    %77 = vector.extract_strided_slice %53 {offsets = [128, 0], sizes = [32, 32], strides = [1, 1]} : vector<224x32xf32> to vector<32x32xf32>
    %78 = vector.extract_strided_slice %54 {offsets = [4, 0], sizes = [1, 32], strides = [1, 1]} : vector<7x32xf32> to vector<1x32xf32>
    %79 = vector.broadcast %78 : vector<1x32xf32> to vector<32x32xf32>
    %80 = arith.mulf %77, %79 : vector<32x32xf32>
    %81 = arith.addf %76, %80 : vector<32x32xf32>
    %82 = vector.extract_strided_slice %53 {offsets = [160, 0], sizes = [32, 32], strides = [1, 1]} : vector<224x32xf32> to vector<32x32xf32>
    %83 = vector.extract_strided_slice %54 {offsets = [5, 0], sizes = [1, 32], strides = [1, 1]} : vector<7x32xf32> to vector<1x32xf32>
    %84 = vector.broadcast %83 : vector<1x32xf32> to vector<32x32xf32>
    %85 = arith.mulf %82, %84 : vector<32x32xf32>
    %86 = arith.addf %81, %85 : vector<32x32xf32>
    %87 = vector.extract_strided_slice %53 {offsets = [192, 0], sizes = [32, 32], strides = [1, 1]} : vector<224x32xf32> to vector<32x32xf32>
    %88 = vector.extract_strided_slice %54 {offsets = [6, 0], sizes = [1, 32], strides = [1, 1]} : vector<7x32xf32> to vector<1x32xf32>
    %89 = vector.broadcast %88 : vector<1x32xf32> to vector<32x32xf32>
    %90 = arith.mulf %87, %89 : vector<32x32xf32>
    %91 = arith.addf %86, %90 : vector<32x32xf32>
    %cst_20 = arith.constant dense<0.000000e+00> : vector<32xf32>
    %92 = vector.multi_reduction <add>, %91, %cst_20 [1] : vector<32x32xf32> to vector<32xf32>
    %93 = vector.shape_cast %92 : vector<32xf32> to vector<32x1xf32>
    %cst_21 = arith.constant 3.200000e+01 : f32
    %94 = vector.broadcast %cst_21 : f32 to vector<32x1xf32>
    %95 = arith.divf %93, %94 : vector<32x1xf32>
    %96 = vector.broadcast %95 : vector<32x1xf32> to vector<32x32xf32>
    %97 = arith.subf %91, %96 : vector<32x32xf32>
    %98 = arith.mulf %97, %97 : vector<32x32xf32>
    %cst_22 = arith.constant dense<0.000000e+00> : vector<32xf32>
    %99 = vector.multi_reduction <add>, %98, %cst_22 [1] : vector<32x32xf32> to vector<32xf32>
    %100 = vector.shape_cast %99 : vector<32xf32> to vector<32x1xf32>
    %cst_23 = arith.constant 3.200000e+01 : f32
    %101 = vector.broadcast %cst_23 : f32 to vector<32x1xf32>
    %102 = arith.divf %100, %101 : vector<32x1xf32>
    %103 = vector.broadcast %95 : vector<32x1xf32> to vector<32x32xf32>
    %104 = arith.subf %91, %103 : vector<32x32xf32>
    %cst_24 = arith.constant 9.99999997E-7 : f32
    %105 = vector.broadcast %cst_24 : f32 to vector<32x1xf32>
    %106 = arith.addf %102, %105 : vector<32x1xf32>
    %107 = math.rsqrt %106 : vector<32x1xf32>
    %108 = vector.broadcast %107 : vector<32x1xf32> to vector<32x32xf32>
    %109 = arith.mulf %104, %108 : vector<32x32xf32>
    %c7 = arith.constant 7 : index
    %c0_25 = arith.constant 0 : index
    %110 = vector.load %arg3[%c7, %c0_25] : memref<40x128xf32, #tpu.memory_space<vmem>>, vector<1x32xf32>
    %111 = vector.broadcast %110 : vector<1x32xf32> to vector<32x32xf32>
    %112 = arith.mulf %109, %111 : vector<32x32xf32>
    %c8 = arith.constant 8 : index
    %c0_26 = arith.constant 0 : index
    %113 = vector.load %arg3[%c8, %c0_26] : memref<40x128xf32, #tpu.memory_space<vmem>>, vector<1x32xf32>
    %114 = vector.broadcast %113 : vector<1x32xf32> to vector<32x32xf32>
    %115 = arith.addf %112, %114 : vector<32x32xf32>
    %c480 = arith.constant 480 : index
    %c0_27 = arith.constant 0 : index
    %116 = vector.load %arg2[%c480, %c0_27] : memref<1312x128xf32, #tpu.memory_space<vmem>>, vector<32x64xf32>
    %117 = arith.truncf %115 : vector<32x32xf32> to vector<32x32xbf16>
    %118 = arith.truncf %116 : vector<32x64xf32> to vector<32x64xbf16>
    %cst_28 = arith.constant dense<0.000000e+00> : vector<32x64xf32>
    %119 = tpu.matmul %117, %118, %cst_28 {dimension_numbers = #tpu.dot_dimension_numbers<[1], [0], [0], [1], [0, 0, 1, 1], [], []>} : vector<32x32xbf16>, vector<32x64xbf16>, vector<32x64xf32> -> vector<32x64xf32>
    %c9 = arith.constant 9 : index
    %c0_29 = arith.constant 0 : index
    %120 = vector.load %arg3[%c9, %c0_29] : memref<40x128xf32, #tpu.memory_space<vmem>>, vector<1x64xf32>
    %121 = vector.broadcast %120 : vector<1x64xf32> to vector<32x64xf32>
    %122 = arith.addf %119, %121 : vector<32x64xf32>
    %123 = arith.mulf %122, %122 : vector<32x64xf32>
    %124 = arith.mulf %122, %123 : vector<32x64xf32>
    %cst_30 = arith.constant 4.471500e-02 : f32
    %125 = vector.broadcast %cst_30 : f32 to vector<32x64xf32>
    %126 = arith.mulf %125, %124 : vector<32x64xf32>
    %127 = arith.addf %122, %126 : vector<32x64xf32>
    %cst_31 = arith.constant 0.797884583 : f32
    %128 = vector.broadcast %cst_31 : f32 to vector<32x64xf32>
    %129 = arith.mulf %128, %127 : vector<32x64xf32>
    %130 = math.tanh %129 : vector<32x64xf32>
    %cst_32 = arith.constant 1.000000e+00 : f32
    %131 = vector.broadcast %cst_32 : f32 to vector<32x64xf32>
    %132 = arith.addf %131, %130 : vector<32x64xf32>
    %cst_33 = arith.constant 5.000000e-01 : f32
    %133 = vector.broadcast %cst_33 : f32 to vector<32x64xf32>
    %134 = arith.mulf %133, %132 : vector<32x64xf32>
    %135 = arith.mulf %122, %134 : vector<32x64xf32>
    %c11 = arith.constant 11 : index
    %c0_34 = arith.constant 0 : index
    %136 = vector.load %arg3[%c11, %c0_34] : memref<40x128xf32, #tpu.memory_space<vmem>>, vector<1x32xf32>
    %c512 = arith.constant 512 : index
    %c0_35 = arith.constant 0 : index
    %137 = vector.load %arg2[%c512, %c0_35] : memref<1312x128xf32, #tpu.memory_space<vmem>>, vector<64x32xf32>
    %138 = arith.truncf %135 : vector<32x64xf32> to vector<32x64xbf16>
    %139 = arith.truncf %137 : vector<64x32xf32> to vector<64x32xbf16>
    %cst_36 = arith.constant dense<0.000000e+00> : vector<32x32xf32>
    %140 = tpu.matmul %138, %139, %cst_36 {dimension_numbers = #tpu.dot_dimension_numbers<[1], [0], [0], [1], [0, 0, 1, 1], [], []>} : vector<32x64xbf16>, vector<64x32xbf16>, vector<32x32xf32> -> vector<32x32xf32>
    %c10 = arith.constant 10 : index
    %c0_37 = arith.constant 0 : index
    %141 = vector.load %arg3[%c10, %c0_37] : memref<40x128xf32, #tpu.memory_space<vmem>>, vector<1x32xf32>
    %142 = vector.broadcast %141 : vector<1x32xf32> to vector<32x32xf32>
    %143 = arith.addf %140, %142 : vector<32x32xf32>
    %144 = vector.broadcast %136 : vector<1x32xf32> to vector<32x32xf32>
    %145 = arith.mulf %144, %143 : vector<32x32xf32>
    %146 = arith.addf %50, %145 : vector<32x32xf32>
    %147 = arith.truncf %0 : vector<224x32xf32> to vector<224x32xbf16>
    %148 = arith.truncf %146 : vector<32x32xf32> to vector<32x32xbf16>
    %cst_38 = arith.constant dense<0.000000e+00> : vector<224x32xf32>
    %149 = tpu.matmul %147, %148, %cst_38 {dimension_numbers = #tpu.dot_dimension_numbers<[1], [0], [0], [1], [0, 0, 1, 1], [], []>} : vector<224x32xbf16>, vector<32x32xbf16>, vector<224x32xf32> -> vector<224x32xf32>
    %c576 = arith.constant 576 : index
    %c0_39 = arith.constant 0 : index
    %150 = vector.load %arg2[%c576, %c0_39] : memref<1312x128xf32, #tpu.memory_space<vmem>>, vector<7x32xf32>
    %c12 = arith.constant 12 : index
    %c0_40 = arith.constant 0 : index
    %151 = vector.load %arg3[%c12, %c0_40] : memref<40x128xf32, #tpu.memory_space<vmem>>, vector<1x32xf32>
    %152 = vector.extract_strided_slice %149 {offsets = [0, 0], sizes = [32, 32], strides = [1, 1]} : vector<224x32xf32> to vector<32x32xf32>
    %153 = vector.extract_strided_slice %150 {offsets = [0, 0], sizes = [1, 32], strides = [1, 1]} : vector<7x32xf32> to vector<1x32xf32>
    %154 = vector.broadcast %153 : vector<1x32xf32> to vector<32x32xf32>
    %155 = arith.mulf %152, %154 : vector<32x32xf32>
    %156 = vector.broadcast %151 : vector<1x32xf32> to vector<32x32xf32>
    %157 = arith.addf %156, %155 : vector<32x32xf32>
    %158 = vector.extract_strided_slice %149 {offsets = [32, 0], sizes = [32, 32], strides = [1, 1]} : vector<224x32xf32> to vector<32x32xf32>
    %159 = vector.extract_strided_slice %150 {offsets = [1, 0], sizes = [1, 32], strides = [1, 1]} : vector<7x32xf32> to vector<1x32xf32>
    %160 = vector.broadcast %159 : vector<1x32xf32> to vector<32x32xf32>
    %161 = arith.mulf %158, %160 : vector<32x32xf32>
    %162 = arith.addf %157, %161 : vector<32x32xf32>
    %163 = vector.extract_strided_slice %149 {offsets = [64, 0], sizes = [32, 32], strides = [1, 1]} : vector<224x32xf32> to vector<32x32xf32>
    %164 = vector.extract_strided_slice %150 {offsets = [2, 0], sizes = [1, 32], strides = [1, 1]} : vector<7x32xf32> to vector<1x32xf32>
    %165 = vector.broadcast %164 : vector<1x32xf32> to vector<32x32xf32>
    %166 = arith.mulf %163, %165 : vector<32x32xf32>
    %167 = arith.addf %162, %166 : vector<32x32xf32>
    %168 = vector.extract_strided_slice %149 {offsets = [96, 0], sizes = [32, 32], strides = [1, 1]} : vector<224x32xf32> to vector<32x32xf32>
    %169 = vector.extract_strided_slice %150 {offsets = [3, 0], sizes = [1, 32], strides = [1, 1]} : vector<7x32xf32> to vector<1x32xf32>
    %170 = vector.broadcast %169 : vector<1x32xf32> to vector<32x32xf32>
    %171 = arith.mulf %168, %170 : vector<32x32xf32>
    %172 = arith.addf %167, %171 : vector<32x32xf32>
    %173 = vector.extract_strided_slice %149 {offsets = [128, 0], sizes = [32, 32], strides = [1, 1]} : vector<224x32xf32> to vector<32x32xf32>
    %174 = vector.extract_strided_slice %150 {offsets = [4, 0], sizes = [1, 32], strides = [1, 1]} : vector<7x32xf32> to vector<1x32xf32>
    %175 = vector.broadcast %174 : vector<1x32xf32> to vector<32x32xf32>
    %176 = arith.mulf %173, %175 : vector<32x32xf32>
    %177 = arith.addf %172, %176 : vector<32x32xf32>
    %178 = vector.extract_strided_slice %149 {offsets = [160, 0], sizes = [32, 32], strides = [1, 1]} : vector<224x32xf32> to vector<32x32xf32>
    %179 = vector.extract_strided_slice %150 {offsets = [5, 0], sizes = [1, 32], strides = [1, 1]} : vector<7x32xf32> to vector<1x32xf32>
    %180 = vector.broadcast %179 : vector<1x32xf32> to vector<32x32xf32>
    %181 = arith.mulf %178, %180 : vector<32x32xf32>
    %182 = arith.addf %177, %181 : vector<32x32xf32>
    %183 = vector.extract_strided_slice %149 {offsets = [192, 0], sizes = [32, 32], strides = [1, 1]} : vector<224x32xf32> to vector<32x32xf32>
    %184 = vector.extract_strided_slice %150 {offsets = [6, 0], sizes = [1, 32], strides = [1, 1]} : vector<7x32xf32> to vector<1x32xf32>
    %185 = vector.broadcast %184 : vector<1x32xf32> to vector<32x32xf32>
    %186 = arith.mulf %183, %185 : vector<32x32xf32>
    %187 = arith.addf %182, %186 : vector<32x32xf32>
    %cst_41 = arith.constant dense<0.000000e+00> : vector<32xf32>
    %188 = vector.multi_reduction <add>, %187, %cst_41 [1] : vector<32x32xf32> to vector<32xf32>
    %189 = vector.shape_cast %188 : vector<32xf32> to vector<32x1xf32>
    %cst_42 = arith.constant 3.200000e+01 : f32
    %190 = vector.broadcast %cst_42 : f32 to vector<32x1xf32>
    %191 = arith.divf %189, %190 : vector<32x1xf32>
    %192 = vector.broadcast %191 : vector<32x1xf32> to vector<32x32xf32>
    %193 = arith.subf %187, %192 : vector<32x32xf32>
    %194 = arith.mulf %193, %193 : vector<32x32xf32>
    %cst_43 = arith.constant dense<0.000000e+00> : vector<32xf32>
    %195 = vector.multi_reduction <add>, %194, %cst_43 [1] : vector<32x32xf32> to vector<32xf32>
    %196 = vector.shape_cast %195 : vector<32xf32> to vector<32x1xf32>
    %cst_44 = arith.constant 3.200000e+01 : f32
    %197 = vector.broadcast %cst_44 : f32 to vector<32x1xf32>
    %198 = arith.divf %196, %197 : vector<32x1xf32>
    %199 = vector.broadcast %191 : vector<32x1xf32> to vector<32x32xf32>
    %200 = arith.subf %187, %199 : vector<32x32xf32>
    %cst_45 = arith.constant 9.99999997E-7 : f32
    %201 = vector.broadcast %cst_45 : f32 to vector<32x1xf32>
    %202 = arith.addf %198, %201 : vector<32x1xf32>
    %203 = math.rsqrt %202 : vector<32x1xf32>
    %204 = vector.broadcast %203 : vector<32x1xf32> to vector<32x32xf32>
    %205 = arith.mulf %200, %204 : vector<32x32xf32>
    %c13 = arith.constant 13 : index
    %c0_46 = arith.constant 0 : index
    %206 = vector.load %arg3[%c13, %c0_46] : memref<40x128xf32, #tpu.memory_space<vmem>>, vector<1x32xf32>
    %207 = vector.broadcast %206 : vector<1x32xf32> to vector<32x32xf32>
    %208 = arith.mulf %205, %207 : vector<32x32xf32>
    %c14 = arith.constant 14 : index
    %c0_47 = arith.constant 0 : index
    %209 = vector.load %arg3[%c14, %c0_47] : memref<40x128xf32, #tpu.memory_space<vmem>>, vector<1x32xf32>
    %210 = vector.broadcast %209 : vector<1x32xf32> to vector<32x32xf32>
    %211 = arith.addf %208, %210 : vector<32x32xf32>
    %c584 = arith.constant 584 : index
    %c0_48 = arith.constant 0 : index
    %212 = vector.load %arg2[%c584, %c0_48] : memref<1312x128xf32, #tpu.memory_space<vmem>>, vector<32x64xf32>
    %213 = arith.truncf %211 : vector<32x32xf32> to vector<32x32xbf16>
    %214 = arith.truncf %212 : vector<32x64xf32> to vector<32x64xbf16>
    %cst_49 = arith.constant dense<0.000000e+00> : vector<32x64xf32>
    %215 = tpu.matmul %213, %214, %cst_49 {dimension_numbers = #tpu.dot_dimension_numbers<[1], [0], [0], [1], [0, 0, 1, 1], [], []>} : vector<32x32xbf16>, vector<32x64xbf16>, vector<32x64xf32> -> vector<32x64xf32>
    %c15 = arith.constant 15 : index
    %c0_50 = arith.constant 0 : index
    %216 = vector.load %arg3[%c15, %c0_50] : memref<40x128xf32, #tpu.memory_space<vmem>>, vector<1x64xf32>
    %217 = vector.broadcast %216 : vector<1x64xf32> to vector<32x64xf32>
    %218 = arith.addf %215, %217 : vector<32x64xf32>
    %219 = arith.mulf %218, %218 : vector<32x64xf32>
    %220 = arith.mulf %218, %219 : vector<32x64xf32>
    %cst_51 = arith.constant 4.471500e-02 : f32
    %221 = vector.broadcast %cst_51 : f32 to vector<32x64xf32>
    %222 = arith.mulf %221, %220 : vector<32x64xf32>
    %223 = arith.addf %218, %222 : vector<32x64xf32>
    %cst_52 = arith.constant 0.797884583 : f32
    %224 = vector.broadcast %cst_52 : f32 to vector<32x64xf32>
    %225 = arith.mulf %224, %223 : vector<32x64xf32>
    %226 = math.tanh %225 : vector<32x64xf32>
    %cst_53 = arith.constant 1.000000e+00 : f32
    %227 = vector.broadcast %cst_53 : f32 to vector<32x64xf32>
    %228 = arith.addf %227, %226 : vector<32x64xf32>
    %cst_54 = arith.constant 5.000000e-01 : f32
    %229 = vector.broadcast %cst_54 : f32 to vector<32x64xf32>
    %230 = arith.mulf %229, %228 : vector<32x64xf32>
    %231 = arith.mulf %218, %230 : vector<32x64xf32>
    %c17 = arith.constant 17 : index
    %c0_55 = arith.constant 0 : index
    %232 = vector.load %arg3[%c17, %c0_55] : memref<40x128xf32, #tpu.memory_space<vmem>>, vector<1x32xf32>
    %c616 = arith.constant 616 : index
    %c0_56 = arith.constant 0 : index
    %233 = vector.load %arg2[%c616, %c0_56] : memref<1312x128xf32, #tpu.memory_space<vmem>>, vector<64x32xf32>
    %234 = arith.truncf %231 : vector<32x64xf32> to vector<32x64xbf16>
    %235 = arith.truncf %233 : vector<64x32xf32> to vector<64x32xbf16>
    %cst_57 = arith.constant dense<0.000000e+00> : vector<32x32xf32>
    %236 = tpu.matmul %234, %235, %cst_57 {dimension_numbers = #tpu.dot_dimension_numbers<[1], [0], [0], [1], [0, 0, 1, 1], [], []>} : vector<32x64xbf16>, vector<64x32xbf16>, vector<32x32xf32> -> vector<32x32xf32>
    %c16 = arith.constant 16 : index
    %c0_58 = arith.constant 0 : index
    %237 = vector.load %arg3[%c16, %c0_58] : memref<40x128xf32, #tpu.memory_space<vmem>>, vector<1x32xf32>
    %238 = vector.broadcast %237 : vector<1x32xf32> to vector<32x32xf32>
    %239 = arith.addf %236, %238 : vector<32x32xf32>
    %240 = vector.broadcast %232 : vector<1x32xf32> to vector<32x32xf32>
    %241 = arith.mulf %240, %239 : vector<32x32xf32>
    %242 = arith.addf %146, %241 : vector<32x32xf32>
    %cst_59 = arith.constant dense<0.000000e+00> : vector<32xf32>
    %243 = vector.multi_reduction <add>, %242, %cst_59 [1] : vector<32x32xf32> to vector<32xf32>
    %244 = vector.shape_cast %243 : vector<32xf32> to vector<32x1xf32>
    %cst_60 = arith.constant 3.200000e+01 : f32
    %245 = vector.broadcast %cst_60 : f32 to vector<32x1xf32>
    %246 = arith.divf %244, %245 : vector<32x1xf32>
    %247 = vector.broadcast %246 : vector<32x1xf32> to vector<32x32xf32>
    %248 = arith.subf %242, %247 : vector<32x32xf32>
    %249 = arith.mulf %248, %248 : vector<32x32xf32>
    %cst_61 = arith.constant dense<0.000000e+00> : vector<32xf32>
    %250 = vector.multi_reduction <add>, %249, %cst_61 [1] : vector<32x32xf32> to vector<32xf32>
    %251 = vector.shape_cast %250 : vector<32xf32> to vector<32x1xf32>
    %cst_62 = arith.constant 3.200000e+01 : f32
    %252 = vector.broadcast %cst_62 : f32 to vector<32x1xf32>
    %253 = arith.divf %251, %252 : vector<32x1xf32>
    %254 = vector.broadcast %246 : vector<32x1xf32> to vector<32x32xf32>
    %255 = arith.subf %242, %254 : vector<32x32xf32>
    %cst_63 = arith.constant 9.99999997E-7 : f32
    %256 = vector.broadcast %cst_63 : f32 to vector<32x1xf32>
    %257 = arith.addf %253, %256 : vector<32x1xf32>
    %258 = math.rsqrt %257 : vector<32x1xf32>
    %259 = vector.broadcast %258 : vector<32x1xf32> to vector<32x32xf32>
    %260 = arith.mulf %255, %259 : vector<32x32xf32>
    %c4 = arith.constant 4 : index
    %c0_64 = arith.constant 0 : index
    %261 = vector.load %arg3[%c4, %c0_64] : memref<40x128xf32, #tpu.memory_space<vmem>>, vector<1x32xf32>
    %262 = vector.broadcast %261 : vector<1x32xf32> to vector<32x32xf32>
    %263 = arith.mulf %260, %262 : vector<32x32xf32>
    %c5 = arith.constant 5 : index
    %c0_65 = arith.constant 0 : index
    %264 = vector.load %arg3[%c5, %c0_65] : memref<40x128xf32, #tpu.memory_space<vmem>>, vector<1x32xf32>
    %265 = vector.broadcast %264 : vector<1x32xf32> to vector<32x32xf32>
    %266 = arith.addf %263, %265 : vector<32x32xf32>
    %c1112 = arith.constant 1112 : index
    %c0_66 = arith.constant 0 : index
    %267 = vector.load %arg2[%c1112, %c0_66] : memref<1312x128xf32, #tpu.memory_space<vmem>>, vector<32x32xf32>
    %268 = arith.truncf %266 : vector<32x32xf32> to vector<32x32xbf16>
    %269 = arith.truncf %267 : vector<32x32xf32> to vector<32x32xbf16>
    %cst_67 = arith.constant dense<0.000000e+00> : vector<32x32xf32>
    %270 = tpu.matmul %268, %269, %cst_67 {dimension_numbers = #tpu.dot_dimension_numbers<[1], [0], [0], [1], [0, 0, 1, 1], [], []>} : vector<32x32xbf16>, vector<32x32xbf16>, vector<32x32xf32> -> vector<32x32xf32>
    %c35 = arith.constant 35 : index
    %c0_68 = arith.constant 0 : index
    %271 = vector.load %arg3[%c35, %c0_68] : memref<40x128xf32, #tpu.memory_space<vmem>>, vector<1x32xf32>
    %272 = vector.broadcast %271 : vector<1x32xf32> to vector<32x32xf32>
    %273 = arith.addf %270, %272 : vector<32x32xf32>
    %c1144 = arith.constant 1144 : index
    %c0_69 = arith.constant 0 : index
    %274 = vector.load %arg2[%c1144, %c0_69] : memref<1312x128xf32, #tpu.memory_space<vmem>>, vector<32x8xf32>
    %275 = arith.truncf %273 : vector<32x32xf32> to vector<32x32xbf16>
    %276 = arith.truncf %274 : vector<32x8xf32> to vector<32x8xbf16>
    %cst_70 = arith.constant dense<0.000000e+00> : vector<32x8xf32>
    %277 = tpu.matmul %275, %276, %cst_70 {dimension_numbers = #tpu.dot_dimension_numbers<[1], [0], [0], [1], [0, 0, 1, 1], [], []>} : vector<32x32xbf16>, vector<32x8xbf16>, vector<32x8xf32> -> vector<32x8xf32>
    %c36 = arith.constant 36 : index
    %c0_71 = arith.constant 0 : index
    %278 = vector.load %arg3[%c36, %c0_71] : memref<40x128xf32, #tpu.memory_space<vmem>>, vector<1x8xf32>
    %279 = vector.broadcast %278 : vector<1x8xf32> to vector<32x8xf32>
    %280 = arith.addf %277, %279 : vector<32x8xf32>
    %c1176 = arith.constant 1176 : index
    %c0_72 = arith.constant 0 : index
    %281 = vector.load %arg2[%c1176, %c0_72] : memref<1312x128xf32, #tpu.memory_space<vmem>>, vector<64x8xf32>
    %282 = arith.mulf %280, %280 : vector<32x8xf32>
    %cst_73 = arith.constant dense<0.000000e+00> : vector<32xf32>
    %283 = vector.multi_reduction <add>, %282, %cst_73 [1] : vector<32x8xf32> to vector<32xf32>
    %284 = vector.shape_cast %283 : vector<32xf32> to vector<32x1xf32>
    %cst_74 = arith.constant 1.000000e-24 : f32
    %285 = vector.broadcast %cst_74 : f32 to vector<32x1xf32>
    %286 = arith.addf %284, %285 : vector<32x1xf32>
    %287 = math.rsqrt %286 : vector<32x1xf32>
    %288 = vector.broadcast %287 : vector<32x1xf32> to vector<32x8xf32>
    %289 = arith.mulf %280, %288 : vector<32x8xf32>
    %290 = arith.mulf %281, %281 : vector<64x8xf32>
    %cst_75 = arith.constant dense<0.000000e+00> : vector<64xf32>
    %291 = vector.multi_reduction <add>, %290, %cst_75 [1] : vector<64x8xf32> to vector<64xf32>
    %292 = vector.shape_cast %291 : vector<64xf32> to vector<64x1xf32>
    %cst_76 = arith.constant 1.000000e-24 : f32
    %293 = vector.broadcast %cst_76 : f32 to vector<64x1xf32>
    %294 = arith.addf %292, %293 : vector<64x1xf32>
    %295 = math.rsqrt %294 : vector<64x1xf32>
    %296 = vector.broadcast %295 : vector<64x1xf32> to vector<64x8xf32>
    %297 = arith.mulf %281, %296 : vector<64x8xf32>
    %cst_77 = arith.constant dense<0.000000e+00> : vector<32x64xf32>
    %298 = tpu.matmul %289, %297, %cst_77 {dimension_numbers = #tpu.dot_dimension_numbers<[1], [1], [0], [0], [0, 0, 1, 0], [], []>} : vector<32x8xf32>, vector<64x8xf32>, vector<32x64xf32> -> vector<32x64xf32>
    %cst_78 = arith.constant dense<0xFF800000> : vector<32xf32>
    %299 = vector.multi_reduction <maximumf>, %298, %cst_78 [1] : vector<32x64xf32> to vector<32xf32>
    %300 = vector.shape_cast %299 : vector<32xf32> to vector<32x1xf32>
    %301 = tpu.iota {dimensions = array<i32: 1>} : vector<32x64xi32>
    %302 = vector.broadcast %300 : vector<32x1xf32> to vector<32x64xf32>
    %303 = arith.cmpf oge, %298, %302 : vector<32x64xf32>
    %c64_i32 = arith.constant 64 : i32
    %304 = vector.broadcast %c64_i32 : i32 to vector<32x64xi32>
    %305 = arith.select %303, %301, %304 : vector<32x64xi1>, vector<32x64xi32>
    %cst_79 = arith.constant dense<2147483647> : vector<32xi32>
    %306 = vector.multi_reduction <minsi>, %305, %cst_79 [1] : vector<32x64xi32> to vector<32xi32>
    %307 = vector.shape_cast %306 : vector<32xi32> to vector<32x1xi32>
    %c0_80 = arith.constant 0 : index
    %c0_81 = arith.constant 0 : index
    %308 = vector.load %arg6[%c0_80, %c0_81] : memref<32x1xi32, #tpu.memory_space<vmem>>, vector<32x1xi32>
    tpu.vector_store %arg6[%c0_80, %c0_81], %307 {strides = array<i32>} : memref<32x1xi32, #tpu.memory_space<vmem>>, vector<32x1xi32>,
    %309 = vector.broadcast %307 : vector<32x1xi32> to vector<32x64xi32>
    %310 = arith.cmpi eq, %301, %309 : vector<32x64xi32>
    %311 = arith.extui %310 : vector<32x64xi1> to vector<32x64xi32>
    %312 = arith.sitofp %311 : vector<32x64xi32> to vector<32x64xf32>
    %cst_82 = arith.constant dense<0.000000e+00> : vector<32x8xf32>
    %313 = tpu.matmul %312, %281, %cst_82 {dimension_numbers = #tpu.dot_dimension_numbers<[1], [0], [0], [1], [0, 0, 1, 1], [], []>} : vector<32x64xf32>, vector<64x8xf32>, vector<32x8xf32> -> vector<32x8xf32>
    %314 = arith.subf %280, %313 : vector<32x8xf32>
    %315 = arith.mulf %314, %314 : vector<32x8xf32>
    %cst_83 = arith.constant dense<0.000000e+00> : vector<32xf32>
    %316 = vector.multi_reduction <add>, %315, %cst_83 [1] : vector<32x8xf32> to vector<32xf32>
    %317 = vector.shape_cast %316 : vector<32xf32> to vector<32x1xf32>
    %cst_84 = arith.constant dense<0.000000e+00> : vector<1xf32>
    %318 = vector.multi_reduction <add>, %317, %cst_84 [0] : vector<32x1xf32> to vector<1xf32>
    %319 = vector.shape_cast %318 : vector<1xf32> to vector<1x1xf32>
    %cst_85 = arith.constant 1.150000e+00 : f32
    %320 = vector.broadcast %cst_85 : f32 to vector<1x1xf32>
    %321 = arith.mulf %320, %319 : vector<1x1xf32>
    %cst_86 = arith.constant 2.560000e+02 : f32
    %322 = vector.broadcast %cst_86 : f32 to vector<1x1xf32>
    %323 = arith.divf %321, %322 : vector<1x1xf32>
    %c0_87 = arith.constant 0 : index
    %c0_88 = arith.constant 0 : index
    %324 = vector.load %arg5[%c0_87, %c0_88] : memref<1x1xf32, #tpu.memory_space<vmem>>, vector<1x1xf32>
    tpu.vector_store %arg5[%c0_87, %c0_88], %323 {strides = array<i32>} : memref<1x1xf32, #tpu.memory_space<vmem>>, vector<1x1xf32>,
    %c1240 = arith.constant 1240 : index
    %c0_89 = arith.constant 0 : index
    %325 = vector.load %arg2[%c1240, %c0_89] : memref<1312x128xf32, #tpu.memory_space<vmem>>, vector<8x32xf32>
    %326 = arith.truncf %313 : vector<32x8xf32> to vector<32x8xbf16>
    %327 = arith.truncf %325 : vector<8x32xf32> to vector<8x32xbf16>
    %cst_90 = arith.constant dense<0.000000e+00> : vector<32x32xf32>
    %328 = tpu.matmul %326, %327, %cst_90 {dimension_numbers = #tpu.dot_dimension_numbers<[1], [0], [0], [1], [0, 0, 1, 1], [], []>} : vector<32x8xbf16>, vector<8x32xbf16>, vector<32x32xf32> -> vector<32x32xf32>
    %c37 = arith.constant 37 : index
    %c0_91 = arith.constant 0 : index
    %329 = vector.load %arg3[%c37, %c0_91] : memref<40x128xf32, #tpu.memory_space<vmem>>, vector<1x32xf32>
    %330 = vector.broadcast %329 : vector<1x32xf32> to vector<32x32xf32>
    %331 = arith.addf %328, %330 : vector<32x32xf32>
    %332 = arith.truncf %0 : vector<224x32xf32> to vector<224x32xbf16>
    %333 = arith.truncf %331 : vector<32x32xf32> to vector<32x32xbf16>
    %cst_92 = arith.constant dense<0.000000e+00> : vector<224x32xf32>
    %334 = tpu.matmul %332, %333, %cst_92 {dimension_numbers = #tpu.dot_dimension_numbers<[1], [0], [0], [1], [0, 0, 1, 1], [], []>} : vector<224x32xbf16>, vector<32x32xbf16>, vector<224x32xf32> -> vector<224x32xf32>
    %335 = vector.extract_strided_slice %334 {offsets = [0, 0], sizes = [32, 32], strides = [1, 1]} : vector<224x32xf32> to vector<32x32xf32>
    %336 = vector.extract_strided_slice %334 {offsets = [32, 0], sizes = [32, 32], strides = [1, 1]} : vector<224x32xf32> to vector<32x32xf32>
    %337 = vector.extract_strided_slice %334 {offsets = [64, 0], sizes = [32, 32], strides = [1, 1]} : vector<224x32xf32> to vector<32x32xf32>
    %338 = vector.extract_strided_slice %334 {offsets = [96, 0], sizes = [32, 32], strides = [1, 1]} : vector<224x32xf32> to vector<32x32xf32>
    %339 = vector.extract_strided_slice %334 {offsets = [128, 0], sizes = [32, 32], strides = [1, 1]} : vector<224x32xf32> to vector<32x32xf32>
    %340 = vector.extract_strided_slice %334 {offsets = [160, 0], sizes = [32, 32], strides = [1, 1]} : vector<224x32xf32> to vector<32x32xf32>
    %341 = vector.extract_strided_slice %334 {offsets = [192, 0], sizes = [32, 32], strides = [1, 1]} : vector<224x32xf32> to vector<32x32xf32>
    %342 = tpu.concatenate %335, %336, %337, %338, %339, %340, %341 in 1 : vector<32x32xf32>, vector<32x32xf32>, vector<32x32xf32>, vector<32x32xf32>, vector<32x32xf32>, vector<32x32xf32>, vector<32x32xf32> -> vector<32x224xf32>
    %c680 = arith.constant 680 : index
    %c0_93 = arith.constant 0 : index
    %343 = vector.load %arg2[%c680, %c0_93] : memref<1312x128xf32, #tpu.memory_space<vmem>>, vector<224x32xf32>
    %344 = arith.truncf %342 : vector<32x224xf32> to vector<32x224xbf16>
    %345 = arith.truncf %343 : vector<224x32xf32> to vector<224x32xbf16>
    %cst_94 = arith.constant dense<0.000000e+00> : vector<32x32xf32>
    %346 = tpu.matmul %344, %345, %cst_94 {dimension_numbers = #tpu.dot_dimension_numbers<[1], [0], [0], [1], [0, 0, 1, 1], [], []>} : vector<32x224xbf16>, vector<224x32xbf16>, vector<32x32xf32> -> vector<32x32xf32>
    %c18 = arith.constant 18 : index
    %c0_95 = arith.constant 0 : index
    %347 = vector.load %arg3[%c18, %c0_95] : memref<40x128xf32, #tpu.memory_space<vmem>>, vector<1x32xf32>
    %348 = vector.broadcast %347 : vector<1x32xf32> to vector<32x32xf32>
    %349 = arith.addf %346, %348 : vector<32x32xf32>
    %cst_96 = arith.constant dense<0.000000e+00> : vector<32xf32>
    %350 = vector.multi_reduction <add>, %349, %cst_96 [1] : vector<32x32xf32> to vector<32xf32>
    %351 = vector.shape_cast %350 : vector<32xf32> to vector<32x1xf32>
    %cst_97 = arith.constant 3.200000e+01 : f32
    %352 = vector.broadcast %cst_97 : f32 to vector<32x1xf32>
    %353 = arith.divf %351, %352 : vector<32x1xf32>
    %354 = vector.broadcast %353 : vector<32x1xf32> to vector<32x32xf32>
    %355 = arith.subf %349, %354 : vector<32x32xf32>
    %356 = arith.mulf %355, %355 : vector<32x32xf32>
    %cst_98 = arith.constant dense<0.000000e+00> : vector<32xf32>
    %357 = vector.multi_reduction <add>, %356, %cst_98 [1] : vector<32x32xf32> to vector<32xf32>
    %358 = vector.shape_cast %357 : vector<32xf32> to vector<32x1xf32>
    %cst_99 = arith.constant 3.200000e+01 : f32
    %359 = vector.broadcast %cst_99 : f32 to vector<32x1xf32>
    %360 = arith.divf %358, %359 : vector<32x1xf32>
    %361 = vector.broadcast %353 : vector<32x1xf32> to vector<32x32xf32>
    %362 = arith.subf %349, %361 : vector<32x32xf32>
    %cst_100 = arith.constant 9.99999997E-7 : f32
    %363 = vector.broadcast %cst_100 : f32 to vector<32x1xf32>
    %364 = arith.addf %360, %363 : vector<32x1xf32>
    %365 = math.rsqrt %364 : vector<32x1xf32>
    %366 = vector.broadcast %365 : vector<32x1xf32> to vector<32x32xf32>
    %367 = arith.mulf %362, %366 : vector<32x32xf32>
    %c19 = arith.constant 19 : index
    %c0_101 = arith.constant 0 : index
    %368 = vector.load %arg3[%c19, %c0_101] : memref<40x128xf32, #tpu.memory_space<vmem>>, vector<1x32xf32>
    %369 = vector.broadcast %368 : vector<1x32xf32> to vector<32x32xf32>
    %370 = arith.mulf %367, %369 : vector<32x32xf32>
    %c20 = arith.constant 20 : index
    %c0_102 = arith.constant 0 : index
    %371 = vector.load %arg3[%c20, %c0_102] : memref<40x128xf32, #tpu.memory_space<vmem>>, vector<1x32xf32>
    %372 = vector.broadcast %371 : vector<1x32xf32> to vector<32x32xf32>
    %373 = arith.addf %370, %372 : vector<32x32xf32>
    %374 = arith.truncf %0 : vector<224x32xf32> to vector<224x32xbf16>
    %375 = arith.truncf %373 : vector<32x32xf32> to vector<32x32xbf16>
    %cst_103 = arith.constant dense<0.000000e+00> : vector<224x32xf32>
    %376 = tpu.matmul %374, %375, %cst_103 {dimension_numbers = #tpu.dot_dimension_numbers<[1], [0], [0], [1], [0, 0, 1, 1], [], []>} : vector<224x32xbf16>, vector<32x32xbf16>, vector<224x32xf32> -> vector<224x32xf32>
    %c904 = arith.constant 904 : index
    %c0_104 = arith.constant 0 : index
    %377 = vector.load %arg2[%c904, %c0_104] : memref<1312x128xf32, #tpu.memory_space<vmem>>, vector<7x32xf32>
    %c23 = arith.constant 23 : index
    %c0_105 = arith.constant 0 : index
    %378 = vector.load %arg3[%c23, %c0_105] : memref<40x128xf32, #tpu.memory_space<vmem>>, vector<1x32xf32>
    %379 = vector.extract_strided_slice %376 {offsets = [0, 0], sizes = [32, 32], strides = [1, 1]} : vector<224x32xf32> to vector<32x32xf32>
    %380 = vector.extract_strided_slice %377 {offsets = [0, 0], sizes = [1, 32], strides = [1, 1]} : vector<7x32xf32> to vector<1x32xf32>
    %381 = vector.broadcast %380 : vector<1x32xf32> to vector<32x32xf32>
    %382 = arith.mulf %379, %381 : vector<32x32xf32>
    %383 = vector.broadcast %378 : vector<1x32xf32> to vector<32x32xf32>
    %384 = arith.addf %383, %382 : vector<32x32xf32>
    %385 = vector.extract_strided_slice %376 {offsets = [32, 0], sizes = [32, 32], strides = [1, 1]} : vector<224x32xf32> to vector<32x32xf32>
    %386 = vector.extract_strided_slice %377 {offsets = [1, 0], sizes = [1, 32], strides = [1, 1]} : vector<7x32xf32> to vector<1x32xf32>
    %387 = vector.broadcast %386 : vector<1x32xf32> to vector<32x32xf32>
    %388 = arith.mulf %385, %387 : vector<32x32xf32>
    %389 = arith.addf %384, %388 : vector<32x32xf32>
    %390 = vector.extract_strided_slice %376 {offsets = [64, 0], sizes = [32, 32], strides = [1, 1]} : vector<224x32xf32> to vector<32x32xf32>
    %391 = vector.extract_strided_slice %377 {offsets = [2, 0], sizes = [1, 32], strides = [1, 1]} : vector<7x32xf32> to vector<1x32xf32>
    %392 = vector.broadcast %391 : vector<1x32xf32> to vector<32x32xf32>
    %393 = arith.mulf %390, %392 : vector<32x32xf32>
    %394 = arith.addf %389, %393 : vector<32x32xf32>
    %395 = vector.extract_strided_slice %376 {offsets = [96, 0], sizes = [32, 32], strides = [1, 1]} : vector<224x32xf32> to vector<32x32xf32>
    %396 = vector.extract_strided_slice %377 {offsets = [3, 0], sizes = [1, 32], strides = [1, 1]} : vector<7x32xf32> to vector<1x32xf32>
    %397 = vector.broadcast %396 : vector<1x32xf32> to vector<32x32xf32>
    %398 = arith.mulf %395, %397 : vector<32x32xf32>
    %399 = arith.addf %394, %398 : vector<32x32xf32>
    %400 = vector.extract_strided_slice %376 {offsets = [128, 0], sizes = [32, 32], strides = [1, 1]} : vector<224x32xf32> to vector<32x32xf32>
    %401 = vector.extract_strided_slice %377 {offsets = [4, 0], sizes = [1, 32], strides = [1, 1]} : vector<7x32xf32> to vector<1x32xf32>
    %402 = vector.broadcast %401 : vector<1x32xf32> to vector<32x32xf32>
    %403 = arith.mulf %400, %402 : vector<32x32xf32>
    %404 = arith.addf %399, %403 : vector<32x32xf32>
    %405 = vector.extract_strided_slice %376 {offsets = [160, 0], sizes = [32, 32], strides = [1, 1]} : vector<224x32xf32> to vector<32x32xf32>
    %406 = vector.extract_strided_slice %377 {offsets = [5, 0], sizes = [1, 32], strides = [1, 1]} : vector<7x32xf32> to vector<1x32xf32>
    %407 = vector.broadcast %406 : vector<1x32xf32> to vector<32x32xf32>
    %408 = arith.mulf %405, %407 : vector<32x32xf32>
    %409 = arith.addf %404, %408 : vector<32x32xf32>
    %410 = vector.extract_strided_slice %376 {offsets = [192, 0], sizes = [32, 32], strides = [1, 1]} : vector<224x32xf32> to vector<32x32xf32>
    %411 = vector.extract_strided_slice %377 {offsets = [6, 0], sizes = [1, 32], strides = [1, 1]} : vector<7x32xf32> to vector<1x32xf32>
    %412 = vector.broadcast %411 : vector<1x32xf32> to vector<32x32xf32>
    %413 = arith.mulf %410, %412 : vector<32x32xf32>
    %414 = arith.addf %409, %413 : vector<32x32xf32>
    %cst_106 = arith.constant dense<0.000000e+00> : vector<32xf32>
    %415 = vector.multi_reduction <add>, %414, %cst_106 [1] : vector<32x32xf32> to vector<32xf32>
    %416 = vector.shape_cast %415 : vector<32xf32> to vector<32x1xf32>
    %cst_107 = arith.constant 3.200000e+01 : f32
    %417 = vector.broadcast %cst_107 : f32 to vector<32x1xf32>
    %418 = arith.divf %416, %417 : vector<32x1xf32>
    %419 = vector.broadcast %418 : vector<32x1xf32> to vector<32x32xf32>
    %420 = arith.subf %414, %419 : vector<32x32xf32>
    %421 = arith.mulf %420, %420 : vector<32x32xf32>
    %cst_108 = arith.constant dense<0.000000e+00> : vector<32xf32>
    %422 = vector.multi_reduction <add>, %421, %cst_108 [1] : vector<32x32xf32> to vector<32xf32>
    %423 = vector.shape_cast %422 : vector<32xf32> to vector<32x1xf32>
    %cst_109 = arith.constant 3.200000e+01 : f32
    %424 = vector.broadcast %cst_109 : f32 to vector<32x1xf32>
    %425 = arith.divf %423, %424 : vector<32x1xf32>
    %426 = vector.broadcast %418 : vector<32x1xf32> to vector<32x32xf32>
    %427 = arith.subf %414, %426 : vector<32x32xf32>
    %cst_110 = arith.constant 9.99999997E-7 : f32
    %428 = vector.broadcast %cst_110 : f32 to vector<32x1xf32>
    %429 = arith.addf %425, %428 : vector<32x1xf32>
    %430 = math.rsqrt %429 : vector<32x1xf32>
    %431 = vector.broadcast %430 : vector<32x1xf32> to vector<32x32xf32>
    %432 = arith.mulf %427, %431 : vector<32x32xf32>
    %c24 = arith.constant 24 : index
    %c0_111 = arith.constant 0 : index
    %433 = vector.load %arg3[%c24, %c0_111] : memref<40x128xf32, #tpu.memory_space<vmem>>, vector<1x32xf32>
    %434 = vector.broadcast %433 : vector<1x32xf32> to vector<32x32xf32>
    %435 = arith.mulf %432, %434 : vector<32x32xf32>
    %c25 = arith.constant 25 : index
    %c0_112 = arith.constant 0 : index
    %436 = vector.load %arg3[%c25, %c0_112] : memref<40x128xf32, #tpu.memory_space<vmem>>, vector<1x32xf32>
    %437 = vector.broadcast %436 : vector<1x32xf32> to vector<32x32xf32>
    %438 = arith.addf %435, %437 : vector<32x32xf32>
    %c912 = arith.constant 912 : index
    %c0_113 = arith.constant 0 : index
    %439 = vector.load %arg2[%c912, %c0_113] : memref<1312x128xf32, #tpu.memory_space<vmem>>, vector<32x64xf32>
    %440 = arith.truncf %438 : vector<32x32xf32> to vector<32x32xbf16>
    %441 = arith.truncf %439 : vector<32x64xf32> to vector<32x64xbf16>
    %cst_114 = arith.constant dense<0.000000e+00> : vector<32x64xf32>
    %442 = tpu.matmul %440, %441, %cst_114 {dimension_numbers = #tpu.dot_dimension_numbers<[1], [0], [0], [1], [0, 0, 1, 1], [], []>} : vector<32x32xbf16>, vector<32x64xbf16>, vector<32x64xf32> -> vector<32x64xf32>
    %c26 = arith.constant 26 : index
    %c0_115 = arith.constant 0 : index
    %443 = vector.load %arg3[%c26, %c0_115] : memref<40x128xf32, #tpu.memory_space<vmem>>, vector<1x64xf32>
    %444 = vector.broadcast %443 : vector<1x64xf32> to vector<32x64xf32>
    %445 = arith.addf %442, %444 : vector<32x64xf32>
    %446 = arith.mulf %445, %445 : vector<32x64xf32>
    %447 = arith.mulf %445, %446 : vector<32x64xf32>
    %cst_116 = arith.constant 4.471500e-02 : f32
    %448 = vector.broadcast %cst_116 : f32 to vector<32x64xf32>
    %449 = arith.mulf %448, %447 : vector<32x64xf32>
    %450 = arith.addf %445, %449 : vector<32x64xf32>
    %cst_117 = arith.constant 0.797884583 : f32
    %451 = vector.broadcast %cst_117 : f32 to vector<32x64xf32>
    %452 = arith.mulf %451, %450 : vector<32x64xf32>
    %453 = math.tanh %452 : vector<32x64xf32>
    %cst_118 = arith.constant 1.000000e+00 : f32
    %454 = vector.broadcast %cst_118 : f32 to vector<32x64xf32>
    %455 = arith.addf %454, %453 : vector<32x64xf32>
    %cst_119 = arith.constant 5.000000e-01 : f32
    %456 = vector.broadcast %cst_119 : f32 to vector<32x64xf32>
    %457 = arith.mulf %456, %455 : vector<32x64xf32>
    %458 = arith.mulf %445, %457 : vector<32x64xf32>
    %c28 = arith.constant 28 : index
    %c0_120 = arith.constant 0 : index
    %459 = vector.load %arg3[%c28, %c0_120] : memref<40x128xf32, #tpu.memory_space<vmem>>, vector<1x32xf32>
    %c944 = arith.constant 944 : index
    %c0_121 = arith.constant 0 : index
    %460 = vector.load %arg2[%c944, %c0_121] : memref<1312x128xf32, #tpu.memory_space<vmem>>, vector<64x32xf32>
    %461 = arith.truncf %458 : vector<32x64xf32> to vector<32x64xbf16>
    %462 = arith.truncf %460 : vector<64x32xf32> to vector<64x32xbf16>
    %cst_122 = arith.constant dense<0.000000e+00> : vector<32x32xf32>
    %463 = tpu.matmul %461, %462, %cst_122 {dimension_numbers = #tpu.dot_dimension_numbers<[1], [0], [0], [1], [0, 0, 1, 1], [], []>} : vector<32x64xbf16>, vector<64x32xbf16>, vector<32x32xf32> -> vector<32x32xf32>
    %c27 = arith.constant 27 : index
    %c0_123 = arith.constant 0 : index
    %464 = vector.load %arg3[%c27, %c0_123] : memref<40x128xf32, #tpu.memory_space<vmem>>, vector<1x32xf32>
    %465 = vector.broadcast %464 : vector<1x32xf32> to vector<32x32xf32>
    %466 = arith.addf %463, %465 : vector<32x32xf32>
    %467 = vector.broadcast %459 : vector<1x32xf32> to vector<32x32xf32>
    %468 = arith.mulf %467, %466 : vector<32x32xf32>
    %469 = arith.addf %373, %468 : vector<32x32xf32>
    %470 = arith.truncf %0 : vector<224x32xf32> to vector<224x32xbf16>
    %471 = arith.truncf %469 : vector<32x32xf32> to vector<32x32xbf16>
    %cst_124 = arith.constant dense<0.000000e+00> : vector<224x32xf32>
    %472 = tpu.matmul %470, %471, %cst_124 {dimension_numbers = #tpu.dot_dimension_numbers<[1], [0], [0], [1], [0, 0, 1, 1], [], []>} : vector<224x32xbf16>, vector<32x32xbf16>, vector<224x32xf32> -> vector<224x32xf32>
    %c1008 = arith.constant 1008 : index
    %c0_125 = arith.constant 0 : index
    %473 = vector.load %arg2[%c1008, %c0_125] : memref<1312x128xf32, #tpu.memory_space<vmem>>, vector<7x32xf32>
    %c29 = arith.constant 29 : index
    %c0_126 = arith.constant 0 : index
    %474 = vector.load %arg3[%c29, %c0_126] : memref<40x128xf32, #tpu.memory_space<vmem>>, vector<1x32xf32>
    %475 = vector.extract_strided_slice %472 {offsets = [0, 0], sizes = [32, 32], strides = [1, 1]} : vector<224x32xf32> to vector<32x32xf32>
    %476 = vector.extract_strided_slice %473 {offsets = [0, 0], sizes = [1, 32], strides = [1, 1]} : vector<7x32xf32> to vector<1x32xf32>
    %477 = vector.broadcast %476 : vector<1x32xf32> to vector<32x32xf32>
    %478 = arith.mulf %475, %477 : vector<32x32xf32>
    %479 = vector.broadcast %474 : vector<1x32xf32> to vector<32x32xf32>
    %480 = arith.addf %479, %478 : vector<32x32xf32>
    %481 = vector.extract_strided_slice %472 {offsets = [32, 0], sizes = [32, 32], strides = [1, 1]} : vector<224x32xf32> to vector<32x32xf32>
    %482 = vector.extract_strided_slice %473 {offsets = [1, 0], sizes = [1, 32], strides = [1, 1]} : vector<7x32xf32> to vector<1x32xf32>
    %483 = vector.broadcast %482 : vector<1x32xf32> to vector<32x32xf32>
    %484 = arith.mulf %481, %483 : vector<32x32xf32>
    %485 = arith.addf %480, %484 : vector<32x32xf32>
    %486 = vector.extract_strided_slice %472 {offsets = [64, 0], sizes = [32, 32], strides = [1, 1]} : vector<224x32xf32> to vector<32x32xf32>
    %487 = vector.extract_strided_slice %473 {offsets = [2, 0], sizes = [1, 32], strides = [1, 1]} : vector<7x32xf32> to vector<1x32xf32>
    %488 = vector.broadcast %487 : vector<1x32xf32> to vector<32x32xf32>
    %489 = arith.mulf %486, %488 : vector<32x32xf32>
    %490 = arith.addf %485, %489 : vector<32x32xf32>
    %491 = vector.extract_strided_slice %472 {offsets = [96, 0], sizes = [32, 32], strides = [1, 1]} : vector<224x32xf32> to vector<32x32xf32>
    %492 = vector.extract_strided_slice %473 {offsets = [3, 0], sizes = [1, 32], strides = [1, 1]} : vector<7x32xf32> to vector<1x32xf32>
    %493 = vector.broadcast %492 : vector<1x32xf32> to vector<32x32xf32>
    %494 = arith.mulf %491, %493 : vector<32x32xf32>
    %495 = arith.addf %490, %494 : vector<32x32xf32>
    %496 = vector.extract_strided_slice %472 {offsets = [128, 0], sizes = [32, 32], strides = [1, 1]} : vector<224x32xf32> to vector<32x32xf32>
    %497 = vector.extract_strided_slice %473 {offsets = [4, 0], sizes = [1, 32], strides = [1, 1]} : vector<7x32xf32> to vector<1x32xf32>
    %498 = vector.broadcast %497 : vector<1x32xf32> to vector<32x32xf32>
    %499 = arith.mulf %496, %498 : vector<32x32xf32>
    %500 = arith.addf %495, %499 : vector<32x32xf32>
    %501 = vector.extract_strided_slice %472 {offsets = [160, 0], sizes = [32, 32], strides = [1, 1]} : vector<224x32xf32> to vector<32x32xf32>
    %502 = vector.extract_strided_slice %473 {offsets = [5, 0], sizes = [1, 32], strides = [1, 1]} : vector<7x32xf32> to vector<1x32xf32>
    %503 = vector.broadcast %502 : vector<1x32xf32> to vector<32x32xf32>
    %504 = arith.mulf %501, %503 : vector<32x32xf32>
    %505 = arith.addf %500, %504 : vector<32x32xf32>
    %506 = vector.extract_strided_slice %472 {offsets = [192, 0], sizes = [32, 32], strides = [1, 1]} : vector<224x32xf32> to vector<32x32xf32>
    %507 = vector.extract_strided_slice %473 {offsets = [6, 0], sizes = [1, 32], strides = [1, 1]} : vector<7x32xf32> to vector<1x32xf32>
    %508 = vector.broadcast %507 : vector<1x32xf32> to vector<32x32xf32>
    %509 = arith.mulf %506, %508 : vector<32x32xf32>
    %510 = arith.addf %505, %509 : vector<32x32xf32>
    %cst_127 = arith.constant dense<0.000000e+00> : vector<32xf32>
    %511 = vector.multi_reduction <add>, %510, %cst_127 [1] : vector<32x32xf32> to vector<32xf32>
    %512 = vector.shape_cast %511 : vector<32xf32> to vector<32x1xf32>
    %cst_128 = arith.constant 3.200000e+01 : f32
    %513 = vector.broadcast %cst_128 : f32 to vector<32x1xf32>
    %514 = arith.divf %512, %513 : vector<32x1xf32>
    %515 = vector.broadcast %514 : vector<32x1xf32> to vector<32x32xf32>
    %516 = arith.subf %510, %515 : vector<32x32xf32>
    %517 = arith.mulf %516, %516 : vector<32x32xf32>
    %cst_129 = arith.constant dense<0.000000e+00> : vector<32xf32>
    %518 = vector.multi_reduction <add>, %517, %cst_129 [1] : vector<32x32xf32> to vector<32xf32>
    %519 = vector.shape_cast %518 : vector<32xf32> to vector<32x1xf32>
    %cst_130 = arith.constant 3.200000e+01 : f32
    %520 = vector.broadcast %cst_130 : f32 to vector<32x1xf32>
    %521 = arith.divf %519, %520 : vector<32x1xf32>
    %522 = vector.broadcast %514 : vector<32x1xf32> to vector<32x32xf32>
    %523 = arith.subf %510, %522 : vector<32x32xf32>
    %cst_131 = arith.constant 9.99999997E-7 : f32
    %524 = vector.broadcast %cst_131 : f32 to vector<32x1xf32>
    %525 = arith.addf %521, %524 : vector<32x1xf32>
    %526 = math.rsqrt %525 : vector<32x1xf32>
    %527 = vector.broadcast %526 : vector<32x1xf32> to vector<32x32xf32>
    %528 = arith.mulf %523, %527 : vector<32x32xf32>
    %c30 = arith.constant 30 : index
    %c0_132 = arith.constant 0 : index
    %529 = vector.load %arg3[%c30, %c0_132] : memref<40x128xf32, #tpu.memory_space<vmem>>, vector<1x32xf32>
    %530 = vector.broadcast %529 : vector<1x32xf32> to vector<32x32xf32>
    %531 = arith.mulf %528, %530 : vector<32x32xf32>
    %c31 = arith.constant 31 : index
    %c0_133 = arith.constant 0 : index
    %532 = vector.load %arg3[%c31, %c0_133] : memref<40x128xf32, #tpu.memory_space<vmem>>, vector<1x32xf32>
    %533 = vector.broadcast %532 : vector<1x32xf32> to vector<32x32xf32>
    %534 = arith.addf %531, %533 : vector<32x32xf32>
    %c1016 = arith.constant 1016 : index
    %c0_134 = arith.constant 0 : index
    %535 = vector.load %arg2[%c1016, %c0_134] : memref<1312x128xf32, #tpu.memory_space<vmem>>, vector<32x64xf32>
    %536 = arith.truncf %534 : vector<32x32xf32> to vector<32x32xbf16>
    %537 = arith.truncf %535 : vector<32x64xf32> to vector<32x64xbf16>
    %cst_135 = arith.constant dense<0.000000e+00> : vector<32x64xf32>
    %538 = tpu.matmul %536, %537, %cst_135 {dimension_numbers = #tpu.dot_dimension_numbers<[1], [0], [0], [1], [0, 0, 1, 1], [], []>} : vector<32x32xbf16>, vector<32x64xbf16>, vector<32x64xf32> -> vector<32x64xf32>
    %c32 = arith.constant 32 : index
    %c0_136 = arith.constant 0 : index
    %539 = vector.load %arg3[%c32, %c0_136] : memref<40x128xf32, #tpu.memory_space<vmem>>, vector<1x64xf32>
    %540 = vector.broadcast %539 : vector<1x64xf32> to vector<32x64xf32>
    %541 = arith.addf %538, %540 : vector<32x64xf32>
    %542 = arith.mulf %541, %541 : vector<32x64xf32>
    %543 = arith.mulf %541, %542 : vector<32x64xf32>
    %cst_137 = arith.constant 4.471500e-02 : f32
    %544 = vector.broadcast %cst_137 : f32 to vector<32x64xf32>
    %545 = arith.mulf %544, %543 : vector<32x64xf32>
    %546 = arith.addf %541, %545 : vector<32x64xf32>
    %cst_138 = arith.constant 0.797884583 : f32
    %547 = vector.broadcast %cst_138 : f32 to vector<32x64xf32>
    %548 = arith.mulf %547, %546 : vector<32x64xf32>
    %549 = math.tanh %548 : vector<32x64xf32>
    %cst_139 = arith.constant 1.000000e+00 : f32
    %550 = vector.broadcast %cst_139 : f32 to vector<32x64xf32>
    %551 = arith.addf %550, %549 : vector<32x64xf32>
    %cst_140 = arith.constant 5.000000e-01 : f32
    %552 = vector.broadcast %cst_140 : f32 to vector<32x64xf32>
    %553 = arith.mulf %552, %551 : vector<32x64xf32>
    %554 = arith.mulf %541, %553 : vector<32x64xf32>
    %c34 = arith.constant 34 : index
    %c0_141 = arith.constant 0 : index
    %555 = vector.load %arg3[%c34, %c0_141] : memref<40x128xf32, #tpu.memory_space<vmem>>, vector<1x32xf32>
    %c1048 = arith.constant 1048 : index
    %c0_142 = arith.constant 0 : index
    %556 = vector.load %arg2[%c1048, %c0_142] : memref<1312x128xf32, #tpu.memory_space<vmem>>, vector<64x32xf32>
    %557 = arith.truncf %554 : vector<32x64xf32> to vector<32x64xbf16>
    %558 = arith.truncf %556 : vector<64x32xf32> to vector<64x32xbf16>
    %cst_143 = arith.constant dense<0.000000e+00> : vector<32x32xf32>
    %559 = tpu.matmul %557, %558, %cst_143 {dimension_numbers = #tpu.dot_dimension_numbers<[1], [0], [0], [1], [0, 0, 1, 1], [], []>} : vector<32x64xbf16>, vector<64x32xbf16>, vector<32x32xf32> -> vector<32x32xf32>
    %c33 = arith.constant 33 : index
    %c0_144 = arith.constant 0 : index
    %560 = vector.load %arg3[%c33, %c0_144] : memref<40x128xf32, #tpu.memory_space<vmem>>, vector<1x32xf32>
    %561 = vector.broadcast %560 : vector<1x32xf32> to vector<32x32xf32>
    %562 = arith.addf %559, %561 : vector<32x32xf32>
    %563 = vector.broadcast %555 : vector<1x32xf32> to vector<32x32xf32>
    %564 = arith.mulf %563, %562 : vector<32x32xf32>
    %565 = arith.addf %469, %564 : vector<32x32xf32>
    %cst_145 = arith.constant dense<0.000000e+00> : vector<32xf32>
    %566 = vector.multi_reduction <add>, %565, %cst_145 [1] : vector<32x32xf32> to vector<32xf32>
    %567 = vector.shape_cast %566 : vector<32xf32> to vector<32x1xf32>
    %cst_146 = arith.constant 3.200000e+01 : f32
    %568 = vector.broadcast %cst_146 : f32 to vector<32x1xf32>
    %569 = arith.divf %567, %568 : vector<32x1xf32>
    %570 = vector.broadcast %569 : vector<32x1xf32> to vector<32x32xf32>
    %571 = arith.subf %565, %570 : vector<32x32xf32>
    %572 = arith.mulf %571, %571 : vector<32x32xf32>
    %cst_147 = arith.constant dense<0.000000e+00> : vector<32xf32>
    %573 = vector.multi_reduction <add>, %572, %cst_147 [1] : vector<32x32xf32> to vector<32xf32>
    %574 = vector.shape_cast %573 : vector<32xf32> to vector<32x1xf32>
    %cst_148 = arith.constant 3.200000e+01 : f32
    %575 = vector.broadcast %cst_148 : f32 to vector<32x1xf32>
    %576 = arith.divf %574, %575 : vector<32x1xf32>
    %577 = vector.broadcast %569 : vector<32x1xf32> to vector<32x32xf32>
    %578 = arith.subf %565, %577 : vector<32x32xf32>
    %cst_149 = arith.constant 9.99999997E-7 : f32
    %579 = vector.broadcast %cst_149 : f32 to vector<32x1xf32>
    %580 = arith.addf %576, %579 : vector<32x1xf32>
    %581 = math.rsqrt %580 : vector<32x1xf32>
    %582 = vector.broadcast %581 : vector<32x1xf32> to vector<32x32xf32>
    %583 = arith.mulf %578, %582 : vector<32x32xf32>
    %c21 = arith.constant 21 : index
    %c0_150 = arith.constant 0 : index
    %584 = vector.load %arg3[%c21, %c0_150] : memref<40x128xf32, #tpu.memory_space<vmem>>, vector<1x32xf32>
    %585 = vector.broadcast %584 : vector<1x32xf32> to vector<32x32xf32>
    %586 = arith.mulf %583, %585 : vector<32x32xf32>
    %c22 = arith.constant 22 : index
    %c0_151 = arith.constant 0 : index
    %587 = vector.load %arg3[%c22, %c0_151] : memref<40x128xf32, #tpu.memory_space<vmem>>, vector<1x32xf32>
    %588 = vector.broadcast %587 : vector<1x32xf32> to vector<32x32xf32>
    %589 = arith.addf %586, %588 : vector<32x32xf32>
    %c1248 = arith.constant 1248 : index
    %c0_152 = arith.constant 0 : index
    %590 = vector.load %arg2[%c1248, %c0_152] : memref<1312x128xf32, #tpu.memory_space<vmem>>, vector<32x32xf32>
    %591 = arith.truncf %589 : vector<32x32xf32> to vector<32x32xbf16>
    %592 = arith.truncf %590 : vector<32x32xf32> to vector<32x32xbf16>
    %cst_153 = arith.constant dense<0.000000e+00> : vector<32x32xf32>
    %593 = tpu.matmul %591, %592, %cst_153 {dimension_numbers = #tpu.dot_dimension_numbers<[1], [0], [0], [1], [0, 0, 1, 1], [], []>} : vector<32x32xbf16>, vector<32x32xbf16>, vector<32x32xf32> -> vector<32x32xf32>
    %c38 = arith.constant 38 : index
    %c0_154 = arith.constant 0 : index
    %594 = vector.load %arg3[%c38, %c0_154] : memref<40x128xf32, #tpu.memory_space<vmem>>, vector<1x32xf32>
    %595 = vector.broadcast %594 : vector<1x32xf32> to vector<32x32xf32>
    %596 = arith.addf %593, %595 : vector<32x32xf32>
    %c1280 = arith.constant 1280 : index
    %c0_155 = arith.constant 0 : index
    %597 = vector.load %arg2[%c1280, %c0_155] : memref<1312x128xf32, #tpu.memory_space<vmem>>, vector<32x24xf32>
    %598 = arith.truncf %596 : vector<32x32xf32> to vector<32x32xbf16>
    %599 = arith.truncf %597 : vector<32x24xf32> to vector<32x24xbf16>
    %cst_156 = arith.constant dense<0.000000e+00> : vector<32x24xf32>
    %600 = tpu.matmul %598, %599, %cst_156 {dimension_numbers = #tpu.dot_dimension_numbers<[1], [0], [0], [1], [0, 0, 1, 1], [], []>} : vector<32x32xbf16>, vector<32x24xbf16>, vector<32x24xf32> -> vector<32x24xf32>
    %c39 = arith.constant 39 : index
    %c0_157 = arith.constant 0 : index
    %601 = vector.load %arg3[%c39, %c0_157] : memref<40x128xf32, #tpu.memory_space<vmem>>, vector<1x24xf32>
    %602 = vector.broadcast %601 : vector<1x24xf32> to vector<32x24xf32>
    %603 = arith.addf %600, %602 : vector<32x24xf32>
    %c0_158 = arith.constant 0 : index
    %c0_159 = arith.constant 0 : index
    %604 = vector.load %arg4[%c0_158, %c0_159] : memref<32x24xf32, #tpu.memory_space<vmem>>, vector<32x24xf32>
    tpu.vector_store %arg4[%c0_158, %c0_159], %603 {strides = array<i32>} : memref<32x24xf32, #tpu.memory_space<vmem>>, vector<32x24xf32>,
    return
  }
  func.func @transform_0(%arg0: i32) -> (i32, i32) {
    %c0_i32 = arith.constant 0 : i32
    %c0_i32_0 = arith.constant 0 : i32
    %c0_i32_1 = arith.constant 0 : i32
    return %c0_i32, %c0_i32_0 : i32, i32
  }
  func.func @transform_1(%arg0: i32) -> (i32, i32) {
    %c0_i32 = arith.constant 0 : i32
    %c0_i32_0 = arith.constant 0 : i32
    %c0_i32_1 = arith.constant 0 : i32
    return %c0_i32, %c0_i32_0 : i32, i32
  }
  func.func @transform_2(%arg0: i32) -> (i32, i32) {
    %c0_i32 = arith.constant 0 : i32
    %c0_i32_0 = arith.constant 0 : i32
    %c0_i32_1 = arith.constant 0 : i32
    return %c0_i32, %c0_i32_0 : i32, i32
  }
  func.func @transform_3(%arg0: i32) -> (i32, i32) {
    %c0_i32 = arith.constant 0 : i32
    %c0_i32_0 = arith.constant 0 : i32
    %c0_i32_1 = arith.constant 0 : i32
    return %c0_i32, %c0_i32_0 : i32, i32
  }
  func.func @transform_4(%arg0: i32) -> (i32, i32) {
    %c0_i32 = arith.constant 0 : i32
    %c0_i32_0 = arith.constant 0 : i32
    %c0_i32_1 = arith.constant 0 : i32
    return %c0_i32, %c0_i32_0 : i32, i32
  }
  func.func @transform_5(%arg0: i32) -> (i32, i32) {
    %c0_i32 = arith.constant 0 : i32
    %c0_i32_0 = arith.constant 0 : i32
    %c0_i32_1 = arith.constant 0 : i32
    return %c0_i32, %c0_i32_0 : i32, i32
  }
}

</mosaic_0001>

<llo_original>
// kernel: squeeze.3
$region0: #{squeeze.3}
  %s0 = inlined_call_operand.vmem [shape: s32[32], index: 0, kind: input, shape index: {}]
  %s1 = inlined_call_operand.hbm [shape: s32[1,2,16], index: 1, kind: output, shape index: {}]
  $region1: #{squeeze.3} parent=0
    #allocation0 [shape = 'u8[1024]{0}', space=vmem, size = 0x400, scoped, tag = 'operand span for operand 1']
    #allocation1 [shape = 's32[1]{0}', space=sflag, size = 0x4, scoped, tag = 'scoped memory for squeeze.3']
    #allocation2 [shape = 'u8[4096]{0}', space=vmem, size = 0x1000, scoped, tag = 'scoped mem for output reshape']
    #allocation3 [shape = 'u8[4096]{0}', space=vmem, size = 0x1000, scoped, tag = 'scoped mem for input reshape']
    %2 = vsyncpa [#allocation1], 0
    %s4 = ssub.s32 2, 1
    %v5 = vld [vmem:[%s0] sm:%s4]
    %6 = vst [vmem:[#allocation3] sm:%s4] %v5
    %v7 = vld [vmem:[#allocation3] sm:$0x1]
    %vm8 = vcmask 130048
    %9 = vst.msk [vmem:[#allocation2] sm:$0x1] %vm8, %v7
    %v10 = vld [vmem:[#allocation3] sm:$0x1]
    %11 = vrot.lane.b32.xlu0 %v10, 112
    %v12 = vpop.permute.xlu0 %11
    %vm13 = vcmask 130048
    %s14 = scalar_lea.vmem [#allocation2], 1
    %15 = vst.msk [vmem:[%s14] sm:$0x1] %vm13, %v12
    %s17 = ssub.s32 4, 1
    %v18 = vld [vmem:[#allocation2] sm:%s17]
    %s20 = ssub.s32 4, 1
    %21 = vst [vmem:[#allocation0] sm:%s20] %v18
    %23 = vsyncadd [#allocation1], 0
    %s25 = sshll.u32 [#allocation0], 4
    %s26 = int_to_ptr.vmem [resolvable:$true] %s25
    %s27 = sshll.u32 %s1, 4
    %s28 = int_to_ptr.hbm [resolvable:$true] %s27
    %30 = dma.vmem_to_hbm [thread:$0]  %s26, 32, %s28, [#allocation1]
    %32 = dma.done [#allocation1], 32
    %33 = vsyncpa [#allocation1], 1

// kernel: forward.1
$region0: #{forward.1}
  #allocation0 [shape = 'u32[]', space=smem, size = 0x4, offset = 0x4, fixed_abs, tag = 'smem constant byte address 0x4 - core index']
  #allocation1 [shape = 'u32[72,128]{1,0:T(1,128)}', space=vmem, size = 0x9000, scoped, tag = 'internal scratch']
  %s0 = inlined_call_operand.hbm [shape: f32[32,24], index: 0, kind: input, shape index: {}]
  %s1 = inlined_call_operand.hbm [shape: f32[1312,128], index: 1, kind: input, shape index: {}]
  %s2 = inlined_call_operand.hbm [shape: f32[40,128], index: 2, kind: input, shape index: {}]
  %s3 = inlined_call_operand.hbm [shape: f32[32,24], index: 3, kind: output, shape index: {0}]
  %s4 = inlined_call_operand.hbm [shape: f32[1,1], index: 4, kind: output, shape index: {1}]
  %s5 = inlined_call_operand.vmem [shape: s32[32,1], index: 5, kind: output, shape index: {2}]
  %6 = xla_tuple %s3, %s4, %s5
  %s7 = sld [smem:[#allocation0]]
  $region50: #{forward.1} parent=0
    _
  %s9 = ssub.s32 1, %s7
  %s10 = scalar_select 0, %s9, %s7
  $region1: #{forward.1} parent=0
    #allocation2 [shape = 'u8[16384]{0}', space=vmem, size = 0x4000, scoped, tag = 'input window, operand 0, single buffered']
    #allocation3 [shape = 's32[1]{0}', space=sflag, size = 0x4, scoped, tag = 'scoped memory for forward.1']
    #allocation4 [shape = 's32[1]{0}', space=sflag, size = 0x4, scoped, tag = 'scoped memory for forward.1']
    #allocation5 [shape = 'u8[671744]{0}', space=vmem, size = 0xa4000, scoped, tag = 'input window, operand 1, single buffered']
    #allocation6 [shape = 's32[1]{0}', space=sflag, size = 0x4, scoped, tag = 'scoped memory for forward.1']
    #allocation7 [shape = 'u8[20480]{0}', space=vmem, size = 0x5000, scoped, tag = 'input window, operand 2, single buffered']
    #allocation8 [shape = 'u8[16384]{0}', space=vmem, size = 0x4000, scoped, tag = 'output window, operand 0, single buffered']
    #allocation9 [shape = 'u8[512]{0}', space=vmem, size = 0x400, scoped, tag = 'output window, operand 1, single buffered']
    #allocation10 [shape = 's32[1]{0}', space=sflag, size = 0x4, scoped, tag = 'scoped memory for forward.1']
    %11 = vsyncpa [#allocation3], 0
    %12 = vsyncpa [#allocation6], 0
    %13 = vsyncpa [#allocation4], 0
    %14 = vsyncpa [#allocation10], 0
    // Predicated region
    $region2: #{forward.1} parent=1 // pred_check
      _
    $region3: #{forward.1} parent=1 // pred_check_branch
      %16 = sbr.rel (0) target = $region5
    $region4: #{forward.1} parent=1 // pred_region
      %18 = vsyncadd [#allocation3], 0
      %s19 = sshll.u32 %s0, 4
      %s20 = int_to_ptr.hbm [resolvable:$true] %s19
      %s21 = sshll.u32 [#allocation2], 4
      %s22 = int_to_ptr.vmem [resolvable:$true] %s21
      %27 = dma.hbm_to_vmem [thread:$0]  %s20, 512, %s22, [#allocation3], 128, 128, 8
    $region5: #{forward.1} parent=1 // pred_fallthru
      _
    // Predicated region
    $region6: #{forward.1} parent=1 // pred_check
      _
    $region7: #{forward.1} parent=1 // pred_check_branch
      %29 = sbr.rel (0) target = $region9
    $region8: #{forward.1} parent=1 // pred_region
      %31 = vsyncadd [#allocation6], 0
      %s32 = sshll.u32 %s1, 4
      %s33 = int_to_ptr.hbm [resolvable:$true] %s32
      %s34 = sshll.u32 [#allocation5], 4
      %s35 = int_to_ptr.vmem [resolvable:$true] %s34
      %40 = dma.hbm_to_vmem [thread:$0]  %s33, 20992, %s35, [#allocation6], 128, 128, 8
    $region9: #{forward.1} parent=1 // pred_fallthru
      _
    // Predicated region
    $region10: #{forward.1} parent=1 // pred_check
      _
    $region11: #{forward.1} parent=1 // pred_check_branch
      %42 = sbr.rel (0) target = $region13
    $region12: #{forward.1} parent=1 // pred_region
      %44 = vsyncadd [#allocation6], 0
      %s45 = sshll.u32 %s2, 4
      %s46 = int_to_ptr.hbm [resolvable:$true] %s45
      %s47 = sshll.u32 [#allocation7], 4
      %s48 = int_to_ptr.vmem [resolvable:$true] %s47
      %53 = dma.hbm_to_vmem [thread:$0]  %s46, 640, %s48, [#allocation6], 128, 128, 8
    $region13: #{forward.1} parent=1 // pred_fallthru
      _
    // Predicated region
    $region14: #{forward.1} parent=1 // pred_check
      _
    $region15: #{forward.1} parent=1 // pred_check_branch
      %55 = sbr.rel (0) target = $region17
    $region16: #{forward.1} parent=1 // pred_region
      %57 = dma.done [#allocation3], 512
    $region17: #{forward.1} parent=1 // pred_fallthru
      _
    // Predicated region
    $region18: #{forward.1} parent=1 // pred_check
      _
    $region19: #{forward.1} parent=1 // pred_check_branch
      %59 = sbr.rel (0) target = $region21
    $region20: #{forward.1} parent=1 // pred_region
      %61 = dma.done [#allocation6], 20992
    $region21: #{forward.1} parent=1 // pred_fallthru
      _
    // Predicated region
    $region22: #{forward.1} parent=1 // pred_check
      _
    $region23: #{forward.1} parent=1 // pred_check_branch
      %63 = sbr.rel (0) target = $region25
    $region24: #{forward.1} parent=1 // pred_region
      %65 = dma.done [#allocation6], 640
    $region25: #{forward.1} parent=1 // pred_fallthru
      _
    %v67 = vld [vmem:[#allocation5] sm:$0xff]
    %v68 = vld [vmem:[#allocation5 + $0x8] sm:$0xff]
    %v69 = vld [vmem:[#allocation5 + $0x10] sm:$0xff]
    %v70 = vld [vmem:[#allocation5 + $0x18] sm:$0xff]
    %v71 = vld [vmem:[#allocation5 + $0x20] sm:$0xff]
    %v72 = vld [vmem:[#allocation5 + $0x28] sm:$0xff]
    %v73 = vld [vmem:[#allocation5 + $0x30] sm:$0xff]
    %v74 = vld [vmem:[#allocation5 + $0x38] sm:$0xff]
    %v75 = vld [vmem:[#allocation5 + $0x40] sm:$0xff]
    %v76 = vld [vmem:[#allocation5 + $0x48] sm:$0xff]
    %v77 = vld [vmem:[#allocation5 + $0x50] sm:$0xff]
    %v78 = vld [vmem:[#allocation5 + $0x58] sm:$0xff]
    %v79 = vld [vmem:[#allocation5 + $0x60] sm:$0xff]
    %v80 = vld [vmem:[#allocation5 + $0x68] sm:$0xff]
    %v81 = vld [vmem:[#allocation5 + $0x70] sm:$0xff]
    %v82 = vld [vmem:[#allocation5 + $0x78] sm:$0xff]
    %v83 = vld [vmem:[#allocation5 + $0x80] sm:$0xff]
    %v84 = vld [vmem:[#allocation5 + $0x88] sm:$0xff]
    %v85 = vld [vmem:[#allocation5 + $0x90] sm:$0xff]
    %v86 = vld [vmem:[#allocation5 + $0x98] sm:$0xff]
    %v87 = vld [vmem:[#allocation5 + $0xa0] sm:$0xff]
    %v88 = vld [vmem:[#allocation5 + $0xa8] sm:$0xff]
    %v89 = vld [vmem:[#allocation5 + $0xb0] sm:$0xff]
    %v90 = vld [vmem:[#allocation5 + $0xb8] sm:$0xff]
    %v91 = vld [vmem:[#allocation5 + $0xc0] sm:$0xff]
    %v92 = vld [vmem:[#allocation5 + $0xc8] sm:$0xff]
    %v93 = vld [vmem:[#allocation5 + $0xd0] sm:$0xff]
    %v94 = vld [vmem:[#allocation5 + $0xd8] sm:$0xff]
    %v95 = vld [vmem:[#allocation2] sm:$0xff]
    %v96 = vld [vmem:[#allocation2 + $0x8] sm:$0xff]
    %v97 = vld [vmem:[#allocation2 + $0x10] sm:$0xff]
    %v98 = vld [vmem:[#allocation2 + $0x18] sm:$0xff]
    %v99 = vld [vmem:[#allocation5 + $0xe0] sm:$0xff]
    %v100 = vld [vmem:[#allocation5 + $0xe8] sm:$0xff]
    %v101 = vld [vmem:[#allocation5 + $0xf0] sm:$0xff]
    %v102 = vpack.c.bf16 %v96, %v95
    %v103 = vpack.c.bf16 %v98, %v97
    %v104 = vpack.c.bf16 %v100, %v99
    %v105 = vpack.c.bf16 %v101, %v101
    %v106 = vld [vmem:[#allocation7] sm:$0x1]
    %v107 = vperm.slane %v106, 0
    %vm108 = vcmask 195584
    %v110 = vsel %vm108, %v102, 0
    %v113 = vsel %vm108, %v103, 0
    %vm115 = vcmask 1043456
    %v117 = vsel %vm115, %v105, 0
    %119 = vmatpush.bf16.msra.mxu0 0
    %120 = vmatpush.bf16.msra.mxu0 0
    %121 = vmatpush.bf16.msra.mxu0 0
    %122 = vmatpush.bf16.msra.mxu0 0
    %123 = vmatpush.bf16.msra.mxu0 0
    %124 = vmatpush.bf16.msra.mxu0 0
    %125 = vmatpush.bf16.msra.mxu0 %v117
    %126 = vmatpush.bf16.msra.mxu0 %v104
    %127 = vmatmul.bf16.gmra.mxu0 %v110
    %v128 = vpop.f32.mrf.mxu0
    %v129 = vadd.f32 %v107, %v128
    %v130 = vpop.f32.mrf.mxu0
    %v131 = vadd.f32 %v107, %v130
    %132 = vmatmul.bf16.gmra.mxu0 %v113
    %v133 = vpop.f32.mrf.mxu0
    %v134 = vadd.f32 %v107, %v133
    %v135 = vpop.f32.mrf.mxu0
    %v136 = vadd.f32 %v107, %v135
    %137 = vdwg.mxu0
    %v138 = vpack.c.bf16 %v68, %v67
    %v139 = vpack.c.bf16 %v70, %v69
    %v140 = vpack.c.bf16 %v72, %v71
    %v141 = vpack.c.bf16 %v74, %v73
    %v142 = vpack.c.bf16 %v76, %v75
    %v143 = vpack.c.bf16 %v78, %v77
    %v144 = vpack.c.bf16 %v80, %v79
    %v145 = vpack.c.bf16 %v82, %v81
    %v146 = vpack.c.bf16 %v84, %v83
    %v147 = vpack.c.bf16 %v86, %v85
    %v148 = vpack.c.bf16 %v88, %v87
    %v149 = vpack.c.bf16 %v90, %v89
    %v150 = vpack.c.bf16 %v92, %v91
    %v151 = vpack.c.bf16 %v94, %v93
    %v152 = vpack.c.bf16 %v131, %v129
    %v153 = vpack.c.bf16 %v136, %v134
    %vm154 = vcmask 261120
    %v156 = vsel %vm154, %v138, 0
    %v159 = vsel %vm154, %v139, 0
    %v162 = vsel %vm154, %v140, 0
    %v165 = vsel %vm154, %v141, 0
    %v168 = vsel %vm154, %v142, 0
    %v171 = vsel %vm154, %v143, 0
    %v174 = vsel %vm154, %v144, 0
    %v177 = vsel %vm154, %v145, 0
    %v180 = vsel %vm154, %v146, 0
    %v183 = vsel %vm154, %v147, 0
    %v186 = vsel %vm154, %v148, 0
    %v189 = vsel %vm154, %v149, 0
    %v192 = vsel %vm154, %v150, 0
    %v195 = vsel %vm154, %v151, 0
    %197 = vmatpush.bf16.msra.mxu0 0
    %198 = vmatpush.bf16.msra.mxu0 0
    %199 = vmatpush.bf16.msra.mxu0 0
    %200 = vmatpush.bf16.msra.mxu0 0
    %201 = vmatpush.bf16.msra.mxu0 0
    %202 = vmatpush.bf16.msra.mxu0 0
    %203 = vmatpush.bf16.msra.mxu0 %v153
    %204 = vmatpush.bf16.msra.mxu0 %v152
    %205 = vmatmul.bf16.gmra.mxu0 %v156
    %v206 = vpop.f32.mrf.mxu0
    %v207 = vadd.f32 0.0, %v206
    %v208 = vpop.f32.mrf.mxu0
    %v209 = vadd.f32 0.0, %v208
    %210 = vmatmul.bf16.gmra.mxu0 %v159
    %v211 = vpop.f32.mrf.mxu0
    %v212 = vadd.f32 0.0, %v211
    %v213 = vpop.f32.mrf.mxu0
    %v214 = vadd.f32 0.0, %v213
    %215 = vmatmul.bf16.gmra.mxu0 %v162
    %v216 = vpop.f32.mrf.mxu0
    %v217 = vadd.f32 0.0, %v216
    %v218 = vpop.f32.mrf.mxu0
    %v219 = vadd.f32 0.0, %v218
    %220 = vmatmul.bf16.gmra.mxu0 %v165
    %v221 = vpop.f32.mrf.mxu0
    %v222 = vadd.f32 0.0, %v221
    %v223 = vpop.f32.mrf.mxu0
    %v224 = vadd.f32 0.0, %v223
    %225 = vmatmul.bf16.gmra.mxu0 %v168
    %v226 = vpop.f32.mrf.mxu0
    %v227 = vadd.f32 0.0, %v226
    %v228 = vpop.f32.mrf.mxu0
    %v229 = vadd.f32 0.0, %v228
    %230 = vmatmul.bf16.gmra.mxu0 %v171
    %v231 = vpop.f32.mrf.mxu0
    %v232 = vadd.f32 0.0, %v231
    %v233 = vpop.f32.mrf.mxu0
    %v234 = vadd.f32 0.0, %v233
    %235 = vmatmul.bf16.gmra.mxu0 %v174
    %v236 = vpop.f32.mrf.mxu0
    %v237 = vadd.f32 0.0, %v236
    %v238 = vpop.f32.mrf.mxu0
    %v239 = vadd.f32 0.0, %v238
    %240 = vmatmul.bf16.gmra.mxu0 %v177
    %v241 = vpop.f32.mrf.mxu0
    %v242 = vadd.f32 0.0, %v241
    %v243 = vpop.f32.mrf.mxu0
    %v244 = vadd.f32 0.0, %v243
    %245 = vmatmul.bf16.gmra.mxu0 %v180
    %v246 = vpop.f32.mrf.mxu0
    %v247 = vadd.f32 0.0, %v246
    %v248 = vpop.f32.mrf.mxu0
    %v249 = vadd.f32 0.0, %v248
    %250 = vmatmul.bf16.gmra.mxu0 %v183
    %v251 = vpop.f32.mrf.mxu0
    %v252 = vadd.f32 0.0, %v251
    %v253 = vpop.f32.mrf.mxu0
    %v254 = vadd.f32 0.0, %v253
    %255 = vmatmul.bf16.gmra.mxu0 %v186
    %v256 = vpop.f32.mrf.mxu0
    %v257 = vadd.f32 0.0, %v256
    %v258 = vpop.f32.mrf.mxu0
    %v259 = vadd.f32 0.0, %v258
    %260 = vmatmul.bf16.gmra.mxu0 %v189
    %v261 = vpop.f32.mrf.mxu0
    %v262 = vadd.f32 0.0, %v261
    %v263 = vpop.f32.mrf.mxu0
    %v264 = vadd.f32 0.0, %v263
    %265 = vmatmul.bf16.gmra.mxu0 %v192
    %v266 = vpop.f32.mrf.mxu0
    %v267 = vadd.f32 0.0, %v266
    %v268 = vpop.f32.mrf.mxu0
    %v269 = vadd.f32 0.0, %v268
    %270 = vmatmul.bf16.gmra.mxu0 %v195
    %v271 = vpop.f32.mrf.mxu0
    %v272 = vadd.f32 0.0, %v271
    %v273 = vpop.f32.mrf.mxu0
    %v274 = vadd.f32 0.0, %v273
    %275 = vdwg.mxu0
    %280 = vrot.lane.b32.xlu0 %v217, 32
    %v281 = vpop.permute.xlu0 %280
    %282 = vrot.lane.b32.xlu0 %v219, 32
    %v283 = vpop.permute.xlu0 %282
    %284 = vrot.lane.b32.xlu0 %v222, 32
    %v285 = vpop.permute.xlu0 %284
    %286 = vrot.lane.b32.xlu0 %v224, 32
    %v287 = vpop.permute.xlu0 %286
    %296 = vrot.lane.b32.xlu0 %v227, 64
    %v297 = vpop.permute.xlu0 %296
    %298 = vrot.lane.b32.xlu0 %v229, 64
    %v299 = vpop.permute.xlu0 %298
    %300 = vrot.lane.b32.xlu0 %v232, 64
    %v301 = vpop.permute.xlu0 %300
    %302 = vrot.lane.b32.xlu0 %v234, 64
    %v303 = vpop.permute.xlu0 %302
    %312 = vrot.lane.b32.xlu0 %v237, 96
    %v313 = vpop.permute.xlu0 %312
    %314 = vrot.lane.b32.xlu0 %v239, 96
    %v315 = vpop.permute.xlu0 %314
    %316 = vrot.lane.b32.xlu0 %v242, 96
    %v317 = vpop.permute.xlu0 %316
    %318 = vrot.lane.b32.xlu0 %v244, 96
    %v319 = vpop.permute.xlu0 %318
    %328 = vrot.lane.b32.xlu0 %v257, 32
    %v329 = vpop.permute.xlu0 %328
    %330 = vrot.lane.b32.xlu0 %v259, 32
    %v331 = vpop.permute.xlu0 %330
    %332 = vrot.lane.b32.xlu0 %v262, 32
    %v333 = vpop.permute.xlu0 %332
    %334 = vrot.lane.b32.xlu0 %v264, 32
    %v335 = vpop.permute.xlu0 %334
    %344 = vrot.lane.b32.xlu0 %v267, 64
    %v345 = vpop.permute.xlu0 %344
    %346 = vrot.lane.b32.xlu0 %v269, 64
    %v347 = vpop.permute.xlu0 %346
    %348 = vrot.lane.b32.xlu0 %v272, 64
    %v349 = vpop.permute.xlu0 %348
    %350 = vrot.lane.b32.xlu0 %v274, 64
    %v351 = vpop.permute.xlu0 %350
    %v356 = vsel %vm154, %v207, %v281
    %v357 = vsel %vm154, %v209, %v283
    %v358 = vsel %vm154, %v212, %v285
    %v359 = vsel %vm154, %v214, %v287
    %vm360 = vcmask 523264
    %v361 = vsel %vm360, %v356, %v297
    %v362 = vsel %vm360, %v357, %v299
    %v363 = vsel %vm360, %v358, %v301
    %v364 = vsel %vm360, %v359, %v303
    %vm365 = vcmask 785408
    %v366 = vsel %vm365, %v361, %v313
    %v367 = vsel %vm365, %v362, %v315
    %v368 = vsel %vm365, %v363, %v317
    %v369 = vsel %vm365, %v364, %v319
    %v370 = vsel %vm154, %v247, %v329
    %v371 = vsel %vm154, %v249, %v331
    %v372 = vsel %vm154, %v252, %v333
    %v373 = vsel %vm154, %v254, %v335
    %v374 = vsel %vm360, %v370, %v345
    %v375 = vsel %vm360, %v371, %v347
    %v376 = vsel %vm360, %v372, %v349
    %v377 = vsel %vm360, %v373, %v351
    %v378 = vld [vmem:[#allocation5 + $0xf8] sm:$0xff]
    %v379 = vld [vmem:[#allocation5 + $0x100] sm:$0xff]
    %v380 = vld [vmem:[#allocation5 + $0x108] sm:$0xff]
    %v381 = vld [vmem:[#allocation5 + $0x110] sm:$0xff]
    %v382 = vld [vmem:[#allocation5 + $0x118] sm:$0xff]
    %v383 = vld [vmem:[#allocation5 + $0x120] sm:$0xff]
    %v384 = vld [vmem:[#allocation5 + $0x128] sm:$0xff]
    %v385 = vld [vmem:[#allocation5 + $0x130] sm:$0xff]
    %v386 = vld [vmem:[#allocation5 + $0x138] sm:$0xff]
    %v387 = vld [vmem:[#allocation5 + $0x140] sm:$0xff]
    %v388 = vld [vmem:[#allocation5 + $0x148] sm:$0xff]
    %v389 = vld [vmem:[#allocation5 + $0x150] sm:$0xff]
    %v390 = vld [vmem:[#allocation5 + $0x158] sm:$0xff]
    %v391 = vld [vmem:[#allocation5 + $0x160] sm:$0xff]
    %v392 = vld [vmem:[#allocation5 + $0x168] sm:$0xff]
    %v393 = vld [vmem:[#allocation5 + $0x170] sm:$0xff]
    %v394 = vld [vmem:[#allocation5 + $0x178] sm:$0xff]
    %v395 = vld [vmem:[#allocation5 + $0x180] sm:$0xff]
    %v396 = vld [vmem:[#allocation5 + $0x188] sm:$0xff]
    %v397 = vld [vmem:[#allocation5 + $0x190] sm:$0xff]
    %v398 = vld [vmem:[#allocation5 + $0x198] sm:$0xff]
    %v399 = vld [vmem:[#allocation5 + $0x1a0] sm:$0xff]
    %v400 = vld [vmem:[#allocation5 + $0x1a8] sm:$0xff]
    %v401 = vld [vmem:[#allocation5 + $0x1b0] sm:$0xff]
    %v402 = vld [vmem:[#allocation5 + $0x1b8] sm:$0xff]
    %v403 = vld [vmem:[#allocation5 + $0x1c0] sm:$0xff]
    %v404 = vld [vmem:[#allocation5 + $0x1c8] sm:$0xff]
    %v405 = vld [vmem:[#allocation5 + $0x1d0] sm:$0xff]
    %v406 = vpack.c.bf16 %v367, %v366
    %v407 = vpack.c.bf16 %v375, %v374
    %v408 = vpack.c.bf16 %v369, %v368
    %v409 = vpack.c.bf16 %v377, %v376
    %v410 = vpack.c.bf16 %v379, %v378
    %v411 = vpack.c.bf16 %v381, %v380
    %v412 = vpack.c.bf16 %v383, %v382
    %v413 = vpack.c.bf16 %v385, %v384
    %v414 = vpack.c.bf16 %v387, %v386
    %v415 = vpack.c.bf16 %v389, %v388
    %v416 = vpack.c.bf16 %v391, %v390
    %v417 = vpack.c.bf16 %v393, %v392
    %v418 = vpack.c.bf16 %v395, %v394
    %v419 = vpack.c.bf16 %v397, %v396
    %v420 = vpack.c.bf16 %v399, %v398
    %v421 = vpack.c.bf16 %v401, %v400
    %v422 = vpack.c.bf16 %v403, %v402
    %v423 = vpack.c.bf16 %v405, %v404
    %v424 = vld [vmem:[#allocation7 + $0x1] sm:$0x1]
    %v425 = vperm.slane %v424, 0
    %v427 = vsel %vm365, %v407, 0
    %v430 = vsel %vm365, %v409, 0
    %432 = vmatpush.bf16.msra.mxu0 %v417
    %433 = vmatpush.bf16.msra.mxu0 %v416
    %434 = vmatpush.bf16.msra.mxu0 %v415
    %435 = vmatpush.bf16.msra.mxu0 %v414
    %436 = vmatpush.bf16.msra.mxu0 %v413
    %437 = vmatpush.bf16.msra.mxu0 %v412
    %438 = vmatpush.bf16.msra.mxu0 %v411
    %439 = vmatpush.bf16.msra.mxu0 %v410
    %440 = vmatmul.bf16.gmra.mxu0 %v406
    %v441 = vpop.f32.mrf.mxu0
    %v442 = vadd.f32 %v425, %v441
    %v443 = vpop.f32.mrf.mxu0
    %v444 = vadd.f32 %v425, %v443
    %445 = vmatmul.bf16.gmra.mxu0 %v408
    %v446 = vpop.f32.mrf.mxu0
    %v447 = vadd.f32 %v425, %v446
    %v448 = vpop.f32.mrf.mxu0
    %v449 = vadd.f32 %v425, %v448
    %450 = vdwg.mxu0
    %451 = vmatpush.bf16.msra.mxu0 0
    %452 = vmatpush.bf16.msra.mxu0 0
    %453 = vmatpush.bf16.msra.mxu0 %v423
    %454 = vmatpush.bf16.msra.mxu0 %v422
    %455 = vmatpush.bf16.msra.mxu0 %v421
    %456 = vmatpush.bf16.msra.mxu0 %v420
    %457 = vmatpush.bf16.msra.mxu0 %v419
    %458 = vmatpush.bf16.msra.mxu0 %v418
    %459 = vmatmul.bf16.gmra.mxu0 %v427
    %v460 = vpop.f32.mrf.mxu0
    %v461 = vadd.f32 %v442, %v460
    %v462 = vpop.f32.mrf.mxu0
    %v463 = vadd.f32 %v444, %v462
    %464 = vmatmul.bf16.gmra.mxu0 %v430
    %v465 = vpop.f32.mrf.mxu0
    %v466 = vadd.f32 %v447, %v465
    %v467 = vpop.f32.mrf.mxu0
    %v468 = vadd.f32 %v449, %v467
    %469 = vdwg.mxu0
    %v470 = vsel %vm154, %v461, 0.0
    %471 = vadd.xlane.f32.xlu0 %v470
    %v472 = vpop.xlane.xlu0 %471
    %v473 = vsel %vm154, %v463, 0.0
    %474 = vadd.xlane.f32.xlu0 %v473
    %v475 = vpop.xlane.xlu0 %474
    %v476 = vsel %vm154, %v466, 0.0
    %477 = vadd.xlane.f32.xlu0 %v476
    %v478 = vpop.xlane.xlu0 %477
    %v479 = vsel %vm154, %v468, 0.0
    %480 = vadd.xlane.f32.xlu0 %v479
    %v481 = vpop.xlane.xlu0 %480
    %v482 = vrcp.pop 32.0
    %v483 = vmul.f32 32.0, %v482
    %v484 = vsub.f32 1.0, %v483
    %v485 = vmul.f32 %v482, %v484
    %v486 = vadd.f32 %v482, %v485
    %vm487 = vweird.f32 %v482
    %v488 = vsel %vm487, %v482, %v486
    %v489 = vmul.f32 %v472, %v488
    %v490 = vmul.f32 %v475, %v488
    %v491 = vmul.f32 %v478, %v488
    %v492 = vmul.f32 %v481, %v488
    %v493 = vsub.f32 %v461, %v489
    %v494 = vsub.f32 %v463, %v490
    %v495 = vsub.f32 %v466, %v491
    %v496 = vsub.f32 %v468, %v492
    %v497 = vmul.f32 %v493, %v493
    %v498 = vmul.f32 %v494, %v494
    %v499 = vmul.f32 %v495, %v495
    %v500 = vmul.f32 %v496, %v496
    %v501 = vsel %vm154, %v497, 0.0
    %502 = vadd.xlane.f32.xlu0 %v501
    %v503 = vpop.xlane.xlu0 %502
    %v504 = vsel %vm154, %v498, 0.0
    %505 = vadd.xlane.f32.xlu0 %v504
    %v506 = vpop.xlane.xlu0 %505
    %v507 = vsel %vm154, %v499, 0.0
    %508 = vadd.xlane.f32.xlu0 %v507
    %v509 = vpop.xlane.xlu0 %508
    %v510 = vsel %vm154, %v500, 0.0
    %511 = vadd.xlane.f32.xlu0 %v510
    %v512 = vpop.xlane.xlu0 %511
    %v513 = vmul.f32 %v503, %v488
    %v514 = vmul.f32 %v506, %v488
    %v515 = vmul.f32 %v509, %v488
    %v516 = vmul.f32 %v512, %v488
    %v517 = vadd.f32 %v513, 1e-06
    %v518 = vadd.f32 %v514, 1e-06
    %v519 = vadd.f32 %v515, 1e-06
    %v520 = vadd.f32 %v516, 1e-06
    %v521 = vrsqrt.pop %v517
    %v522 = vmul.f32 %v521, %v517
    %v523 = vmul.f32 %v522, %v521
    %v524 = vmul.f32 0.5, %v523
    %v525 = vsub.f32 1.5, %v524
    %v526 = vmul.f32 %v521, %v525
    %vm527 = vweird.f32 %v517
    %vm528 = vweird.f32 %v521
    %vm529 = vmor %vm527, %vm528
    %v530 = vsel %vm529, %v521, %v526
    %v531 = vrsqrt.pop %v518
    %v532 = vmul.f32 %v531, %v518
    %v533 = vmul.f32 %v532, %v531
    %v534 = vmul.f32 0.5, %v533
    %v535 = vsub.f32 1.5, %v534
    %v536 = vmul.f32 %v531, %v535
    %vm537 = vweird.f32 %v518
    %vm538 = vweird.f32 %v531
    %vm539 = vmor %vm537, %vm538
    %v540 = vsel %vm539, %v531, %v536
    %v541 = vrsqrt.pop %v519
    %v542 = vmul.f32 %v541, %v519
    %v543 = vmul.f32 %v542, %v541
    %v544 = vmul.f32 0.5, %v543
    %v545 = vsub.f32 1.5, %v544
    %v546 = vmul.f32 %v541, %v545
    %vm547 = vweird.f32 %v519
    %vm548 = vweird.f32 %v541
    %vm549 = vmor %vm547, %vm548
    %v550 = vsel %vm549, %v541, %v546
    %v551 = vrsqrt.pop %v520
    %v552 = vmul.f32 %v551, %v520
    %v553 = vmul.f32 %v552, %v551
    %v554 = vmul.f32 0.5, %v553
    %v555 = vsub.f32 1.5, %v554
    %v556 = vmul.f32 %v551, %v555
    %vm557 = vweird.f32 %v520
    %vm558 = vweird.f32 %v551
    %vm559 = vmor %vm557, %vm558
    %v560 = vsel %vm559, %v551, %v556
    %v561 = vmul.f32 %v493, %v530
    %v562 = vmul.f32 %v494, %v540
    %v563 = vmul.f32 %v495, %v550
    %v564 = vmul.f32 %v496, %v560
    %v565 = vld [vmem:[#allocation7 + $0x2] sm:$0x1]
    %v566 = vperm.slane %v565, 0
    %v567 = vmul.f32 %v561, %v566
    %v568 = vmul.f32 %v562, %v566
    %v569 = vmul.f32 %v563, %v566
    %v570 = vmul.f32 %v564, %v566
    %v571 = vld [vmem:[#allocation7 + $0x3] sm:$0x1]
    %v572 = vperm.slane %v571, 0
    %v573 = vadd.f32 %v567, %v572
    %v574 = vadd.f32 %v568, %v572
    %v575 = vadd.f32 %v569, %v572
    %v576 = vadd.f32 %v570, %v572
    %v577 = vpack.c.bf16 %v574, %v573
    %v578 = vpack.c.bf16 %v576, %v575
    %579 = vmatpush.bf16.msra.mxu0 0
    %580 = vmatpush.bf16.msra.mxu0 0
    %581 = vmatpush.bf16.msra.mxu0 0
    %582 = vmatpush.bf16.msra.mxu0 0
    %583 = vmatpush.bf16.msra.mxu0 0
    %584 = vmatpush.bf16.msra.mxu0 0
    %585 = vmatpush.bf16.msra.mxu0 %v578
    %586 = vmatpush.bf16.msra.mxu0 %v577
    %587 = vmatmul.bf16.gmra.mxu0 %v156
    %v588 = vpop.f32.mrf.mxu0
    %v589 = vadd.f32 0.0, %v588
    %v590 = vpop.f32.mrf.mxu0
    %v591 = vadd.f32 0.0, %v590
    %592 = vmatmul.bf16.gmra.mxu0 %v159
    %v593 = vpop.f32.mrf.mxu0
    %v594 = vadd.f32 0.0, %v593
    %v595 = vpop.f32.mrf.mxu0
    %v596 = vadd.f32 0.0, %v595
    %597 = vmatmul.bf16.gmra.mxu0 %v162
    %v598 = vpop.f32.mrf.mxu0
    %v599 = vadd.f32 0.0, %v598
    %v600 = vpop.f32.mrf.mxu0
    %v601 = vadd.f32 0.0, %v600
    %602 = vmatmul.bf16.gmra.mxu0 %v165
    %v603 = vpop.f32.mrf.mxu0
    %v604 = vadd.f32 0.0, %v603
    %v605 = vpop.f32.mrf.mxu0
    %v606 = vadd.f32 0.0, %v605
    %607 = vmatmul.bf16.gmra.mxu0 %v168
    %v608 = vpop.f32.mrf.mxu0
    %v609 = vadd.f32 0.0, %v608
    %v610 = vpop.f32.mrf.mxu0
    %v611 = vadd.f32 0.0, %v610
    %612 = vmatmul.bf16.gmra.mxu0 %v171
    %v613 = vpop.f32.mrf.mxu0
    %v614 = vadd.f32 0.0, %v613
    %v615 = vpop.f32.mrf.mxu0
    %v616 = vadd.f32 0.0, %v615
    %617 = vmatmul.bf16.gmra.mxu0 %v174
    %v618 = vpop.f32.mrf.mxu0
    %v619 = vadd.f32 0.0, %v618
    %v620 = vpop.f32.mrf.mxu0
    %v621 = vadd.f32 0.0, %v620
    %622 = vmatmul.bf16.gmra.mxu0 %v177
    %v623 = vpop.f32.mrf.mxu0
    %v624 = vadd.f32 0.0, %v623
    %v625 = vpop.f32.mrf.mxu0
    %v626 = vadd.f32 0.0, %v625
    %627 = vmatmul.bf16.gmra.mxu0 %v180
    %v628 = vpop.f32.mrf.mxu0
    %v629 = vadd.f32 0.0, %v628
    %v630 = vpop.f32.mrf.mxu0
    %v631 = vadd.f32 0.0, %v630
    %632 = vmatmul.bf16.gmra.mxu0 %v183
    %v633 = vpop.f32.mrf.mxu0
    %v634 = vadd.f32 0.0, %v633
    %v635 = vpop.f32.mrf.mxu0
    %v636 = vadd.f32 0.0, %v635
    %637 = vmatmul.bf16.gmra.mxu0 %v186
    %v638 = vpop.f32.mrf.mxu0
    %v639 = vadd.f32 0.0, %v638
    %v640 = vpop.f32.mrf.mxu0
    %v641 = vadd.f32 0.0, %v640
    %642 = vmatmul.bf16.gmra.mxu0 %v189
    %v643 = vpop.f32.mrf.mxu0
    %v644 = vadd.f32 0.0, %v643
    %v645 = vpop.f32.mrf.mxu0
    %v646 = vadd.f32 0.0, %v645
    %647 = vmatmul.bf16.gmra.mxu0 %v192
    %v648 = vpop.f32.mrf.mxu0
    %v649 = vadd.f32 0.0, %v648
    %v650 = vpop.f32.mrf.mxu0
    %v651 = vadd.f32 0.0, %v650
    %652 = vmatmul.bf16.gmra.mxu0 %v195
    %v653 = vpop.f32.mrf.mxu0
    %v654 = vadd.f32 0.0, %v653
    %v655 = vpop.f32.mrf.mxu0
    %v656 = vadd.f32 0.0, %v655
    %657 = vdwg.mxu0
    %v658 = vld [vmem:[#allocation5 + $0x1d8] sm:$0x7f]
    %v659 = vld [vmem:[#allocation7 + $0x6] sm:$0x1]
    %v660 = vperm.slane %v658, 0
    %v661 = vmul.f32 %v589, %v660
    %v662 = vmul.f32 %v591, %v660
    %v663 = vmul.f32 %v594, %v660
    %v664 = vmul.f32 %v596, %v660
    %v665 = vperm.slane %v659, 0
    %v666 = vadd.f32 %v665, %v661
    %v667 = vadd.f32 %v665, %v662
    %v668 = vadd.f32 %v665, %v663
    %v669 = vadd.f32 %v665, %v664
    %v670 = vperm.slane %v658, 1
    %v671 = vmul.f32 %v599, %v670
    %v672 = vmul.f32 %v601, %v670
    %v673 = vmul.f32 %v604, %v670
    %v674 = vmul.f32 %v606, %v670
    %v675 = vadd.f32 %v666, %v671
    %v676 = vadd.f32 %v667, %v672
    %v677 = vadd.f32 %v668, %v673
    %v678 = vadd.f32 %v669, %v674
    %v679 = vperm.slane %v658, 2
    %v680 = vmul.f32 %v609, %v679
    %v681 = vmul.f32 %v611, %v679
    %v682 = vmul.f32 %v614, %v679
    %v683 = vmul.f32 %v616, %v679
    %v684 = vadd.f32 %v675, %v680
    %v685 = vadd.f32 %v676, %v681
    %v686 = vadd.f32 %v677, %v682
    %v687 = vadd.f32 %v678, %v683
    %v688 = vperm.slane %v658, 3
    %v689 = vmul.f32 %v619, %v688
    %v690 = vmul.f32 %v621, %v688
    %v691 = vmul.f32 %v624, %v688
    %v692 = vmul.f32 %v626, %v688
    %v693 = vadd.f32 %v684, %v689
    %v694 = vadd.f32 %v685, %v690
    %v695 = vadd.f32 %v686, %v691
    %v696 = vadd.f32 %v687, %v692
    %v697 = vperm.slane %v658, 4
    %v698 = vmul.f32 %v629, %v697
    %v699 = vmul.f32 %v631, %v697
    %v700 = vmul.f32 %v634, %v697
    %v701 = vmul.f32 %v636, %v697
    %v702 = vadd.f32 %v693, %v698
    %v703 = vadd.f32 %v694, %v699
    %v704 = vadd.f32 %v695, %v700
    %v705 = vadd.f32 %v696, %v701
    %v706 = vperm.slane %v658, 5
    %v707 = vmul.f32 %v639, %v706
    %v708 = vmul.f32 %v641, %v706
    %v709 = vmul.f32 %v644, %v706
    %v710 = vmul.f32 %v646, %v706
    %v711 = vadd.f32 %v702, %v707
    %v712 = vadd.f32 %v703, %v708
    %v713 = vadd.f32 %v704, %v709
    %v714 = vadd.f32 %v705, %v710
    %v715 = vperm.slane %v658, 6
    %v716 = vmul.f32 %v649, %v715
    %v717 = vmul.f32 %v651, %v715
    %v718 = vmul.f32 %v654, %v715
    %v719 = vmul.f32 %v656, %v715
    %v720 = vadd.f32 %v711, %v716
    %v721 = vadd.f32 %v712, %v717
    %v722 = vadd.f32 %v713, %v718
    %v723 = vadd.f32 %v714, %v719
    %v724 = vsel %vm154, %v720, 0.0
    %725 = vadd.xlane.f32.xlu0 %v724
    %v726 = vpop.xlane.xlu0 %725
    %v727 = vsel %vm154, %v721, 0.0
    %728 = vadd.xlane.f32.xlu0 %v727
    %v729 = vpop.xlane.xlu0 %728
    %v730 = vsel %vm154, %v722, 0.0
    %731 = vadd.xlane.f32.xlu0 %v730
    %v732 = vpop.xlane.xlu0 %731
    %v733 = vsel %vm154, %v723, 0.0
    %734 = vadd.xlane.f32.xlu0 %v733
    %v735 = vpop.xlane.xlu0 %734
    %v736 = vmul.f32 %v726, %v488
    %v737 = vmul.f32 %v729, %v488
    %v738 = vmul.f32 %v732, %v488
    %v739 = vmul.f32 %v735, %v488
    %v740 = vsub.f32 %v720, %v736
    %v741 = vsub.f32 %v721, %v737
    %v742 = vsub.f32 %v722, %v738
    %v743 = vsub.f32 %v723, %v739
    %v744 = vmul.f32 %v740, %v740
    %v745 = vmul.f32 %v741, %v741
    %v746 = vmul.f32 %v742, %v742
    %v747 = vmul.f32 %v743, %v743
    %v748 = vsel %vm154, %v744, 0.0
    %749 = vadd.xlane.f32.xlu0 %v748
    %v750 = vpop.xlane.xlu0 %749
    %v751 = vsel %vm154, %v745, 0.0
    %752 = vadd.xlane.f32.xlu0 %v751
    %v753 = vpop.xlane.xlu0 %752
    %v754 = vsel %vm154, %v746, 0.0
    %755 = vadd.xlane.f32.xlu0 %v754
    %v756 = vpop.xlane.xlu0 %755
    %v757 = vsel %vm154, %v747, 0.0
    %758 = vadd.xlane.f32.xlu0 %v757
    %v759 = vpop.xlane.xlu0 %758
    %v760 = vmul.f32 %v750, %v488
    %v761 = vmul.f32 %v753, %v488
    %v762 = vmul.f32 %v756, %v488
    %v763 = vmul.f32 %v759, %v488
    %v764 = vadd.f32 %v760, 1e-06
    %v765 = vadd.f32 %v761, 1e-06
    %v766 = vadd.f32 %v762, 1e-06
    %v767 = vadd.f32 %v763, 1e-06
    %v768 = vrsqrt.pop %v764
    %v769 = vmul.f32 %v768, %v764
    %v770 = vmul.f32 %v769, %v768
    %v771 = vmul.f32 0.5, %v770
    %v772 = vsub.f32 1.5, %v771
    %v773 = vmul.f32 %v768, %v772
    %vm774 = vweird.f32 %v764
    %vm775 = vweird.f32 %v768
    %vm776 = vmor %vm774, %vm775
    %v777 = vsel %vm776, %v768, %v773
    %v778 = vrsqrt.pop %v765
    %v779 = vmul.f32 %v778, %v765
    %v780 = vmul.f32 %v779, %v778
    %v781 = vmul.f32 0.5, %v780
    %v782 = vsub.f32 1.5, %v781
    %v783 = vmul.f32 %v778, %v782
    %vm784 = vweird.f32 %v765
    %vm785 = vweird.f32 %v778
    %vm786 = vmor %vm784, %vm785
    %v787 = vsel %vm786, %v778, %v783
    %v788 = vrsqrt.pop %v766
    %v789 = vmul.f32 %v788, %v766
    %v790 = vmul.f32 %v789, %v788
    %v791 = vmul.f32 0.5, %v790
    %v792 = vsub.f32 1.5, %v791
    %v793 = vmul.f32 %v788, %v792
    %vm794 = vweird.f32 %v766
    %vm795 = vweird.f32 %v788
    %vm796 = vmor %vm794, %vm795
    %v797 = vsel %vm796, %v788, %v793
    %v798 = vrsqrt.pop %v767
    %v799 = vmul.f32 %v798, %v767
    %v800 = vmul.f32 %v799, %v798
    %v801 = vmul.f32 0.5, %v800
    %v802 = vsub.f32 1.5, %v801
    %v803 = vmul.f32 %v798, %v802
    %vm804 = vweird.f32 %v767
    %vm805 = vweird.f32 %v798
    %vm806 = vmor %vm804, %vm805
    %v807 = vsel %vm806, %v798, %v803
    %v808 = vmul.f32 %v740, %v777
    %v809 = vmul.f32 %v741, %v787
    %v810 = vmul.f32 %v742, %v797
    %v811 = vmul.f32 %v743, %v807
    %v812 = vld [vmem:[#allocation7 + $0x7] sm:$0x1]
    %v813 = vperm.slane %v812, 0
    %v814 = vmul.f32 %v808, %v813
    %v815 = vmul.f32 %v809, %v813
    %v816 = vmul.f32 %v810, %v813
    %v817 = vmul.f32 %v811, %v813
    %v818 = vld [vmem:[#allocation7 + $0x8] sm:$0x1]
    %v819 = vperm.slane %v818, 0
    %v820 = vadd.f32 %v814, %v819
    %v821 = vadd.f32 %v815, %v819
    %v822 = vadd.f32 %v816, %v819
    %v823 = vadd.f32 %v817, %v819
    %v824 = vld [vmem:[#allocation5 + $0x1e0] sm:$0xff]
    %v825 = vld [vmem:[#allocation5 + $0x1e8] sm:$0xff]
    %v826 = vld [vmem:[#allocation5 + $0x1f0] sm:$0xff]
    %v827 = vld [vmem:[#allocation5 + $0x1f8] sm:$0xff]
    %v828 = vpack.c.bf16 %v821, %v820
    %v829 = vpack.c.bf16 %v823, %v822
    %v830 = vpack.c.bf16 %v825, %v824
    %v831 = vpack.c.bf16 %v827, %v826
    %v832 = vld [vmem:[#allocation7 + $0x9] sm:$0x1]
    %v833 = vperm.slane %v832, 0
    %v835 = vsel %vm154, %v828, 0
    %v838 = vsel %vm154, %v829, 0
    %840 = vmatpush.bf16.msra.mxu0 0
    %841 = vmatpush.bf16.msra.mxu0 0
    %842 = vmatpush.bf16.msra.mxu0 0
    %843 = vmatpush.bf16.msra.mxu0 0
    %844 = vmatpush.bf16.msra.mxu0 0
    %845 = vmatpush.bf16.msra.mxu0 0
    %846 = vmatpush.bf16.msra.mxu0 %v831
    %847 = vmatpush.bf16.msra.mxu0 %v830
    %848 = vmatmul.bf16.gmra.mxu0 %v835
    %v849 = vpop.f32.mrf.mxu0
    %v850 = vadd.f32 %v833, %v849
    %v851 = vpop.f32.mrf.mxu0
    %v852 = vadd.f32 %v833, %v851
    %853 = vmatmul.bf16.gmra.mxu0 %v838
    %v854 = vpop.f32.mrf.mxu0
    %v855 = vadd.f32 %v833, %v854
    %v856 = vpop.f32.mrf.mxu0
    %v857 = vadd.f32 %v833, %v856
    %858 = vdwg.mxu0
    %v859 = vmul.f32 %v850, %v850
    %v860 = vmul.f32 %v852, %v852
    %v861 = vmul.f32 %v855, %v855
    %v862 = vmul.f32 %v857, %v857
    %v863 = vmul.f32 %v850, %v859
    %v864 = vmul.f32 %v852, %v860
    %v865 = vmul.f32 %v855, %v861
    %v866 = vmul.f32 %v857, %v862
    %v867 = vmul.f32 %v863, 0.044715
    %v868 = vmul.f32 %v864, 0.044715
    %v869 = vmul.f32 %v865, 0.044715
    %v870 = vmul.f32 %v866, 0.044715
    %v871 = vadd.f32 %v850, %v867
    %v872 = vadd.f32 %v852, %v868
    %v873 = vadd.f32 %v855, %v869
    %v874 = vadd.f32 %v857, %v870
    %v875 = vmul.f32 %v871, 0.7978846
    %v876 = vmul.f32 %v872, 0.7978846
    %v877 = vmul.f32 %v873, 0.7978846
    %v878 = vmul.f32 %v874, 0.7978846
    %v879 = vtanh.pop %v875
    %v880 = vtanh.pop %v876
    %v881 = vtanh.pop %v877
    %v882 = vtanh.pop %v878
    %v883 = vadd.f32 %v879, 1.0
    %v884 = vadd.f32 %v880, 1.0
    %v885 = vadd.f32 %v881, 1.0
    %v886 = vadd.f32 %v882, 1.0
    %v887 = vmul.f32 %v883, 0.5
    %v888 = vmul.f32 %v884, 0.5
    %v889 = vmul.f32 %v885, 0.5
    %v890 = vmul.f32 %v886, 0.5
    %v891 = vmul.f32 %v850, %v887
    %v892 = vmul.f32 %v852, %v888
    %v893 = vmul.f32 %v855, %v889
    %v894 = vmul.f32 %v857, %v890
    %v895 = vld [vmem:[#allocation7 + $0xb] sm:$0x1]
    %v896 = vld [vmem:[#allocation5 + $0x200] sm:$0xff]
    %v897 = vld [vmem:[#allocation5 + $0x208] sm:$0xff]
    %v898 = vld [vmem:[#allocation5 + $0x210] sm:$0xff]
    %v899 = vld [vmem:[#allocation5 + $0x218] sm:$0xff]
    %v900 = vld [vmem:[#allocation5 + $0x220] sm:$0xff]
    %v901 = vld [vmem:[#allocation5 + $0x228] sm:$0xff]
    %v902 = vld [vmem:[#allocation5 + $0x230] sm:$0xff]
    %v903 = vld [vmem:[#allocation5 + $0x238] sm:$0xff]
    %v904 = vpack.c.bf16 %v892, %v891
    %v905 = vpack.c.bf16 %v894, %v893
    %v906 = vpack.c.bf16 %v897, %v896
    %v907 = vpack.c.bf16 %v899, %v898
    %v908 = vpack.c.bf16 %v901, %v900
    %v909 = vpack.c.bf16 %v903, %v902
    %v910 = vld [vmem:[#allocation7 + $0xa] sm:$0x1]
    %v911 = vperm.slane %v910, 0
    %v913 = vsel %vm360, %v904, 0
    %v916 = vsel %vm360, %v905, 0
    %918 = vmatpush.bf16.msra.mxu0 0
    %919 = vmatpush.bf16.msra.mxu0 0
    %920 = vmatpush.bf16.msra.mxu0 0
    %921 = vmatpush.bf16.msra.mxu0 0
    %922 = vmatpush.bf16.msra.mxu0 %v909
    %923 = vmatpush.bf16.msra.mxu0 %v908
    %924 = vmatpush.bf16.msra.mxu0 %v907
    %925 = vmatpush.bf16.msra.mxu0 %v906
    %926 = vmatmul.bf16.gmra.mxu0 %v913
    %v927 = vpop.f32.mrf.mxu0
    %v928 = vadd.f32 %v911, %v927
    %v929 = vpop.f32.mrf.mxu0
    %v930 = vadd.f32 %v911, %v929
    %931 = vmatmul.bf16.gmra.mxu0 %v916
    %v932 = vpop.f32.mrf.mxu0
    %v933 = vadd.f32 %v911, %v932
    %v934 = vpop.f32.mrf.mxu0
    %v935 = vadd.f32 %v911, %v934
    %936 = vdwg.mxu0
    %v937 = vperm.slane %v895, 0
    %v938 = vmul.f32 %v937, %v928
    %v939 = vmul.f32 %v937, %v930
    %v940 = vmul.f32 %v937, %v933
    %v941 = vmul.f32 %v937, %v935
    %v942 = vadd.f32 %v573, %v938
    %v943 = vadd.f32 %v574, %v939
    %v944 = vadd.f32 %v575, %v940
    %v945 = vadd.f32 %v576, %v941
    %v946 = vpack.c.bf16 %v943, %v942
    %v947 = vpack.c.bf16 %v945, %v944
    %948 = vmatpush.bf16.msra.mxu0 0
    %949 = vmatpush.bf16.msra.mxu0 0
    %950 = vmatpush.bf16.msra.mxu0 0
    %951 = vmatpush.bf16.msra.mxu0 0
    %952 = vmatpush.bf16.msra.mxu0 0
    %953 = vmatpush.bf16.msra.mxu0 0
    %954 = vmatpush.bf16.msra.mxu0 %v947
    %955 = vmatpush.bf16.msra.mxu0 %v946
    %956 = vmatmul.bf16.gmra.mxu0 %v156
    %v957 = vpop.f32.mrf.mxu0
    %v958 = vadd.f32 0.0, %v957
    %v959 = vpop.f32.mrf.mxu0
    %v960 = vadd.f32 0.0, %v959
    %961 = vmatmul.bf16.gmra.mxu0 %v159
    %v962 = vpop.f32.mrf.mxu0
    %v963 = vadd.f32 0.0, %v962
    %v964 = vpop.f32.mrf.mxu0
    %v965 = vadd.f32 0.0, %v964
    %966 = vmatmul.bf16.gmra.mxu0 %v162
    %v967 = vpop.f32.mrf.mxu0
    %v968 = vadd.f32 0.0, %v967
    %v969 = vpop.f32.mrf.mxu0
    %v970 = vadd.f32 0.0, %v969
    %971 = vmatmul.bf16.gmra.mxu0 %v165
    %v972 = vpop.f32.mrf.mxu0
    %v973 = vadd.f32 0.0, %v972
    %v974 = vpop.f32.mrf.mxu0
    %v975 = vadd.f32 0.0, %v974
    %976 = vmatmul.bf16.gmra.mxu0 %v168
    %v977 = vpop.f32.mrf.mxu0
    %v978 = vadd.f32 0.0, %v977
    %v979 = vpop.f32.mrf.mxu0
    %v980 = vadd.f32 0.0, %v979
    %981 = vmatmul.bf16.gmra.mxu0 %v171
    %v982 = vpop.f32.mrf.mxu0
    %v983 = vadd.f32 0.0, %v982
    %v984 = vpop.f32.mrf.mxu0
    %v985 = vadd.f32 0.0, %v984
    %986 = vmatmul.bf16.gmra.mxu0 %v174
    %v987 = vpop.f32.mrf.mxu0
    %v988 = vadd.f32 0.0, %v987
    %v989 = vpop.f32.mrf.mxu0
    %v990 = vadd.f32 0.0, %v989
    %991 = vmatmul.bf16.gmra.mxu0 %v177
    %v992 = vpop.f32.mrf.mxu0
    %v993 = vadd.f32 0.0, %v992
    %v994 = vpop.f32.mrf.mxu0
    %v995 = vadd.f32 0.0, %v994
    %996 = vmatmul.bf16.gmra.mxu0 %v180
    %v997 = vpop.f32.mrf.mxu0
    %v998 = vadd.f32 0.0, %v997
    %v999 = vpop.f32.mrf.mxu0
    %v1000 = vadd.f32 0.0, %v999
    %1001 = vmatmul.bf16.gmra.mxu0 %v183
    %v1002 = vpop.f32.mrf.mxu0
    %v1003 = vadd.f32 0.0, %v1002
    %v1004 = vpop.f32.mrf.mxu0
    %v1005 = vadd.f32 0.0, %v1004
    %1006 = vmatmul.bf16.gmra.mxu0 %v186
    %v1007 = vpop.f32.mrf.mxu0
    %v1008 = vadd.f32 0.0, %v1007
    %v1009 = vpop.f32.mrf.mxu0
    %v1010 = vadd.f32 0.0, %v1009
    %1011 = vmatmul.bf16.gmra.mxu0 %v189
    %v1012 = vpop.f32.mrf.mxu0
    %v1013 = vadd.f32 0.0, %v1012
    %v1014 = vpop.f32.mrf.mxu0
    %v1015 = vadd.f32 0.0, %v1014
    %1016 = vmatmul.bf16.gmra.mxu0 %v192
    %v1017 = vpop.f32.mrf.mxu0
    %v1018 = vadd.f32 0.0, %v1017
    %v1019 = vpop.f32.mrf.mxu0
    %v1020 = vadd.f32 0.0, %v1019
    %1021 = vmatmul.bf16.gmra.mxu0 %v195
    %v1022 = vpop.f32.mrf.mxu0
    %v1023 = vadd.f32 0.0, %v1022
    %v1024 = vpop.f32.mrf.mxu0
    %v1025 = vadd.f32 0.0, %v1024
    %1026 = vdwg.mxu0
    %v1027 = vld [vmem:[#allocation5 + $0x240] sm:$0x7f]
    %v1028 = vld [vmem:[#allocation7 + $0xc] sm:$0x1]
    %v1029 = vperm.slane %v1027, 0
    %v1030 = vmul.f32 %v958, %v1029
    %v1031 = vmul.f32 %v960, %v1029
    %v1032 = vmul.f32 %v963, %v1029
    %v1033 = vmul.f32 %v965, %v1029
    %v1034 = vperm.slane %v1028, 0
    %v1035 = vadd.f32 %v1034, %v1030
    %v1036 = vadd.f32 %v1034, %v1031
    %v1037 = vadd.f32 %v1034, %v1032
    %v1038 = vadd.f32 %v1034, %v1033
    %v1039 = vperm.slane %v1027, 1
    %v1040 = vmul.f32 %v968, %v1039
    %v1041 = vmul.f32 %v970, %v1039
    %v1042 = vmul.f32 %v973, %v1039
    %v1043 = vmul.f32 %v975, %v1039
    %v1044 = vadd.f32 %v1035, %v1040
    %v1045 = vadd.f32 %v1036, %v1041
    %v1046 = vadd.f32 %v1037, %v1042
    %v1047 = vadd.f32 %v1038, %v1043
    %v1048 = vperm.slane %v1027, 2
    %v1049 = vmul.f32 %v978, %v1048
    %v1050 = vmul.f32 %v980, %v1048
    %v1051 = vmul.f32 %v983, %v1048
    %v1052 = vmul.f32 %v985, %v1048
    %v1053 = vadd.f32 %v1044, %v1049
    %v1054 = vadd.f32 %v1045, %v1050
    %v1055 = vadd.f32 %v1046, %v1051
    %v1056 = vadd.f32 %v1047, %v1052
    %v1057 = vperm.slane %v1027, 3
    %v1058 = vmul.f32 %v988, %v1057
    %v1059 = vmul.f32 %v990, %v1057
    %v1060 = vmul.f32 %v993, %v1057
    %v1061 = vmul.f32 %v995, %v1057
    %v1062 = vadd.f32 %v1053, %v1058
    %v1063 = vadd.f32 %v1054, %v1059
    %v1064 = vadd.f32 %v1055, %v1060
    %v1065 = vadd.f32 %v1056, %v1061
    %v1066 = vperm.slane %v1027, 4
    %v1067 = vmul.f32 %v998, %v1066
    %v1068 = vmul.f32 %v1000, %v1066
    %v1069 = vmul.f32 %v1003, %v1066
    %v1070 = vmul.f32 %v1005, %v1066
    %v1071 = vadd.f32 %v1062, %v1067
    %v1072 = vadd.f32 %v1063, %v1068
    %v1073 = vadd.f32 %v1064, %v1069
    %v1074 = vadd.f32 %v1065, %v1070
    %v1075 = vperm.slane %v1027, 5
    %v1076 = vmul.f32 %v1008, %v1075
    %v1077 = vmul.f32 %v1010, %v1075
    %v1078 = vmul.f32 %v1013, %v1075
    %v1079 = vmul.f32 %v1015, %v1075
    %v1080 = vadd.f32 %v1071, %v1076
    %v1081 = vadd.f32 %v1072, %v1077
    %v1082 = vadd.f32 %v1073, %v1078
    %v1083 = vadd.f32 %v1074, %v1079
    %v1084 = vperm.slane %v1027, 6
    %v1085 = vmul.f32 %v1018, %v1084
    %v1086 = vmul.f32 %v1020, %v1084
    %v1087 = vmul.f32 %v1023, %v1084
    %v1088 = vmul.f32 %v1025, %v1084
    %v1089 = vadd.f32 %v1080, %v1085
    %v1090 = vadd.f32 %v1081, %v1086
    %v1091 = vadd.f32 %v1082, %v1087
    %v1092 = vadd.f32 %v1083, %v1088
    %v1093 = vsel %vm154, %v1089, 0.0
    %1094 = vadd.xlane.f32.xlu0 %v1093
    %v1095 = vpop.xlane.xlu0 %1094
    %v1096 = vsel %vm154, %v1090, 0.0
    %1097 = vadd.xlane.f32.xlu0 %v1096
    %v1098 = vpop.xlane.xlu0 %1097
    %v1099 = vsel %vm154, %v1091, 0.0
    %1100 = vadd.xlane.f32.xlu0 %v1099
    %v1101 = vpop.xlane.xlu0 %1100
    %v1102 = vsel %vm154, %v1092, 0.0
    %1103 = vadd.xlane.f32.xlu0 %v1102
    %v1104 = vpop.xlane.xlu0 %1103
    %v1105 = vmul.f32 %v1095, %v488
    %v1106 = vmul.f32 %v1098, %v488
    %v1107 = vmul.f32 %v1101, %v488
    %v1108 = vmul.f32 %v1104, %v488
    %v1109 = vsub.f32 %v1089, %v1105
    %v1110 = vsub.f32 %v1090, %v1106
    %v1111 = vsub.f32 %v1091, %v1107
    %v1112 = vsub.f32 %v1092, %v1108
    %v1113 = vmul.f32 %v1109, %v1109
    %v1114 = vmul.f32 %v1110, %v1110
    %v1115 = vmul.f32 %v1111, %v1111
    %v1116 = vmul.f32 %v1112, %v1112
    %v1117 = vsel %vm154, %v1113, 0.0
    %1118 = vadd.xlane.f32.xlu0 %v1117
    %v1119 = vpop.xlane.xlu0 %1118
    %v1120 = vsel %vm154, %v1114, 0.0
    %1121 = vadd.xlane.f32.xlu0 %v1120
    %v1122 = vpop.xlane.xlu0 %1121
    %v1123 = vsel %vm154, %v1115, 0.0
    %1124 = vadd.xlane.f32.xlu0 %v1123
    %v1125 = vpop.xlane.xlu0 %1124
    %v1126 = vsel %vm154, %v1116, 0.0
    %1127 = vadd.xlane.f32.xlu0 %v1126
    %v1128 = vpop.xlane.xlu0 %1127
    %v1129 = vmul.f32 %v1119, %v488
    %v1130 = vmul.f32 %v1122, %v488
    %v1131 = vmul.f32 %v1125, %v488
    %v1132 = vmul.f32 %v1128, %v488
    %v1133 = vadd.f32 %v1129, 1e-06
    %v1134 = vadd.f32 %v1130, 1e-06
    %v1135 = vadd.f32 %v1131, 1e-06
    %v1136 = vadd.f32 %v1132, 1e-06
    %v1137 = vrsqrt.pop %v1133
    %v1138 = vmul.f32 %v1137, %v1133
    %v1139 = vmul.f32 %v1138, %v1137
    %v1140 = vmul.f32 0.5, %v1139
    %v1141 = vsub.f32 1.5, %v1140
    %v1142 = vmul.f32 %v1137, %v1141
    %vm1143 = vweird.f32 %v1133
    %vm1144 = vweird.f32 %v1137
    %vm1145 = vmor %vm1143, %vm1144
    %v1146 = vsel %vm1145, %v1137, %v1142
    %v1147 = vrsqrt.pop %v1134
    %v1148 = vmul.f32 %v1147, %v1134
    %v1149 = vmul.f32 %v1148, %v1147
    %v1150 = vmul.f32 0.5, %v1149
    %v1151 = vsub.f32 1.5, %v1150
    %v1152 = vmul.f32 %v1147, %v1151
    %vm1153 = vweird.f32 %v1134
    %vm1154 = vweird.f32 %v1147
    %vm1155 = vmor %vm1153, %vm1154
    %v1156 = vsel %vm1155, %v1147, %v1152
    %v1157 = vrsqrt.pop %v1135
    %v1158 = vmul.f32 %v1157, %v1135
    %v1159 = vmul.f32 %v1158, %v1157
    %v1160 = vmul.f32 0.5, %v1159
    %v1161 = vsub.f32 1.5, %v1160
    %v1162 = vmul.f32 %v1157, %v1161
    %vm1163 = vweird.f32 %v1135
    %vm1164 = vweird.f32 %v1157
    %vm1165 = vmor %vm1163, %vm1164
    %v1166 = vsel %vm1165, %v1157, %v1162
    %v1167 = vrsqrt.pop %v1136
    %v1168 = vmul.f32 %v1167, %v1136
    %v1169 = vmul.f32 %v1168, %v1167
    %v1170 = vmul.f32 0.5, %v1169
    %v1171 = vsub.f32 1.5, %v1170
    %v1172 = vmul.f32 %v1167, %v1171
    %vm1173 = vweird.f32 %v1136
    %vm1174 = vweird.f32 %v1167
    %vm1175 = vmor %vm1173, %vm1174
    %v1176 = vsel %vm1175, %v1167, %v1172
    %v1177 = vmul.f32 %v1109, %v1146
    %v1178 = vmul.f32 %v1110, %v1156
    %v1179 = vmul.f32 %v1111, %v1166
    %v1180 = vmul.f32 %v1112, %v1176
    %v1181 = vld [vmem:[#allocation7 + $0xd] sm:$0x1]
    %v1182 = vperm.slane %v1181, 0
    %v1183 = vmul.f32 %v1177, %v1182
    %v1184 = vmul.f32 %v1178, %v1182
    %v1185 = vmul.f32 %v1179, %v1182
    %v1186 = vmul.f32 %v1180, %v1182
    %v1187 = vld [vmem:[#allocation7 + $0xe] sm:$0x1]
    %v1188 = vperm.slane %v1187, 0
    %v1189 = vadd.f32 %v1183, %v1188
    %v1190 = vadd.f32 %v1184, %v1188
    %v1191 = vadd.f32 %v1185, %v1188
    %v1192 = vadd.f32 %v1186, %v1188
    %v1193 = vld [vmem:[#allocation5 + $0x248] sm:$0xff]
    %v1194 = vld [vmem:[#allocation5 + $0x250] sm:$0xff]
    %v1195 = vld [vmem:[#allocation5 + $0x258] sm:$0xff]
    %v1196 = vld [vmem:[#allocation5 + $0x260] sm:$0xff]
    %v1197 = vpack.c.bf16 %v1190, %v1189
    %v1198 = vpack.c.bf16 %v1192, %v1191
    %v1199 = vpack.c.bf16 %v1194, %v1193
    %v1200 = vpack.c.bf16 %v1196, %v1195
    %v1201 = vld [vmem:[#allocation7 + $0xf] sm:$0x1]
    %v1202 = vperm.slane %v1201, 0
    %v1204 = vsel %vm154, %v1197, 0
    %v1207 = vsel %vm154, %v1198, 0
    %1209 = vmatpush.bf16.msra.mxu0 0
    %1210 = vmatpush.bf16.msra.mxu0 0
    %1211 = vmatpush.bf16.msra.mxu0 0
    %1212 = vmatpush.bf16.msra.mxu0 0
    %1213 = vmatpush.bf16.msra.mxu0 0
    %1214 = vmatpush.bf16.msra.mxu0 0
    %1215 = vmatpush.bf16.msra.mxu0 %v1200
    %1216 = vmatpush.bf16.msra.mxu0 %v1199
    %1217 = vmatmul.bf16.gmra.mxu0 %v1204
    %v1218 = vpop.f32.mrf.mxu0
    %v1219 = vadd.f32 %v1202, %v1218
    %v1220 = vpop.f32.mrf.mxu0
    %v1221 = vadd.f32 %v1202, %v1220
    %1222 = vmatmul.bf16.gmra.mxu0 %v1207
    %v1223 = vpop.f32.mrf.mxu0
    %v1224 = vadd.f32 %v1202, %v1223
    %v1225 = vpop.f32.mrf.mxu0
    %v1226 = vadd.f32 %v1202, %v1225
    %1227 = vdwg.mxu0
    %v1228 = vmul.f32 %v1219, %v1219
    %v1229 = vmul.f32 %v1221, %v1221
    %v1230 = vmul.f32 %v1224, %v1224
    %v1231 = vmul.f32 %v1226, %v1226
    %v1232 = vmul.f32 %v1219, %v1228
    %v1233 = vmul.f32 %v1221, %v1229
    %v1234 = vmul.f32 %v1224, %v1230
    %v1235 = vmul.f32 %v1226, %v1231
    %v1236 = vmul.f32 %v1232, 0.044715
    %v1237 = vmul.f32 %v1233, 0.044715
    %v1238 = vmul.f32 %v1234, 0.044715
    %v1239 = vmul.f32 %v1235, 0.044715
    %v1240 = vadd.f32 %v1219, %v1236
    %v1241 = vadd.f32 %v1221, %v1237
    %v1242 = vadd.f32 %v1224, %v1238
    %v1243 = vadd.f32 %v1226, %v1239
    %v1244 = vmul.f32 %v1240, 0.7978846
    %v1245 = vmul.f32 %v1241, 0.7978846
    %v1246 = vmul.f32 %v1242, 0.7978846
    %v1247 = vmul.f32 %v1243, 0.7978846
    %v1248 = vtanh.pop %v1244
    %v1249 = vtanh.pop %v1245
    %v1250 = vtanh.pop %v1246
    %v1251 = vtanh.pop %v1247
    %v1252 = vadd.f32 %v1248, 1.0
    %v1253 = vadd.f32 %v1249, 1.0
    %v1254 = vadd.f32 %v1250, 1.0
    %v1255 = vadd.f32 %v1251, 1.0
    %v1256 = vmul.f32 %v1252, 0.5
    %v1257 = vmul.f32 %v1253, 0.5
    %v1258 = vmul.f32 %v1254, 0.5
    %v1259 = vmul.f32 %v1255, 0.5
    %v1260 = vmul.f32 %v1219, %v1256
    %v1261 = vmul.f32 %v1221, %v1257
    %v1262 = vmul.f32 %v1224, %v1258
    %v1263 = vmul.f32 %v1226, %v1259
    %v1264 = vld [vmem:[#allocation7 + $0x11] sm:$0x1]
    %v1265 = vld [vmem:[#allocation5 + $0x268] sm:$0xff]
    %v1266 = vld [vmem:[#allocation5 + $0x270] sm:$0xff]
    %v1267 = vld [vmem:[#allocation5 + $0x278] sm:$0xff]
    %v1268 = vld [vmem:[#allocation5 + $0x280] sm:$0xff]
    %v1269 = vld [vmem:[#allocation5 + $0x288] sm:$0xff]
    %v1270 = vld [vmem:[#allocation5 + $0x290] sm:$0xff]
    %v1271 = vld [vmem:[#allocation5 + $0x298] sm:$0xff]
    %v1272 = vld [vmem:[#allocation5 + $0x2a0] sm:$0xff]
    %v1273 = vpack.c.bf16 %v1261, %v1260
    %v1274 = vpack.c.bf16 %v1263, %v1262
    %v1275 = vpack.c.bf16 %v1266, %v1265
    %v1276 = vpack.c.bf16 %v1268, %v1267
    %v1277 = vpack.c.bf16 %v1270, %v1269
    %v1278 = vpack.c.bf16 %v1272, %v1271
    %v1279 = vld [vmem:[#allocation7 + $0x10] sm:$0x1]
    %v1280 = vperm.slane %v1279, 0
    %v1282 = vsel %vm360, %v1273, 0
    %v1285 = vsel %vm360, %v1274, 0
    %1287 = vmatpush.bf16.msra.mxu0 0
    %1288 = vmatpush.bf16.msra.mxu0 0
    %1289 = vmatpush.bf16.msra.mxu0 0
    %1290 = vmatpush.bf16.msra.mxu0 0
    %1291 = vmatpush.bf16.msra.mxu0 %v1278
    %1292 = vmatpush.bf16.msra.mxu0 %v1277
    %1293 = vmatpush.bf16.msra.mxu0 %v1276
    %1294 = vmatpush.bf16.msra.mxu0 %v1275
    %1295 = vmatmul.bf16.gmra.mxu0 %v1282
    %v1296 = vpop.f32.mrf.mxu0
    %v1297 = vadd.f32 %v1280, %v1296
    %v1298 = vpop.f32.mrf.mxu0
    %v1299 = vadd.f32 %v1280, %v1298
    %1300 = vmatmul.bf16.gmra.mxu0 %v1285
    %v1301 = vpop.f32.mrf.mxu0
    %v1302 = vadd.f32 %v1280, %v1301
    %v1303 = vpop.f32.mrf.mxu0
    %v1304 = vadd.f32 %v1280, %v1303
    %1305 = vdwg.mxu0
    %v1306 = vperm.slane %v1264, 0
    %v1307 = vmul.f32 %v1306, %v1297
    %v1308 = vmul.f32 %v1306, %v1299
    %v1309 = vmul.f32 %v1306, %v1302
    %v1310 = vmul.f32 %v1306, %v1304
    %v1311 = vadd.f32 %v942, %v1307
    %v1312 = vadd.f32 %v943, %v1308
    %v1313 = vadd.f32 %v944, %v1309
    %v1314 = vadd.f32 %v945, %v1310
    %v1315 = vsel %vm154, %v1311, 0.0
    %1316 = vadd.xlane.f32.xlu0 %v1315
    %v1317 = vpop.xlane.xlu0 %1316
    %v1318 = vsel %vm154, %v1312, 0.0
    %1319 = vadd.xlane.f32.xlu0 %v1318
    %v1320 = vpop.xlane.xlu0 %1319
    %v1321 = vsel %vm154, %v1313, 0.0
    %1322 = vadd.xlane.f32.xlu0 %v1321
    %v1323 = vpop.xlane.xlu0 %1322
    %v1324 = vsel %vm154, %v1314, 0.0
    %1325 = vadd.xlane.f32.xlu0 %v1324
    %v1326 = vpop.xlane.xlu0 %1325
    %v1327 = vmul.f32 %v1317, %v488
    %v1328 = vmul.f32 %v1320, %v488
    %v1329 = vmul.f32 %v1323, %v488
    %v1330 = vmul.f32 %v1326, %v488
    %v1331 = vsub.f32 %v1311, %v1327
    %v1332 = vsub.f32 %v1312, %v1328
    %v1333 = vsub.f32 %v1313, %v1329
    %v1334 = vsub.f32 %v1314, %v1330
    %v1335 = vmul.f32 %v1331, %v1331
    %v1336 = vmul.f32 %v1332, %v1332
    %v1337 = vmul.f32 %v1333, %v1333
    %v1338 = vmul.f32 %v1334, %v1334
    %v1339 = vsel %vm154, %v1335, 0.0
    %1340 = vadd.xlane.f32.xlu0 %v1339
    %v1341 = vpop.xlane.xlu0 %1340
    %v1342 = vsel %vm154, %v1336, 0.0
    %1343 = vadd.xlane.f32.xlu0 %v1342
    %v1344 = vpop.xlane.xlu0 %1343
    %v1345 = vsel %vm154, %v1337, 0.0
    %1346 = vadd.xlane.f32.xlu0 %v1345
    %v1347 = vpop.xlane.xlu0 %1346
    %v1348 = vsel %vm154, %v1338, 0.0
    %1349 = vadd.xlane.f32.xlu0 %v1348
    %v1350 = vpop.xlane.xlu0 %1349
    %v1351 = vmul.f32 %v1341, %v488
    %v1352 = vmul.f32 %v1344, %v488
    %v1353 = vmul.f32 %v1347, %v488
    %v1354 = vmul.f32 %v1350, %v488
    %v1355 = vadd.f32 %v1351, 1e-06
    %v1356 = vadd.f32 %v1352, 1e-06
    %v1357 = vadd.f32 %v1353, 1e-06
    %v1358 = vadd.f32 %v1354, 1e-06
    %v1359 = vrsqrt.pop %v1355
    %v1360 = vmul.f32 %v1359, %v1355
    %v1361 = vmul.f32 %v1360, %v1359
    %v1362 = vmul.f32 0.5, %v1361
    %v1363 = vsub.f32 1.5, %v1362
    %v1364 = vmul.f32 %v1359, %v1363
    %vm1365 = vweird.f32 %v1355
    %vm1366 = vweird.f32 %v1359
    %vm1367 = vmor %vm1365, %vm1366
    %v1368 = vsel %vm1367, %v1359, %v1364
    %v1369 = vrsqrt.pop %v1356
    %v1370 = vmul.f32 %v1369, %v1356
    %v1371 = vmul.f32 %v1370, %v1369
    %v1372 = vmul.f32 0.5, %v1371
    %v1373 = vsub.f32 1.5, %v1372
    %v1374 = vmul.f32 %v1369, %v1373
    %vm1375 = vweird.f32 %v1356
    %vm1376 = vweird.f32 %v1369
    %vm1377 = vmor %vm1375, %vm1376
    %v1378 = vsel %vm1377, %v1369, %v1374
    %v1379 = vrsqrt.pop %v1357
    %v1380 = vmul.f32 %v1379, %v1357
    %v1381 = vmul.f32 %v1380, %v1379
    %v1382 = vmul.f32 0.5, %v1381
    %v1383 = vsub.f32 1.5, %v1382
    %v1384 = vmul.f32 %v1379, %v1383
    %vm1385 = vweird.f32 %v1357
    %vm1386 = vweird.f32 %v1379
    %vm1387 = vmor %vm1385, %vm1386
    %v1388 = vsel %vm1387, %v1379, %v1384
    %v1389 = vrsqrt.pop %v1358
    %v1390 = vmul.f32 %v1389, %v1358
    %v1391 = vmul.f32 %v1390, %v1389
    %v1392 = vmul.f32 0.5, %v1391
    %v1393 = vsub.f32 1.5, %v1392
    %v1394 = vmul.f32 %v1389, %v1393
    %vm1395 = vweird.f32 %v1358
    %vm1396 = vweird.f32 %v1389
    %vm1397 = vmor %vm1395, %vm1396
    %v1398 = vsel %vm1397, %v1389, %v1394
    %v1399 = vmul.f32 %v1331, %v1368
    %v1400 = vmul.f32 %v1332, %v1378
    %v1401 = vmul.f32 %v1333, %v1388
    %v1402 = vmul.f32 %v1334, %v1398
    %v1403 = vld [vmem:[#allocation7 + $0x4] sm:$0x1]
    %v1404 = vperm.slane %v1403, 0
    %v1405 = vmul.f32 %v1399, %v1404
    %v1406 = vmul.f32 %v1400, %v1404
    %v1407 = vmul.f32 %v1401, %v1404
    %v1408 = vmul.f32 %v1402, %v1404
    %v1409 = vld [vmem:[#allocation7 + $0x5] sm:$0x1]
    %v1410 = vperm.slane %v1409, 0
    %v1411 = vadd.f32 %v1405, %v1410
    %v1412 = vadd.f32 %v1406, %v1410
    %v1413 = vadd.f32 %v1407, %v1410
    %v1414 = vadd.f32 %v1408, %v1410
    %v1415 = vld [vmem:[#allocation5 + $0x458] sm:$0xff]
    %v1416 = vld [vmem:[#allocation5 + $0x460] sm:$0xff]
    %v1417 = vld [vmem:[#allocation5 + $0x468] sm:$0xff]
    %v1418 = vld [vmem:[#allocation5 + $0x470] sm:$0xff]
    %v1419 = vpack.c.bf16 %v1412, %v1411
    %v1420 = vpack.c.bf16 %v1414, %v1413
    %v1421 = vpack.c.bf16 %v1416, %v1415
    %v1422 = vpack.c.bf16 %v1418, %v1417
    %v1423 = vld [vmem:[#allocation7 + $0x23] sm:$0x1]
    %v1424 = vperm.slane %v1423, 0
    %v1426 = vsel %vm154, %v1419, 0
    %v1429 = vsel %vm154, %v1420, 0
    %1431 = vmatpush.bf16.msra.mxu0 0
    %1432 = vmatpush.bf16.msra.mxu0 0
    %1433 = vmatpush.bf16.msra.mxu0 0
    %1434 = vmatpush.bf16.msra.mxu0 0
    %1435 = vmatpush.bf16.msra.mxu0 0
    %1436 = vmatpush.bf16.msra.mxu0 0
    %1437 = vmatpush.bf16.msra.mxu0 %v1422
    %1438 = vmatpush.bf16.msra.mxu0 %v1421
    %1439 = vmatmul.bf16.gmra.mxu0 %v1426
    %v1440 = vpop.f32.mrf.mxu0
    %v1441 = vadd.f32 %v1424, %v1440
    %v1442 = vpop.f32.mrf.mxu0
    %v1443 = vadd.f32 %v1424, %v1442
    %1444 = vmatmul.bf16.gmra.mxu0 %v1429
    %v1445 = vpop.f32.mrf.mxu0
    %v1446 = vadd.f32 %v1424, %v1445
    %v1447 = vpop.f32.mrf.mxu0
    %v1448 = vadd.f32 %v1424, %v1447
    %1449 = vdwg.mxu0
    %v1450 = vld [vmem:[#allocation5 + $0x478] sm:$0xff]
    %v1451 = vld [vmem:[#allocation5 + $0x480] sm:$0xff]
    %v1452 = vld [vmem:[#allocation5 + $0x488] sm:$0xff]
    %v1453 = vld [vmem:[#allocation5 + $0x490] sm:$0xff]
    %v1454 = vpack.c.bf16 %v1443, %v1441
    %v1455 = vpack.c.bf16 %v1448, %v1446
    %v1456 = vpack.c.bf16 %v1451, %v1450
    %v1457 = vpack.c.bf16 %v1453, %v1452
    %v1458 = vld [vmem:[#allocation7 + $0x24] sm:$0x1]
    %v1459 = vperm.slane %v1458, 0
    %v1461 = vsel %vm154, %v1454, 0
    %v1464 = vsel %vm154, %v1455, 0
    %1466 = vmatpush.bf16.msra.mxu0 0
    %1467 = vmatpush.bf16.msra.mxu0 0
    %1468 = vmatpush.bf16.msra.mxu0 0
    %1469 = vmatpush.bf16.msra.mxu0 0
    %1470 = vmatpush.bf16.msra.mxu0 0
    %1471 = vmatpush.bf16.msra.mxu0 0
    %1472 = vmatpush.bf16.msra.mxu0 %v1457
    %1473 = vmatpush.bf16.msra.mxu0 %v1456
    %1474 = vmatmul.bf16.gmra.mxu0 %v1461
    %v1475 = vpop.f32.mrf.mxu0
    %v1476 = vadd.f32 %v1459, %v1475
    %v1477 = vpop.f32.mrf.mxu0
    %v1478 = vadd.f32 %v1459, %v1477
    %1479 = vmatmul.bf16.gmra.mxu0 %v1464
    %v1480 = vpop.f32.mrf.mxu0
    %v1481 = vadd.f32 %v1459, %v1480
    %v1482 = vpop.f32.mrf.mxu0
    %v1483 = vadd.f32 %v1459, %v1482
    %1484 = vdwg.mxu0
    %v1485 = vld [vmem:[#allocation5 + $0x498] sm:$0xff]
    %v1486 = vld [vmem:[#allocation5 + $0x4a0] sm:$0xff]
    %v1487 = vld [vmem:[#allocation5 + $0x4a8] sm:$0xff]
    %v1488 = vld [vmem:[#allocation5 + $0x4b0] sm:$0xff]
    %v1489 = vld [vmem:[#allocation5 + $0x4b8] sm:$0xff]
    %v1490 = vld [vmem:[#allocation5 + $0x4c0] sm:$0xff]
    %v1491 = vld [vmem:[#allocation5 + $0x4c8] sm:$0xff]
    %v1492 = vld [vmem:[#allocation5 + $0x4d0] sm:$0xff]
    %v1493 = vmul.f32 %v1476, %v1476
    %v1494 = vmul.f32 %v1478, %v1478
    %v1495 = vmul.f32 %v1481, %v1481
    %v1496 = vmul.f32 %v1483, %v1483
    %vm1497 = vcmask 64512
    %v1498 = vsel %vm1497, %v1493, 0.0
    %1499 = vadd.xlane.f32.xlu0 %v1498
    %v1500 = vpop.xlane.xlu0 %1499
    %v1501 = vsel %vm1497, %v1494, 0.0
    %1502 = vadd.xlane.f32.xlu0 %v1501
    %v1503 = vpop.xlane.xlu0 %1502
    %v1504 = vsel %vm1497, %v1495, 0.0
    %1505 = vadd.xlane.f32.xlu0 %v1504
    %v1506 = vpop.xlane.xlu0 %1505
    %v1507 = vsel %vm1497, %v1496, 0.0
    %1508 = vadd.xlane.f32.xlu0 %v1507
    %v1509 = vpop.xlane.xlu0 %1508
    %v1510 = vadd.f32 %v1500, 1e-24
    %v1511 = vadd.f32 %v1503, 1e-24
    %v1512 = vadd.f32 %v1506, 1e-24
    %v1513 = vadd.f32 %v1509, 1e-24
    %v1514 = vrsqrt.pop %v1510
    %v1515 = vmul.f32 %v1514, %v1510
    %v1516 = vmul.f32 %v1515, %v1514
    %v1517 = vmul.f32 0.5, %v1516
    %v1518 = vsub.f32 1.5, %v1517
    %v1519 = vmul.f32 %v1514, %v1518
    %vm1520 = vweird.f32 %v1510
    %vm1521 = vweird.f32 %v1514
    %vm1522 = vmor %vm1520, %vm1521
    %v1523 = vsel %vm1522, %v1514, %v1519
    %v1524 = vrsqrt.pop %v1511
    %v1525 = vmul.f32 %v1524, %v1511
    %v1526 = vmul.f32 %v1525, %v1524
    %v1527 = vmul.f32 0.5, %v1526
    %v1528 = vsub.f32 1.5, %v1527
    %v1529 = vmul.f32 %v1524, %v1528
    %vm1530 = vweird.f32 %v1511
    %vm1531 = vweird.f32 %v1524
    %vm1532 = vmor %vm1530, %vm1531
    %v1533 = vsel %vm1532, %v1524, %v1529
    %v1534 = vrsqrt.pop %v1512
    %v1535 = vmul.f32 %v1534, %v1512
    %v1536 = vmul.f32 %v1535, %v1534
    %v1537 = vmul.f32 0.5, %v1536
    %v1538 = vsub.f32 1.5, %v1537
    %v1539 = vmul.f32 %v1534, %v1538
    %vm1540 = vweird.f32 %v1512
    %vm1541 = vweird.f32 %v1534
    %vm1542 = vmor %vm1540, %vm1541
    %v1543 = vsel %vm1542, %v1534, %v1539
    %v1544 = vrsqrt.pop %v1513
    %v1545 = vmul.f32 %v1544, %v1513
    %v1546 = vmul.f32 %v1545, %v1544
    %v1547 = vmul.f32 0.5, %v1546
    %v1548 = vsub.f32 1.5, %v1547
    %v1549 = vmul.f32 %v1544, %v1548
    %vm1550 = vweird.f32 %v1513
    %vm1551 = vweird.f32 %v1544
    %vm1552 = vmor %vm1550, %vm1551
    %v1553 = vsel %vm1552, %v1544, %v1549
    %v1554 = vmul.f32 %v1476, %v1523
    %v1555 = vmul.f32 %v1478, %v1533
    %v1556 = vmul.f32 %v1481, %v1543
    %v1557 = vmul.f32 %v1483, %v1553
    %v1558 = vmul.f32 %v1485, %v1485
    %v1559 = vmul.f32 %v1486, %v1486
    %v1560 = vmul.f32 %v1487, %v1487
    %v1561 = vmul.f32 %v1488, %v1488
    %v1562 = vmul.f32 %v1489, %v1489
    %v1563 = vmul.f32 %v1490, %v1490
    %v1564 = vmul.f32 %v1491, %v1491
    %v1565 = vmul.f32 %v1492, %v1492
    %v1566 = vsel %vm1497, %v1558, 0.0
    %1567 = vadd.xlane.f32.xlu0 %v1566
    %v1568 = vpop.xlane.xlu0 %1567
    %v1569 = vsel %vm1497, %v1559, 0.0
    %1570 = vadd.xlane.f32.xlu0 %v1569
    %v1571 = vpop.xlane.xlu0 %1570
    %v1572 = vsel %vm1497, %v1560, 0.0
    %1573 = vadd.xlane.f32.xlu0 %v1572
    %v1574 = vpop.xlane.xlu0 %1573
    %v1575 = vsel %vm1497, %v1561, 0.0
    %1576 = vadd.xlane.f32.xlu0 %v1575
    %v1577 = vpop.xlane.xlu0 %1576
    %v1578 = vsel %vm1497, %v1562, 0.0
    %1579 = vadd.xlane.f32.xlu0 %v1578
    %v1580 = vpop.xlane.xlu0 %1579
    %v1581 = vsel %vm1497, %v1563, 0.0
    %1582 = vadd.xlane.f32.xlu0 %v1581
    %v1583 = vpop.xlane.xlu0 %1582
    %v1584 = vsel %vm1497, %v1564, 0.0
    %1585 = vadd.xlane.f32.xlu0 %v1584
    %v1586 = vpop.xlane.xlu0 %1585
    %v1587 = vsel %vm1497, %v1565, 0.0
    %1588 = vadd.xlane.f32.xlu0 %v1587
    %v1589 = vpop.xlane.xlu0 %1588
    %v1590 = vadd.f32 %v1568, 1e-24
    %v1591 = vadd.f32 %v1571, 1e-24
    %v1592 = vadd.f32 %v1574, 1e-24
    %v1593 = vadd.f32 %v1577, 1e-24
    %v1594 = vadd.f32 %v1580, 1e-24
    %v1595 = vadd.f32 %v1583, 1e-24
    %v1596 = vadd.f32 %v1586, 1e-24
    %v1597 = vadd.f32 %v1589, 1e-24
    %v1598 = vrsqrt.pop %v1590
    %v1599 = vmul.f32 %v1598, %v1590
    %v1600 = vmul.f32 %v1599, %v1598
    %v1601 = vmul.f32 0.5, %v1600
    %v1602 = vsub.f32 1.5, %v1601
    %v1603 = vmul.f32 %v1598, %v1602
    %vm1604 = vweird.f32 %v1590
    %vm1605 = vweird.f32 %v1598
    %vm1606 = vmor %vm1604, %vm1605
    %v1607 = vsel %vm1606, %v1598, %v1603
    %v1608 = vrsqrt.pop %v1591
    %v1609 = vmul.f32 %v1608, %v1591
    %v1610 = vmul.f32 %v1609, %v1608
    %v1611 = vmul.f32 0.5, %v1610
    %v1612 = vsub.f32 1.5, %v1611
    %v1613 = vmul.f32 %v1608, %v1612
    %vm1614 = vweird.f32 %v1591
    %vm1615 = vweird.f32 %v1608
    %vm1616 = vmor %vm1614, %vm1615
    %v1617 = vsel %vm1616, %v1608, %v1613
    %v1618 = vrsqrt.pop %v1592
    %v1619 = vmul.f32 %v1618, %v1592
    %v1620 = vmul.f32 %v1619, %v1618
    %v1621 = vmul.f32 0.5, %v1620
    %v1622 = vsub.f32 1.5, %v1621
    %v1623 = vmul.f32 %v1618, %v1622
    %vm1624 = vweird.f32 %v1592
    %vm1625 = vweird.f32 %v1618
    %vm1626 = vmor %vm1624, %vm1625
    %v1627 = vsel %vm1626, %v1618, %v1623
    %v1628 = vrsqrt.pop %v1593
    %v1629 = vmul.f32 %v1628, %v1593
    %v1630 = vmul.f32 %v1629, %v1628
    %v1631 = vmul.f32 0.5, %v1630
    %v1632 = vsub.f32 1.5, %v1631
    %v1633 = vmul.f32 %v1628, %v1632
    %vm1634 = vweird.f32 %v1593
    %vm1635 = vweird.f32 %v1628
    %vm1636 = vmor %vm1634, %vm1635
    %v1637 = vsel %vm1636, %v1628, %v1633
    %v1638 = vrsqrt.pop %v1594
    %v1639 = vmul.f32 %v1638, %v1594
    %v1640 = vmul.f32 %v1639, %v1638
    %v1641 = vmul.f32 0.5, %v1640
    %v1642 = vsub.f32 1.5, %v1641
    %v1643 = vmul.f32 %v1638, %v1642
    %vm1644 = vweird.f32 %v1594
    %vm1645 = vweird.f32 %v1638
    %vm1646 = vmor %vm1644, %vm1645
    %v1647 = vsel %vm1646, %v1638, %v1643
    %v1648 = vrsqrt.pop %v1595
    %v1649 = vmul.f32 %v1648, %v1595
    %v1650 = vmul.f32 %v1649, %v1648
    %v1651 = vmul.f32 0.5, %v1650
    %v1652 = vsub.f32 1.5, %v1651
    %v1653 = vmul.f32 %v1648, %v1652
    %vm1654 = vweird.f32 %v1595
    %vm1655 = vweird.f32 %v1648
    %vm1656 = vmor %vm1654, %vm1655
    %v1657 = vsel %vm1656, %v1648, %v1653
    %v1658 = vrsqrt.pop %v1596
    %v1659 = vmul.f32 %v1658, %v1596
    %v1660 = vmul.f32 %v1659, %v1658
    %v1661 = vmul.f32 0.5, %v1660
    %v1662 = vsub.f32 1.5, %v1661
    %v1663 = vmul.f32 %v1658, %v1662
    %vm1664 = vweird.f32 %v1596
    %vm1665 = vweird.f32 %v1658
    %vm1666 = vmor %vm1664, %vm1665
    %v1667 = vsel %vm1666, %v1658, %v1663
    %v1668 = vrsqrt.pop %v1597
    %v1669 = vmul.f32 %v1668, %v1597
    %v1670 = vmul.f32 %v1669, %v1668
    %v1671 = vmul.f32 0.5, %v1670
    %v1672 = vsub.f32 1.5, %v1671
    %v1673 = vmul.f32 %v1668, %v1672
    %vm1674 = vweird.f32 %v1597
    %vm1675 = vweird.f32 %v1668
    %vm1676 = vmor %vm1674, %vm1675
    %v1677 = vsel %vm1676, %v1668, %v1673
    %v1678 = vmul.f32 %v1485, %v1607
    %v1679 = vmul.f32 %v1486, %v1617
    %v1680 = vmul.f32 %v1487, %v1627
    %v1681 = vmul.f32 %v1488, %v1637
    %v1682 = vmul.f32 %v1489, %v1647
    %v1683 = vmul.f32 %v1490, %v1657
    %v1684 = vmul.f32 %v1491, %v1667
    %v1685 = vmul.f32 %v1492, %v1677
    %v1687 = vsel %vm1497, %v1554, 0
    %v1690 = vsel %vm1497, %v1555, 0
    %v1693 = vsel %vm1497, %v1556, 0
    %v1696 = vsel %vm1497, %v1557, 0
    %v1699 = vsel %vm1497, %v1678, 0
    %v1702 = vsel %vm1497, %v1679, 0
    %v1705 = vsel %vm1497, %v1680, 0
    %v1708 = vsel %vm1497, %v1681, 0
    %v1711 = vsel %vm1497, %v1682, 0
    %v1714 = vsel %vm1497, %v1683, 0
    %v1717 = vsel %vm1497, %v1684, 0
    %v1720 = vsel %vm1497, %v1685, 0
    %1722 = vmatpush.xpose.msra.mxu0 0.0
    %1723 = vmatpush.xpose.msra.mxu0 0.0
    %1724 = vmatpush.xpose.msra.mxu0 0.0
    %1725 = vmatpush.xpose.msra.mxu0 0.0
    %1726 = vmatpush.xpose.msra.mxu0 0.0
    %1727 = vmatpush.xpose.msra.mxu0 0.0
    %1728 = vmatpush.xpose.msra.mxu0 0.0
    %1729 = vmatpush.xpose.msra.mxu0 0.0
    %1730 = vmatpush.xpose.msra.mxu0 %v1720
    %1731 = vmatpush.xpose.msra.mxu0 %v1717
    %1732 = vmatpush.xpose.msra.mxu0 %v1714
    %1733 = vmatpush.xpose.msra.mxu0 %v1711
    %1734 = vmatpush.xpose.msra.mxu0 %v1708
    %1735 = vmatpush.xpose.msra.mxu0 %v1705
    %1736 = vmatpush.xpose.msra.mxu0 %v1702
    %1737 = vmatpush.xpose.msra.mxu0 %v1699
    %1738 = vmatmul.f32.gmra.mxu0 %v1687
    %v1739 = vpop.f32.mrf.mxu0
    %v1740 = vadd.f32 0.0, %v1739
    %1741 = vmatmul.f32.gmra.mxu0 %v1690
    %v1742 = vpop.f32.mrf.mxu0
    %v1743 = vadd.f32 0.0, %v1742
    %1744 = vmatmul.f32.gmra.mxu0 %v1693
    %v1745 = vpop.f32.mrf.mxu0
    %v1746 = vadd.f32 0.0, %v1745
    %1747 = vmatmul.f32.gmra.mxu0 %v1696
    %v1748 = vpop.f32.mrf.mxu0
    %v1749 = vadd.f32 0.0, %v1748
    %1750 = vdwg.mxu0
    %v1751 = vsel %vm360, %v1740, -inf
    %1752 = vmax.xlane.f32.xlu0 %v1751
    %v1753 = vpop.xlane.xlu0 %1752
    %v1754 = vsel %vm360, %v1743, -inf
    %1755 = vmax.xlane.f32.xlu0 %v1754
    %v1756 = vpop.xlane.xlu0 %1755
    %v1757 = vsel %vm360, %v1746, -inf
    %1758 = vmax.xlane.f32.xlu0 %v1757
    %v1759 = vpop.xlane.xlu0 %1758
    %v1760 = vsel %vm360, %v1749, -inf
    %1761 = vmax.xlane.f32.xlu0 %v1760
    %v1762 = vpop.xlane.xlu0 %1761
    %v1763 = vlaneseq
    %v1764 = vand.u32 %v1763, 127
    %vm1765 = vcmp.ge.f32.partialorder %v1740, %v1753
    %vm1766 = vcmp.ge.f32.partialorder %v1743, %v1756
    %vm1767 = vcmp.ge.f32.partialorder %v1746, %v1759
    %vm1768 = vcmp.ge.f32.partialorder %v1749, %v1762
    %v1769 = vsel %vm1765, %v1764, 64
    %v1770 = vsel %vm1766, %v1764, 64
    %v1771 = vsel %vm1767, %v1764, 64
    %v1772 = vsel %vm1768, %v1764, 64
    %v1773 = vsel %vm360, %v1769, 2147483647
    %v1774 = vand.u32 %v1773, 65535
    %v1775 = vshra.s32 %v1773, 16
    %v1776 = vcvt.s32.f32 %v1774
    %v1777 = vcvt.s32.f32 %v1775
    %1778 = vmin.xlane.f32.xlu0 %v1777
    %v1779 = vpop.xlane.xlu0 %1778
    %vm1780 = vcmp.eq.f32.partialorder %v1777, %v1779
    %v1781 = vsel %vm1780, %v1776, inf
    %1782 = vmin.xlane.f32.xlu0 %v1781
    %v1783 = vpop.xlane.xlu0 %1782
    %v1784 = vcvt.f32.s32 %v1783
    %v1785 = vcvt.f32.s32 %v1779
    %v1786 = vshll.u32 %v1785, 16
    %v1787 = vadd.s32 %v1786, %v1784
    %v1788 = vsel %vm360, %v1770, 2147483647
    %v1789 = vand.u32 %v1788, 65535
    %v1790 = vshra.s32 %v1788, 16
    %v1791 = vcvt.s32.f32 %v1789
    %v1792 = vcvt.s32.f32 %v1790
    %1793 = vmin.xlane.f32.xlu0 %v1792
    %v1794 = vpop.xlane.xlu0 %1793
    %vm1795 = vcmp.eq.f32.partialorder %v1792, %v1794
    %v1796 = vsel %vm1795, %v1791, inf
    %1797 = vmin.xlane.f32.xlu0 %v1796
    %v1798 = vpop.xlane.xlu0 %1797
    %v1799 = vcvt.f32.s32 %v1798
    %v1800 = vcvt.f32.s32 %v1794
    %v1801 = vshll.u32 %v1800, 16
    %v1802 = vadd.s32 %v1801, %v1799
    %v1803 = vsel %vm360, %v1771, 2147483647
    %v1804 = vand.u32 %v1803, 65535
    %v1805 = vshra.s32 %v1803, 16
    %v1806 = vcvt.s32.f32 %v1804
    %v1807 = vcvt.s32.f32 %v1805
    %1808 = vmin.xlane.f32.xlu0 %v1807
    %v1809 = vpop.xlane.xlu0 %1808
    %vm1810 = vcmp.eq.f32.partialorder %v1807, %v1809
    %v1811 = vsel %vm1810, %v1806, inf
    %1812 = vmin.xlane.f32.xlu0 %v1811
    %v1813 = vpop.xlane.xlu0 %1812
    %v1814 = vcvt.f32.s32 %v1813
    %v1815 = vcvt.f32.s32 %v1809
    %v1816 = vshll.u32 %v1815, 16
    %v1817 = vadd.s32 %v1816, %v1814
    %v1818 = vsel %vm360, %v1772, 2147483647
    %v1819 = vand.u32 %v1818, 65535
    %v1820 = vshra.s32 %v1818, 16
    %v1821 = vcvt.s32.f32 %v1819
    %v1822 = vcvt.s32.f32 %v1820
    %1823 = vmin.xlane.f32.xlu0 %v1822
    %v1824 = vpop.xlane.xlu0 %1823
    %vm1825 = vcmp.eq.f32.partialorder %v1822, %v1824
    %v1826 = vsel %vm1825, %v1821, inf
    %1827 = vmin.xlane.f32.xlu0 %v1826
    %v1828 = vpop.xlane.xlu0 %1827
    %v1829 = vcvt.f32.s32 %v1828
    %v1830 = vcvt.f32.s32 %v1824
    %v1831 = vshll.u32 %v1830, 16
    %v1832 = vadd.s32 %v1831, %v1829
    %vm1833 = vcmask 7168
    %1834 = vst.msk [vmem:[%s5] sm:$0xff] %vm1833, %v1787
    %1835 = vst.msk [vmem:[%s5 + $0x8] sm:$0xff] %vm1833, %v1802
    %1836 = vst.msk [vmem:[%s5 + $0x10] sm:$0xff] %vm1833, %v1817
    %1837 = vst.msk [vmem:[%s5 + $0x18] sm:$0xff] %vm1833, %v1832
    %vm1838 = vcmp.eq.s32.totalorder %v1764, %v1787
    %vm1839 = vcmp.eq.s32.totalorder %v1764, %v1802
    %vm1840 = vcmp.eq.s32.totalorder %v1764, %v1817
    %vm1841 = vcmp.eq.s32.totalorder %v1764, %v1832
    %v1842 = vsel %vm1838, 1, 0
    %v1843 = vsel %vm1839, 1, 0
    %v1844 = vsel %vm1840, 1, 0
    %v1845 = vsel %vm1841, 1, 0
    %v1846 = vcvt.s32.f32 %v1842
    %v1847 = vcvt.s32.f32 %v1843
    %v1848 = vcvt.s32.f32 %v1844
    %v1849 = vcvt.s32.f32 %v1845
    %v1851 = vsel %vm360, %v1846, 0
    %v1854 = vsel %vm360, %v1847, 0
    %v1857 = vsel %vm360, %v1848, 0
    %v1860 = vsel %vm360, %v1849, 0
    %1862 = vmatpush.msra.mxu0 0.0
    %1863 = vmatpush.msra.mxu0 0.0
    %1864 = vmatpush.msra.mxu0 0.0
    %1865 = vmatpush.msra.mxu0 0.0
    %1866 = vmatpush.msra.mxu0 0.0
    %1867 = vmatpush.msra.mxu0 0.0
    %1868 = vmatpush.msra.mxu0 0.0
    %1869 = vmatpush.msra.mxu0 0.0
    %1870 = vmatpush.msra.mxu0 %v1492
    %1871 = vmatpush.msra.mxu0 %v1491
    %1872 = vmatpush.msra.mxu0 %v1490
    %1873 = vmatpush.msra.mxu0 %v1489
    %1874 = vmatpush.msra.mxu0 %v1488
    %1875 = vmatpush.msra.mxu0 %v1487
    %1876 = vmatpush.msra.mxu0 %v1486
    %1877 = vmatpush.msra.mxu0 %v1485
    %1878 = vmatmul.f32.gmra.mxu0 %v1851
    %v1879 = vpop.f32.mrf.mxu0
    %v1880 = vadd.f32 0.0, %v1879
    %1881 = vmatmul.f32.gmra.mxu0 %v1854
    %v1882 = vpop.f32.mrf.mxu0
    %v1883 = vadd.f32 0.0, %v1882
    %1884 = vmatmul.f32.gmra.mxu0 %v1857
    %v1885 = vpop.f32.mrf.mxu0
    %v1886 = vadd.f32 0.0, %v1885
    %1887 = vmatmul.f32.gmra.mxu0 %v1860
    %v1888 = vpop.f32.mrf.mxu0
    %v1889 = vadd.f32 0.0, %v1888
    %1890 = vdwg.mxu0
    %v1891 = vsub.f32 %v1476, %v1880
    %v1892 = vsub.f32 %v1478, %v1883
    %v1893 = vsub.f32 %v1481, %v1886
    %v1894 = vsub.f32 %v1483, %v1889
    %v1895 = vmul.f32 %v1891, %v1891
    %v1896 = vmul.f32 %v1892, %v1892
    %v1897 = vmul.f32 %v1893, %v1893
    %v1898 = vmul.f32 %v1894, %v1894
    %v1899 = vsel %vm1497, %v1895, 0.0
    %1900 = vadd.xlane.f32.xlu0 %v1899
    %v1901 = vpop.xlane.xlu0 %1900
    %v1902 = vsel %vm1497, %v1896, 0.0
    %1903 = vadd.xlane.f32.xlu0 %v1902
    %v1904 = vpop.xlane.xlu0 %1903
    %v1905 = vsel %vm1497, %v1897, 0.0
    %1906 = vadd.xlane.f32.xlu0 %v1905
    %v1907 = vpop.xlane.xlu0 %1906
    %v1908 = vsel %vm1497, %v1898, 0.0
    %1909 = vadd.xlane.f32.xlu0 %v1908
    %v1910 = vpop.xlane.xlu0 %1909
    %v1911 = vadd.f32 %v1901, %v1904
    %v1912 = vadd.f32 %v1911, %v1907
    %v1913 = vadd.f32 %v1912, %v1910
    %v1914 = vrot.slane %v1913, 4
    %v1915 = vadd.f32 %v1913, %v1914
    %v1916 = vrot.slane %v1915, 2
    %v1917 = vadd.f32 %v1915, %v1916
    %v1918 = vrot.slane %v1917, 1
    %v1919 = vadd.f32 %v1917, %v1918
    %v1920 = vmul.f32 %v1919, 1.15
    %v1921 = vrcp.pop 256.0
    %v1922 = vmul.f32 256.0, %v1921
    %v1923 = vsub.f32 1.0, %v1922
    %v1924 = vmul.f32 %v1921, %v1923
    %v1925 = vadd.f32 %v1921, %v1924
    %vm1926 = vweird.f32 %v1921
    %v1927 = vsel %vm1926, %v1921, %v1925
    %v1928 = vmul.f32 %v1920, %v1927
    %vm1929 = vcmask 0
    %1930 = vst.msk [vmem:[#allocation9] sm:$0x1] %vm1929, %v1928
    %v1931 = vld [vmem:[#allocation5 + $0x4d8] sm:$0xff]
    %v1932 = vpack.c.bf16 %v1883, %v1880
    %v1933 = vpack.c.bf16 %v1889, %v1886
    %v1934 = vpack.c.bf16 %v1931, %v1931
    %v1935 = vld [vmem:[#allocation7 + $0x25] sm:$0x1]
    %v1936 = vperm.slane %v1935, 0
    %v1938 = vsel %vm1497, %v1932, 0
    %v1941 = vsel %vm1497, %v1933, 0
    %v1944 = vsel %vm115, %v1934, 0
    %1946 = vmatpush.bf16.msra.mxu0 0
    %1947 = vmatpush.bf16.msra.mxu0 0
    %1948 = vmatpush.bf16.msra.mxu0 0
    %1949 = vmatpush.bf16.msra.mxu0 0
    %1950 = vmatpush.bf16.msra.mxu0 0
    %1951 = vmatpush.bf16.msra.mxu0 0
    %1952 = vmatpush.bf16.msra.mxu0 0
    %1953 = vmatpush.bf16.msra.mxu0 %v1944
    %1954 = vmatmul.bf16.gmra.mxu0 %v1938
    %v1955 = vpop.f32.mrf.mxu0
    %v1956 = vadd.f32 %v1936, %v1955
    %v1957 = vpop.f32.mrf.mxu0
    %v1958 = vadd.f32 %v1936, %v1957
    %1959 = vmatmul.bf16.gmra.mxu0 %v1941
    %v1960 = vpop.f32.mrf.mxu0
    %v1961 = vadd.f32 %v1936, %v1960
    %v1962 = vpop.f32.mrf.mxu0
    %v1963 = vadd.f32 %v1936, %v1962
    %1964 = vdwg.mxu0
    %v1965 = vpack.c.bf16 %v1958, %v1956
    %v1966 = vpack.c.bf16 %v1963, %v1961
    %1967 = vmatpush.bf16.msra.mxu0 0
    %1968 = vmatpush.bf16.msra.mxu0 0
    %1969 = vmatpush.bf16.msra.mxu0 0
    %1970 = vmatpush.bf16.msra.mxu0 0
    %1971 = vmatpush.bf16.msra.mxu0 0
    %1972 = vmatpush.bf16.msra.mxu0 0
    %1973 = vmatpush.bf16.msra.mxu0 %v1966
    %1974 = vmatpush.bf16.msra.mxu0 %v1965
    %1975 = vmatmul.bf16.gmra.mxu0 %v156
    %v1976 = vpop.f32.mrf.mxu0
    %v1977 = vadd.f32 0.0, %v1976
    %v1978 = vpop.f32.mrf.mxu0
    %v1979 = vadd.f32 0.0, %v1978
    %1980 = vmatmul.bf16.gmra.mxu0 %v159
    %v1981 = vpop.f32.mrf.mxu0
    %v1982 = vadd.f32 0.0, %v1981
    %v1983 = vpop.f32.mrf.mxu0
    %v1984 = vadd.f32 0.0, %v1983
    %1985 = vmatmul.bf16.gmra.mxu0 %v162
    %v1986 = vpop.f32.mrf.mxu0
    %v1987 = vadd.f32 0.0, %v1986
    %v1988 = vpop.f32.mrf.mxu0
    %v1989 = vadd.f32 0.0, %v1988
    %1990 = vmatmul.bf16.gmra.mxu0 %v165
    %v1991 = vpop.f32.mrf.mxu0
    %v1992 = vadd.f32 0.0, %v1991
    %v1993 = vpop.f32.mrf.mxu0
    %v1994 = vadd.f32 0.0, %v1993
    %1995 = vmatmul.bf16.gmra.mxu0 %v168
    %v1996 = vpop.f32.mrf.mxu0
    %v1997 = vadd.f32 0.0, %v1996
    %v1998 = vpop.f32.mrf.mxu0
    %v1999 = vadd.f32 0.0, %v1998
    %2000 = vmatmul.bf16.gmra.mxu0 %v171
    %v2001 = vpop.f32.mrf.mxu0
    %v2002 = vadd.f32 0.0, %v2001
    %v2003 = vpop.f32.mrf.mxu0
    %v2004 = vadd.f32 0.0, %v2003
    %2005 = vmatmul.bf16.gmra.mxu0 %v174
    %v2006 = vpop.f32.mrf.mxu0
    %v2007 = vadd.f32 0.0, %v2006
    %v2008 = vpop.f32.mrf.mxu0
    %v2009 = vadd.f32 0.0, %v2008
    %2010 = vmatmul.bf16.gmra.mxu0 %v177
    %v2011 = vpop.f32.mrf.mxu0
    %v2012 = vadd.f32 0.0, %v2011
    %v2013 = vpop.f32.mrf.mxu0
    %v2014 = vadd.f32 0.0, %v2013
    %2015 = vmatmul.bf16.gmra.mxu0 %v180
    %v2016 = vpop.f32.mrf.mxu0
    %v2017 = vadd.f32 0.0, %v2016
    %v2018 = vpop.f32.mrf.mxu0
    %v2019 = vadd.f32 0.0, %v2018
    %2020 = vmatmul.bf16.gmra.mxu0 %v183
    %v2021 = vpop.f32.mrf.mxu0
    %v2022 = vadd.f32 0.0, %v2021
    %v2023 = vpop.f32.mrf.mxu0
    %v2024 = vadd.f32 0.0, %v2023
    %2025 = vmatmul.bf16.gmra.mxu0 %v186
    %v2026 = vpop.f32.mrf.mxu0
    %v2027 = vadd.f32 0.0, %v2026
    %v2028 = vpop.f32.mrf.mxu0
    %v2029 = vadd.f32 0.0, %v2028
    %2030 = vmatmul.bf16.gmra.mxu0 %v189
    %v2031 = vpop.f32.mrf.mxu0
    %v2032 = vadd.f32 0.0, %v2031
    %v2033 = vpop.f32.mrf.mxu0
    %v2034 = vadd.f32 0.0, %v2033
    %2035 = vmatmul.bf16.gmra.mxu0 %v192
    %v2036 = vpop.f32.mrf.mxu0
    %v2037 = vadd.f32 0.0, %v2036
    %v2038 = vpop.f32.mrf.mxu0
    %v2039 = vadd.f32 0.0, %v2038
    %2040 = vmatmul.bf16.gmra.mxu0 %v195
    %v2041 = vpop.f32.mrf.mxu0
    %v2042 = vadd.f32 0.0, %v2041
    %v2043 = vpop.f32.mrf.mxu0
    %v2044 = vadd.f32 0.0, %v2043
    %2045 = vdwg.mxu0
    %2050 = vrot.lane.b32.xlu0 %v1987, 32
    %v2051 = vpop.permute.xlu0 %2050
    %2052 = vrot.lane.b32.xlu0 %v1989, 32
    %v2053 = vpop.permute.xlu0 %2052
    %2054 = vrot.lane.b32.xlu0 %v1992, 32
    %v2055 = vpop.permute.xlu0 %2054
    %2056 = vrot.lane.b32.xlu0 %v1994, 32
    %v2057 = vpop.permute.xlu0 %2056
    %2066 = vrot.lane.b32.xlu0 %v1997, 64
    %v2067 = vpop.permute.xlu0 %2066
    %2068 = vrot.lane.b32.xlu0 %v1999, 64
    %v2069 = vpop.permute.xlu0 %2068
    %2070 = vrot.lane.b32.xlu0 %v2002, 64
    %v2071 = vpop.permute.xlu0 %2070
    %2072 = vrot.lane.b32.xlu0 %v2004, 64
    %v2073 = vpop.permute.xlu0 %2072
    %2082 = vrot.lane.b32.xlu0 %v2007, 96
    %v2083 = vpop.permute.xlu0 %2082
    %2084 = vrot.lane.b32.xlu0 %v2009, 96
    %v2085 = vpop.permute.xlu0 %2084
    %2086 = vrot.lane.b32.xlu0 %v2012, 96
    %v2087 = vpop.permute.xlu0 %2086
    %2088 = vrot.lane.b32.xlu0 %v2014, 96
    %v2089 = vpop.permute.xlu0 %2088
    %2098 = vrot.lane.b32.xlu0 %v2027, 32
    %v2099 = vpop.permute.xlu0 %2098
    %2100 = vrot.lane.b32.xlu0 %v2029, 32
    %v2101 = vpop.permute.xlu0 %2100
    %2102 = vrot.lane.b32.xlu0 %v2032, 32
    %v2103 = vpop.permute.xlu0 %2102
    %2104 = vrot.lane.b32.xlu0 %v2034, 32
    %v2105 = vpop.permute.xlu0 %2104
    %2114 = vrot.lane.b32.xlu0 %v2037, 64
    %v2115 = vpop.permute.xlu0 %2114
    %2116 = vrot.lane.b32.xlu0 %v2039, 64
    %v2117 = vpop.permute.xlu0 %2116
    %2118 = vrot.lane.b32.xlu0 %v2042, 64
    %v2119 = vpop.permute.xlu0 %2118
    %2120 = vrot.lane.b32.xlu0 %v2044, 64
    %v2121 = vpop.permute.xlu0 %2120
    %v2126 = vsel %vm154, %v1977, %v2051
    %v2127 = vsel %vm154, %v1979, %v2053
    %v2128 = vsel %vm154, %v1982, %v2055
    %v2129 = vsel %vm154, %v1984, %v2057
    %v2130 = vsel %vm360, %v2126, %v2067
    %v2131 = vsel %vm360, %v2127, %v2069
    %v2132 = vsel %vm360, %v2128, %v2071
    %v2133 = vsel %vm360, %v2129, %v2073
    %v2134 = vsel %vm365, %v2130, %v2083
    %v2135 = vsel %vm365, %v2131, %v2085
    %v2136 = vsel %vm365, %v2132, %v2087
    %v2137 = vsel %vm365, %v2133, %v2089
    %v2138 = vsel %vm154, %v2017, %v2099
    %v2139 = vsel %vm154, %v2019, %v2101
    %v2140 = vsel %vm154, %v2022, %v2103
    %v2141 = vsel %vm154, %v2024, %v2105
    %v2142 = vsel %vm360, %v2138, %v2115
    %v2143 = vsel %vm360, %v2139, %v2117
    %v2144 = vsel %vm360, %v2140, %v2119
    %v2145 = vsel %vm360, %v2141, %v2121
    %v2146 = vld [vmem:[#allocation5 + $0x2a8] sm:$0xff]
    %v2147 = vld [vmem:[#allocation5 + $0x2b0] sm:$0xff]
    %v2148 = vld [vmem:[#allocation5 + $0x2b8] sm:$0xff]
    %v2149 = vld [vmem:[#allocation5 + $0x2c0] sm:$0xff]
    %v2150 = vld [vmem:[#allocation5 + $0x2c8] sm:$0xff]
    %v2151 = vld [vmem:[#allocation5 + $0x2d0] sm:$0xff]
    %v2152 = vld [vmem:[#allocation5 + $0x2d8] sm:$0xff]
    %v2153 = vld [vmem:[#allocation5 + $0x2e0] sm:$0xff]
    %v2154 = vld [vmem:[#allocation5 + $0x2e8] sm:$0xff]
    %v2155 = vld [vmem:[#allocation5 + $0x2f0] sm:$0xff]
    %v2156 = vld [vmem:[#allocation5 + $0x2f8] sm:$0xff]
    %v2157 = vld [vmem:[#allocation5 + $0x300] sm:$0xff]
    %v2158 = vld [vmem:[#allocation5 + $0x308] sm:$0xff]
    %v2159 = vld [vmem:[#allocation5 + $0x310] sm:$0xff]
    %v2160 = vld [vmem:[#allocation5 + $0x318] sm:$0xff]
    %v2161 = vld [vmem:[#allocation5 + $0x320] sm:$0xff]
    %v2162 = vld [vmem:[#allocation5 + $0x328] sm:$0xff]
    %v2163 = vld [vmem:[#allocation5 + $0x330] sm:$0xff]
    %v2164 = vld [vmem:[#allocation5 + $0x338] sm:$0xff]
    %v2165 = vld [vmem:[#allocation5 + $0x340] sm:$0xff]
    %v2166 = vld [vmem:[#allocation5 + $0x348] sm:$0xff]
    %v2167 = vld [vmem:[#allocation5 + $0x350] sm:$0xff]
    %v2168 = vld [vmem:[#allocation5 + $0x358] sm:$0xff]
    %v2169 = vld [vmem:[#allocation5 + $0x360] sm:$0xff]
    %v2170 = vld [vmem:[#allocation5 + $0x368] sm:$0xff]
    %v2171 = vld [vmem:[#allocation5 + $0x370] sm:$0xff]
    %v2172 = vld [vmem:[#allocation5 + $0x378] sm:$0xff]
    %v2173 = vld [vmem:[#allocation5 + $0x380] sm:$0xff]
    %v2174 = vpack.c.bf16 %v2135, %v2134
    %v2175 = vpack.c.bf16 %v2143, %v2142
    %v2176 = vpack.c.bf16 %v2137, %v2136
    %v2177 = vpack.c.bf16 %v2145, %v2144
    %v2178 = vpack.c.bf16 %v2147, %v2146
    %v2179 = vpack.c.bf16 %v2149, %v2148
    %v2180 = vpack.c.bf16 %v2151, %v2150
    %v2181 = vpack.c.bf16 %v2153, %v2152
    %v2182 = vpack.c.bf16 %v2155, %v2154
    %v2183 = vpack.c.bf16 %v2157, %v2156
    %v2184 = vpack.c.bf16 %v2159, %v2158
    %v2185 = vpack.c.bf16 %v2161, %v2160
    %v2186 = vpack.c.bf16 %v2163, %v2162
    %v2187 = vpack.c.bf16 %v2165, %v2164
    %v2188 = vpack.c.bf16 %v2167, %v2166
    %v2189 = vpack.c.bf16 %v2169, %v2168
    %v2190 = vpack.c.bf16 %v2171, %v2170
    %v2191 = vpack.c.bf16 %v2173, %v2172
    %v2192 = vld [vmem:[#allocation7 + $0x12] sm:$0x1]
    %v2193 = vperm.slane %v2192, 0
    %v2195 = vsel %vm365, %v2175, 0
    %v2198 = vsel %vm365, %v2177, 0
    %2200 = vmatpush.bf16.msra.mxu0 %v2185
    %2201 = vmatpush.bf16.msra.mxu0 %v2184
    %2202 = vmatpush.bf16.msra.mxu0 %v2183
    %2203 = vmatpush.bf16.msra.mxu0 %v2182
    %2204 = vmatpush.bf16.msra.mxu0 %v2181
    %2205 = vmatpush.bf16.msra.mxu0 %v2180
    %2206 = vmatpush.bf16.msra.mxu0 %v2179
    %2207 = vmatpush.bf16.msra.mxu0 %v2178
    %2208 = vmatmul.bf16.gmra.mxu0 %v2174
    %v2209 = vpop.f32.mrf.mxu0
    %v2210 = vadd.f32 %v2193, %v2209
    %v2211 = vpop.f32.mrf.mxu0
    %v2212 = vadd.f32 %v2193, %v2211
    %2213 = vmatmul.bf16.gmra.mxu0 %v2176
    %v2214 = vpop.f32.mrf.mxu0
    %v2215 = vadd.f32 %v2193, %v2214
    %v2216 = vpop.f32.mrf.mxu0
    %v2217 = vadd.f32 %v2193, %v2216
    %2218 = vdwg.mxu0
    %2219 = vmatpush.bf16.msra.mxu0 0
    %2220 = vmatpush.bf16.msra.mxu0 0
    %2221 = vmatpush.bf16.msra.mxu0 %v2191
    %2222 = vmatpush.bf16.msra.mxu0 %v2190
    %2223 = vmatpush.bf16.msra.mxu0 %v2189
    %2224 = vmatpush.bf16.msra.mxu0 %v2188
    %2225 = vmatpush.bf16.msra.mxu0 %v2187
    %2226 = vmatpush.bf16.msra.mxu0 %v2186
    %2227 = vmatmul.bf16.gmra.mxu0 %v2195
    %v2228 = vpop.f32.mrf.mxu0
    %v2229 = vadd.f32 %v2210, %v2228
    %v2230 = vpop.f32.mrf.mxu0
    %v2231 = vadd.f32 %v2212, %v2230
    %2232 = vmatmul.bf16.gmra.mxu0 %v2198
    %v2233 = vpop.f32.mrf.mxu0
    %v2234 = vadd.f32 %v2215, %v2233
    %v2235 = vpop.f32.mrf.mxu0
    %v2236 = vadd.f32 %v2217, %v2235
    %2237 = vdwg.mxu0
    %v2238 = vsel %vm154, %v2229, 0.0
    %2239 = vadd.xlane.f32.xlu0 %v2238
    %v2240 = vpop.xlane.xlu0 %2239
    %v2241 = vsel %vm154, %v2231, 0.0
    %2242 = vadd.xlane.f32.xlu0 %v2241
    %v2243 = vpop.xlane.xlu0 %2242
    %v2244 = vsel %vm154, %v2234, 0.0
    %2245 = vadd.xlane.f32.xlu0 %v2244
    %v2246 = vpop.xlane.xlu0 %2245
    %v2247 = vsel %vm154, %v2236, 0.0
    %2248 = vadd.xlane.f32.xlu0 %v2247
    %v2249 = vpop.xlane.xlu0 %2248
    %v2250 = vmul.f32 %v2240, %v488
    %v2251 = vmul.f32 %v2243, %v488
    %v2252 = vmul.f32 %v2246, %v488
    %v2253 = vmul.f32 %v2249, %v488
    %v2254 = vsub.f32 %v2229, %v2250
    %v2255 = vsub.f32 %v2231, %v2251
    %v2256 = vsub.f32 %v2234, %v2252
    %v2257 = vsub.f32 %v2236, %v2253
    %v2258 = vmul.f32 %v2254, %v2254
    %v2259 = vmul.f32 %v2255, %v2255
    %v2260 = vmul.f32 %v2256, %v2256
    %v2261 = vmul.f32 %v2257, %v2257
    %v2262 = vsel %vm154, %v2258, 0.0
    %2263 = vadd.xlane.f32.xlu0 %v2262
    %v2264 = vpop.xlane.xlu0 %2263
    %v2265 = vsel %vm154, %v2259, 0.0
    %2266 = vadd.xlane.f32.xlu0 %v2265
    %v2267 = vpop.xlane.xlu0 %2266
    %v2268 = vsel %vm154, %v2260, 0.0
    %2269 = vadd.xlane.f32.xlu0 %v2268
    %v2270 = vpop.xlane.xlu0 %2269
    %v2271 = vsel %vm154, %v2261, 0.0
    %2272 = vadd.xlane.f32.xlu0 %v2271
    %v2273 = vpop.xlane.xlu0 %2272
    %v2274 = vmul.f32 %v2264, %v488
    %v2275 = vmul.f32 %v2267, %v488
    %v2276 = vmul.f32 %v2270, %v488
    %v2277 = vmul.f32 %v2273, %v488
    %v2278 = vadd.f32 %v2274, 1e-06
    %v2279 = vadd.f32 %v2275, 1e-06
    %v2280 = vadd.f32 %v2276, 1e-06
    %v2281 = vadd.f32 %v2277, 1e-06
    %v2282 = vrsqrt.pop %v2278
    %v2283 = vmul.f32 %v2282, %v2278
    %v2284 = vmul.f32 %v2283, %v2282
    %v2285 = vmul.f32 0.5, %v2284
    %v2286 = vsub.f32 1.5, %v2285
    %v2287 = vmul.f32 %v2282, %v2286
    %vm2288 = vweird.f32 %v2278
    %vm2289 = vweird.f32 %v2282
    %vm2290 = vmor %vm2288, %vm2289
    %v2291 = vsel %vm2290, %v2282, %v2287
    %v2292 = vrsqrt.pop %v2279
    %v2293 = vmul.f32 %v2292, %v2279
    %v2294 = vmul.f32 %v2293, %v2292
    %v2295 = vmul.f32 0.5, %v2294
    %v2296 = vsub.f32 1.5, %v2295
    %v2297 = vmul.f32 %v2292, %v2296
    %vm2298 = vweird.f32 %v2279
    %vm2299 = vweird.f32 %v2292
    %vm2300 = vmor %vm2298, %vm2299
    %v2301 = vsel %vm2300, %v2292, %v2297
    %v2302 = vrsqrt.pop %v2280
    %v2303 = vmul.f32 %v2302, %v2280
    %v2304 = vmul.f32 %v2303, %v2302
    %v2305 = vmul.f32 0.5, %v2304
    %v2306 = vsub.f32 1.5, %v2305
    %v2307 = vmul.f32 %v2302, %v2306
    %vm2308 = vweird.f32 %v2280
    %vm2309 = vweird.f32 %v2302
    %vm2310 = vmor %vm2308, %vm2309
    %v2311 = vsel %vm2310, %v2302, %v2307
    %v2312 = vrsqrt.pop %v2281
    %v2313 = vmul.f32 %v2312, %v2281
    %v2314 = vmul.f32 %v2313, %v2312
    %v2315 = vmul.f32 0.5, %v2314
    %v2316 = vsub.f32 1.5, %v2315
    %v2317 = vmul.f32 %v2312, %v2316
    %vm2318 = vweird.f32 %v2281
    %vm2319 = vweird.f32 %v2312
    %vm2320 = vmor %vm2318, %vm2319
    %v2321 = vsel %vm2320, %v2312, %v2317
    %v2322 = vmul.f32 %v2254, %v2291
    %v2323 = vmul.f32 %v2255, %v2301
    %v2324 = vmul.f32 %v2256, %v2311
    %v2325 = vmul.f32 %v2257, %v2321
    %v2326 = vld [vmem:[#allocation7 + $0x13] sm:$0x1]
    %v2327 = vperm.slane %v2326, 0
    %v2328 = vmul.f32 %v2322, %v2327
    %v2329 = vmul.f32 %v2323, %v2327
    %v2330 = vmul.f32 %v2324, %v2327
    %v2331 = vmul.f32 %v2325, %v2327
    %v2332 = vld [vmem:[#allocation7 + $0x14] sm:$0x1]
    %v2333 = vperm.slane %v2332, 0
    %v2334 = vadd.f32 %v2328, %v2333
    %v2335 = vadd.f32 %v2329, %v2333
    %v2336 = vadd.f32 %v2330, %v2333
    %v2337 = vadd.f32 %v2331, %v2333
    %v2338 = vpack.c.bf16 %v2335, %v2334
    %v2339 = vpack.c.bf16 %v2337, %v2336
    %2340 = vmatpush.bf16.msra.mxu0 0
    %2341 = vmatpush.bf16.msra.mxu0 0
    %2342 = vmatpush.bf16.msra.mxu0 0
    %2343 = vmatpush.bf16.msra.mxu0 0
    %2344 = vmatpush.bf16.msra.mxu0 0
    %2345 = vmatpush.bf16.msra.mxu0 0
    %2346 = vmatpush.bf16.msra.mxu0 %v2339
    %2347 = vmatpush.bf16.msra.mxu0 %v2338
    %2348 = vmatmul.bf16.gmra.mxu0 %v156
    %v2349 = vpop.f32.mrf.mxu0
    %v2350 = vadd.f32 0.0, %v2349
    %v2351 = vpop.f32.mrf.mxu0
    %v2352 = vadd.f32 0.0, %v2351
    %2353 = vmatmul.bf16.gmra.mxu0 %v159
    %v2354 = vpop.f32.mrf.mxu0
    %v2355 = vadd.f32 0.0, %v2354
    %v2356 = vpop.f32.mrf.mxu0
    %v2357 = vadd.f32 0.0, %v2356
    %2358 = vmatmul.bf16.gmra.mxu0 %v162
    %v2359 = vpop.f32.mrf.mxu0
    %v2360 = vadd.f32 0.0, %v2359
    %v2361 = vpop.f32.mrf.mxu0
    %v2362 = vadd.f32 0.0, %v2361
    %2363 = vmatmul.bf16.gmra.mxu0 %v165
    %v2364 = vpop.f32.mrf.mxu0
    %v2365 = vadd.f32 0.0, %v2364
    %v2366 = vpop.f32.mrf.mxu0
    %v2367 = vadd.f32 0.0, %v2366
    %2368 = vmatmul.bf16.gmra.mxu0 %v168
    %v2369 = vpop.f32.mrf.mxu0
    %v2370 = vadd.f32 0.0, %v2369
    %v2371 = vpop.f32.mrf.mxu0
    %v2372 = vadd.f32 0.0, %v2371
    %2373 = vmatmul.bf16.gmra.mxu0 %v171
    %v2374 = vpop.f32.mrf.mxu0
    %v2375 = vadd.f32 0.0, %v2374
    %v2376 = vpop.f32.mrf.mxu0
    %v2377 = vadd.f32 0.0, %v2376
    %2378 = vmatmul.bf16.gmra.mxu0 %v174
    %v2379 = vpop.f32.mrf.mxu0
    %v2380 = vadd.f32 0.0, %v2379
    %v2381 = vpop.f32.mrf.mxu0
    %v2382 = vadd.f32 0.0, %v2381
    %2383 = vmatmul.bf16.gmra.mxu0 %v177
    %v2384 = vpop.f32.mrf.mxu0
    %v2385 = vadd.f32 0.0, %v2384
    %v2386 = vpop.f32.mrf.mxu0
    %v2387 = vadd.f32 0.0, %v2386
    %2388 = vmatmul.bf16.gmra.mxu0 %v180
    %v2389 = vpop.f32.mrf.mxu0
    %v2390 = vadd.f32 0.0, %v2389
    %v2391 = vpop.f32.mrf.mxu0
    %v2392 = vadd.f32 0.0, %v2391
    %2393 = vmatmul.bf16.gmra.mxu0 %v183
    %v2394 = vpop.f32.mrf.mxu0
    %v2395 = vadd.f32 0.0, %v2394
    %v2396 = vpop.f32.mrf.mxu0
    %v2397 = vadd.f32 0.0, %v2396
    %2398 = vmatmul.bf16.gmra.mxu0 %v186
    %v2399 = vpop.f32.mrf.mxu0
    %v2400 = vadd.f32 0.0, %v2399
    %v2401 = vpop.f32.mrf.mxu0
    %v2402 = vadd.f32 0.0, %v2401
    %2403 = vmatmul.bf16.gmra.mxu0 %v189
    %v2404 = vpop.f32.mrf.mxu0
    %v2405 = vadd.f32 0.0, %v2404
    %v2406 = vpop.f32.mrf.mxu0
    %v2407 = vadd.f32 0.0, %v2406
    %2408 = vmatmul.bf16.gmra.mxu0 %v192
    %v2409 = vpop.f32.mrf.mxu0
    %v2410 = vadd.f32 0.0, %v2409
    %v2411 = vpop.f32.mrf.mxu0
    %v2412 = vadd.f32 0.0, %v2411
    %2413 = vmatmul.bf16.gmra.mxu0 %v195
    %v2414 = vpop.f32.mrf.mxu0
    %v2415 = vadd.f32 0.0, %v2414
    %v2416 = vpop.f32.mrf.mxu0
    %v2417 = vadd.f32 0.0, %v2416
    %2418 = vdwg.mxu0
    %v2419 = vld [vmem:[#allocation5 + $0x388] sm:$0x7f]
    %v2420 = vld [vmem:[#allocation7 + $0x17] sm:$0x1]
    %v2421 = vperm.slane %v2419, 0
    %v2422 = vmul.f32 %v2350, %v2421
    %v2423 = vmul.f32 %v2352, %v2421
    %v2424 = vmul.f32 %v2355, %v2421
    %v2425 = vmul.f32 %v2357, %v2421
    %v2426 = vperm.slane %v2420, 0
    %v2427 = vadd.f32 %v2426, %v2422
    %v2428 = vadd.f32 %v2426, %v2423
    %v2429 = vadd.f32 %v2426, %v2424
    %v2430 = vadd.f32 %v2426, %v2425
    %v2431 = vperm.slane %v2419, 1
    %v2432 = vmul.f32 %v2360, %v2431
    %v2433 = vmul.f32 %v2362, %v2431
    %v2434 = vmul.f32 %v2365, %v2431
    %v2435 = vmul.f32 %v2367, %v2431
    %v2436 = vadd.f32 %v2427, %v2432
    %v2437 = vadd.f32 %v2428, %v2433
    %v2438 = vadd.f32 %v2429, %v2434
    %v2439 = vadd.f32 %v2430, %v2435
    %v2440 = vperm.slane %v2419, 2
    %v2441 = vmul.f32 %v2370, %v2440
    %v2442 = vmul.f32 %v2372, %v2440
    %v2443 = vmul.f32 %v2375, %v2440
    %v2444 = vmul.f32 %v2377, %v2440
    %v2445 = vadd.f32 %v2436, %v2441
    %v2446 = vadd.f32 %v2437, %v2442
    %v2447 = vadd.f32 %v2438, %v2443
    %v2448 = vadd.f32 %v2439, %v2444
    %v2449 = vperm.slane %v2419, 3
    %v2450 = vmul.f32 %v2380, %v2449
    %v2451 = vmul.f32 %v2382, %v2449
    %v2452 = vmul.f32 %v2385, %v2449
    %v2453 = vmul.f32 %v2387, %v2449
    %v2454 = vadd.f32 %v2445, %v2450
    %v2455 = vadd.f32 %v2446, %v2451
    %v2456 = vadd.f32 %v2447, %v2452
    %v2457 = vadd.f32 %v2448, %v2453
    %v2458 = vperm.slane %v2419, 4
    %v2459 = vmul.f32 %v2390, %v2458
    %v2460 = vmul.f32 %v2392, %v2458
    %v2461 = vmul.f32 %v2395, %v2458
    %v2462 = vmul.f32 %v2397, %v2458
    %v2463 = vadd.f32 %v2454, %v2459
    %v2464 = vadd.f32 %v2455, %v2460
    %v2465 = vadd.f32 %v2456, %v2461
    %v2466 = vadd.f32 %v2457, %v2462
    %v2467 = vperm.slane %v2419, 5
    %v2468 = vmul.f32 %v2400, %v2467
    %v2469 = vmul.f32 %v2402, %v2467
    %v2470 = vmul.f32 %v2405, %v2467
    %v2471 = vmul.f32 %v2407, %v2467
    %v2472 = vadd.f32 %v2463, %v2468
    %v2473 = vadd.f32 %v2464, %v2469
    %v2474 = vadd.f32 %v2465, %v2470
    %v2475 = vadd.f32 %v2466, %v2471
    %v2476 = vperm.slane %v2419, 6
    %v2477 = vmul.f32 %v2410, %v2476
    %v2478 = vmul.f32 %v2412, %v2476
    %v2479 = vmul.f32 %v2415, %v2476
    %v2480 = vmul.f32 %v2417, %v2476
    %v2481 = vadd.f32 %v2472, %v2477
    %v2482 = vadd.f32 %v2473, %v2478
    %v2483 = vadd.f32 %v2474, %v2479
    %v2484 = vadd.f32 %v2475, %v2480
    %v2485 = vsel %vm154, %v2481, 0.0
    %2486 = vadd.xlane.f32.xlu0 %v2485
    %v2487 = vpop.xlane.xlu0 %2486
    %v2488 = vsel %vm154, %v2482, 0.0
    %2489 = vadd.xlane.f32.xlu0 %v2488
    %v2490 = vpop.xlane.xlu0 %2489
    %v2491 = vsel %vm154, %v2483, 0.0
    %2492 = vadd.xlane.f32.xlu0 %v2491
    %v2493 = vpop.xlane.xlu0 %2492
    %v2494 = vsel %vm154, %v2484, 0.0
    %2495 = vadd.xlane.f32.xlu0 %v2494
    %v2496 = vpop.xlane.xlu0 %2495
    %v2497 = vmul.f32 %v2487, %v488
    %v2498 = vmul.f32 %v2490, %v488
    %v2499 = vmul.f32 %v2493, %v488
    %v2500 = vmul.f32 %v2496, %v488
    %v2501 = vsub.f32 %v2481, %v2497
    %v2502 = vsub.f32 %v2482, %v2498
    %v2503 = vsub.f32 %v2483, %v2499
    %v2504 = vsub.f32 %v2484, %v2500
    %v2505 = vmul.f32 %v2501, %v2501
    %v2506 = vmul.f32 %v2502, %v2502
    %v2507 = vmul.f32 %v2503, %v2503
    %v2508 = vmul.f32 %v2504, %v2504
    %v2509 = vsel %vm154, %v2505, 0.0
    %2510 = vadd.xlane.f32.xlu0 %v2509
    %v2511 = vpop.xlane.xlu0 %2510
    %v2512 = vsel %vm154, %v2506, 0.0
    %2513 = vadd.xlane.f32.xlu0 %v2512
    %v2514 = vpop.xlane.xlu0 %2513
    %v2515 = vsel %vm154, %v2507, 0.0
    %2516 = vadd.xlane.f32.xlu0 %v2515
    %v2517 = vpop.xlane.xlu0 %2516
    %v2518 = vsel %vm154, %v2508, 0.0
    %2519 = vadd.xlane.f32.xlu0 %v2518
    %v2520 = vpop.xlane.xlu0 %2519
    %v2521 = vmul.f32 %v2511, %v488
    %v2522 = vmul.f32 %v2514, %v488
    %v2523 = vmul.f32 %v2517, %v488
    %v2524 = vmul.f32 %v2520, %v488
    %v2525 = vadd.f32 %v2521, 1e-06
    %v2526 = vadd.f32 %v2522, 1e-06
    %v2527 = vadd.f32 %v2523, 1e-06
    %v2528 = vadd.f32 %v2524, 1e-06
    %v2529 = vrsqrt.pop %v2525
    %v2530 = vmul.f32 %v2529, %v2525
    %v2531 = vmul.f32 %v2530, %v2529
    %v2532 = vmul.f32 0.5, %v2531
    %v2533 = vsub.f32 1.5, %v2532
    %v2534 = vmul.f32 %v2529, %v2533
    %vm2535 = vweird.f32 %v2525
    %vm2536 = vweird.f32 %v2529
    %vm2537 = vmor %vm2535, %vm2536
    %v2538 = vsel %vm2537, %v2529, %v2534
    %v2539 = vrsqrt.pop %v2526
    %v2540 = vmul.f32 %v2539, %v2526
    %v2541 = vmul.f32 %v2540, %v2539
    %v2542 = vmul.f32 0.5, %v2541
    %v2543 = vsub.f32 1.5, %v2542
    %v2544 = vmul.f32 %v2539, %v2543
    %vm2545 = vweird.f32 %v2526
    %vm2546 = vweird.f32 %v2539
    %vm2547 = vmor %vm2545, %vm2546
    %v2548 = vsel %vm2547, %v2539, %v2544
    %v2549 = vrsqrt.pop %v2527
    %v2550 = vmul.f32 %v2549, %v2527
    %v2551 = vmul.f32 %v2550, %v2549
    %v2552 = vmul.f32 0.5, %v2551
    %v2553 = vsub.f32 1.5, %v2552
    %v2554 = vmul.f32 %v2549, %v2553
    %vm2555 = vweird.f32 %v2527
    %vm2556 = vweird.f32 %v2549
    %vm2557 = vmor %vm2555, %vm2556
    %v2558 = vsel %vm2557, %v2549, %v2554
    %v2559 = vrsqrt.pop %v2528
    %v2560 = vmul.f32 %v2559, %v2528
    %v2561 = vmul.f32 %v2560, %v2559
    %v2562 = vmul.f32 0.5, %v2561
    %v2563 = vsub.f32 1.5, %v2562
    %v2564 = vmul.f32 %v2559, %v2563
    %vm2565 = vweird.f32 %v2528
    %vm2566 = vweird.f32 %v2559
    %vm2567 = vmor %vm2565, %vm2566
    %v2568 = vsel %vm2567, %v2559, %v2564
    %v2569 = vmul.f32 %v2501, %v2538
    %v2570 = vmul.f32 %v2502, %v2548
    %v2571 = vmul.f32 %v2503, %v2558
    %v2572 = vmul.f32 %v2504, %v2568
    %v2573 = vld [vmem:[#allocation7 + $0x18] sm:$0x1]
    %v2574 = vperm.slane %v2573, 0
    %v2575 = vmul.f32 %v2569, %v2574
    %v2576 = vmul.f32 %v2570, %v2574
    %v2577 = vmul.f32 %v2571, %v2574
    %v2578 = vmul.f32 %v2572, %v2574
    %v2579 = vld [vmem:[#allocation7 + $0x19] sm:$0x1]
    %v2580 = vperm.slane %v2579, 0
    %v2581 = vadd.f32 %v2575, %v2580
    %v2582 = vadd.f32 %v2576, %v2580
    %v2583 = vadd.f32 %v2577, %v2580
    %v2584 = vadd.f32 %v2578, %v2580
    %v2585 = vld [vmem:[#allocation5 + $0x390] sm:$0xff]
    %v2586 = vld [vmem:[#allocation5 + $0x398] sm:$0xff]
    %v2587 = vld [vmem:[#allocation5 + $0x3a0] sm:$0xff]
    %v2588 = vld [vmem:[#allocation5 + $0x3a8] sm:$0xff]
    %v2589 = vpack.c.bf16 %v2582, %v2581
    %v2590 = vpack.c.bf16 %v2584, %v2583
    %v2591 = vpack.c.bf16 %v2586, %v2585
    %v2592 = vpack.c.bf16 %v2588, %v2587
    %v2593 = vld [vmem:[#allocation7 + $0x1a] sm:$0x1]
    %v2594 = vperm.slane %v2593, 0
    %v2596 = vsel %vm154, %v2589, 0
    %v2599 = vsel %vm154, %v2590, 0
    %2601 = vmatpush.bf16.msra.mxu0 0
    %2602 = vmatpush.bf16.msra.mxu0 0
    %2603 = vmatpush.bf16.msra.mxu0 0
    %2604 = vmatpush.bf16.msra.mxu0 0
    %2605 = vmatpush.bf16.msra.mxu0 0
    %2606 = vmatpush.bf16.msra.mxu0 0
    %2607 = vmatpush.bf16.msra.mxu0 %v2592
    %2608 = vmatpush.bf16.msra.mxu0 %v2591
    %2609 = vmatmul.bf16.gmra.mxu0 %v2596
    %v2610 = vpop.f32.mrf.mxu0
    %v2611 = vadd.f32 %v2594, %v2610
    %v2612 = vpop.f32.mrf.mxu0
    %v2613 = vadd.f32 %v2594, %v2612
    %2614 = vmatmul.bf16.gmra.mxu0 %v2599
    %v2615 = vpop.f32.mrf.mxu0
    %v2616 = vadd.f32 %v2594, %v2615
    %v2617 = vpop.f32.mrf.mxu0
    %v2618 = vadd.f32 %v2594, %v2617
    %2619 = vdwg.mxu0
    %v2620 = vmul.f32 %v2611, %v2611
    %v2621 = vmul.f32 %v2613, %v2613
    %v2622 = vmul.f32 %v2616, %v2616
    %v2623 = vmul.f32 %v2618, %v2618
    %v2624 = vmul.f32 %v2611, %v2620
    %v2625 = vmul.f32 %v2613, %v2621
    %v2626 = vmul.f32 %v2616, %v2622
    %v2627 = vmul.f32 %v2618, %v2623
    %v2628 = vmul.f32 %v2624, 0.044715
    %v2629 = vmul.f32 %v2625, 0.044715
    %v2630 = vmul.f32 %v2626, 0.044715
    %v2631 = vmul.f32 %v2627, 0.044715
    %v2632 = vadd.f32 %v2611, %v2628
    %v2633 = vadd.f32 %v2613, %v2629
    %v2634 = vadd.f32 %v2616, %v2630
    %v2635 = vadd.f32 %v2618, %v2631
    %v2636 = vmul.f32 %v2632, 0.7978846
    %v2637 = vmul.f32 %v2633, 0.7978846
    %v2638 = vmul.f32 %v2634, 0.7978846
    %v2639 = vmul.f32 %v2635, 0.7978846
    %v2640 = vtanh.pop %v2636
    %v2641 = vtanh.pop %v2637
    %v2642 = vtanh.pop %v2638
    %v2643 = vtanh.pop %v2639
    %v2644 = vadd.f32 %v2640, 1.0
    %v2645 = vadd.f32 %v2641, 1.0
    %v2646 = vadd.f32 %v2642, 1.0
    %v2647 = vadd.f32 %v2643, 1.0
    %v2648 = vmul.f32 %v2644, 0.5
    %v2649 = vmul.f32 %v2645, 0.5
    %v2650 = vmul.f32 %v2646, 0.5
    %v2651 = vmul.f32 %v2647, 0.5
    %v2652 = vmul.f32 %v2611, %v2648
    %v2653 = vmul.f32 %v2613, %v2649
    %v2654 = vmul.f32 %v2616, %v2650
    %v2655 = vmul.f32 %v2618, %v2651
    %v2656 = vld [vmem:[#allocation7 + $0x1c] sm:$0x1]
    %v2657 = vld [vmem:[#allocation5 + $0x3b0] sm:$0xff]
    %v2658 = vld [vmem:[#allocation5 + $0x3b8] sm:$0xff]
    %v2659 = vld [vmem:[#allocation5 + $0x3c0] sm:$0xff]
    %v2660 = vld [vmem:[#allocation5 + $0x3c8] sm:$0xff]
    %v2661 = vld [vmem:[#allocation5 + $0x3d0] sm:$0xff]
    %v2662 = vld [vmem:[#allocation5 + $0x3d8] sm:$0xff]
    %v2663 = vld [vmem:[#allocation5 + $0x3e0] sm:$0xff]
    %v2664 = vld [vmem:[#allocation5 + $0x3e8] sm:$0xff]
    %v2665 = vpack.c.bf16 %v2653, %v2652
    %v2666 = vpack.c.bf16 %v2655, %v2654
    %v2667 = vpack.c.bf16 %v2658, %v2657
    %v2668 = vpack.c.bf16 %v2660, %v2659
    %v2669 = vpack.c.bf16 %v2662, %v2661
    %v2670 = vpack.c.bf16 %v2664, %v2663
    %v2671 = vld [vmem:[#allocation7 + $0x1b] sm:$0x1]
    %v2672 = vperm.slane %v2671, 0
    %v2674 = vsel %vm360, %v2665, 0
    %v2677 = vsel %vm360, %v2666, 0
    %2679 = vmatpush.bf16.msra.mxu0 0
    %2680 = vmatpush.bf16.msra.mxu0 0
    %2681 = vmatpush.bf16.msra.mxu0 0
    %2682 = vmatpush.bf16.msra.mxu0 0
    %2683 = vmatpush.bf16.msra.mxu0 %v2670
    %2684 = vmatpush.bf16.msra.mxu0 %v2669
    %2685 = vmatpush.bf16.msra.mxu0 %v2668
    %2686 = vmatpush.bf16.msra.mxu0 %v2667
    %2687 = vmatmul.bf16.gmra.mxu0 %v2674
    %v2688 = vpop.f32.mrf.mxu0
    %v2689 = vadd.f32 %v2672, %v2688
    %v2690 = vpop.f32.mrf.mxu0
    %v2691 = vadd.f32 %v2672, %v2690
    %2692 = vmatmul.bf16.gmra.mxu0 %v2677
    %v2693 = vpop.f32.mrf.mxu0
    %v2694 = vadd.f32 %v2672, %v2693
    %v2695 = vpop.f32.mrf.mxu0
    %v2696 = vadd.f32 %v2672, %v2695
    %2697 = vdwg.mxu0
    %v2698 = vperm.slane %v2656, 0
    %v2699 = vmul.f32 %v2698, %v2689
    %v2700 = vmul.f32 %v2698, %v2691
    %v2701 = vmul.f32 %v2698, %v2694
    %v2702 = vmul.f32 %v2698, %v2696
    %v2703 = vadd.f32 %v2334, %v2699
    %v2704 = vadd.f32 %v2335, %v2700
    %v2705 = vadd.f32 %v2336, %v2701
    %v2706 = vadd.f32 %v2337, %v2702
    %v2707 = vpack.c.bf16 %v2704, %v2703
    %v2708 = vpack.c.bf16 %v2706, %v2705
    %2709 = vmatpush.bf16.msra.mxu0 0
    %2710 = vmatpush.bf16.msra.mxu0 0
    %2711 = vmatpush.bf16.msra.mxu0 0
    %2712 = vmatpush.bf16.msra.mxu0 0
    %2713 = vmatpush.bf16.msra.mxu0 0
    %2714 = vmatpush.bf16.msra.mxu0 0
    %2715 = vmatpush.bf16.msra.mxu0 %v2708
    %2716 = vmatpush.bf16.msra.mxu0 %v2707
    %2717 = vmatmul.bf16.gmra.mxu0 %v156
    %v2718 = vpop.f32.mrf.mxu0
    %v2719 = vadd.f32 0.0, %v2718
    %v2720 = vpop.f32.mrf.mxu0
    %v2721 = vadd.f32 0.0, %v2720
    %2722 = vmatmul.bf16.gmra.mxu0 %v159
    %v2723 = vpop.f32.mrf.mxu0
    %v2724 = vadd.f32 0.0, %v2723
    %v2725 = vpop.f32.mrf.mxu0
    %v2726 = vadd.f32 0.0, %v2725
    %2727 = vmatmul.bf16.gmra.mxu0 %v162
    %v2728 = vpop.f32.mrf.mxu0
    %v2729 = vadd.f32 0.0, %v2728
    %v2730 = vpop.f32.mrf.mxu0
    %v2731 = vadd.f32 0.0, %v2730
    %2732 = vmatmul.bf16.gmra.mxu0 %v165
    %v2733 = vpop.f32.mrf.mxu0
    %v2734 = vadd.f32 0.0, %v2733
    %v2735 = vpop.f32.mrf.mxu0
    %v2736 = vadd.f32 0.0, %v2735
    %2737 = vmatmul.bf16.gmra.mxu0 %v168
    %v2738 = vpop.f32.mrf.mxu0
    %v2739 = vadd.f32 0.0, %v2738
    %v2740 = vpop.f32.mrf.mxu0
    %v2741 = vadd.f32 0.0, %v2740
    %2742 = vmatmul.bf16.gmra.mxu0 %v171
    %v2743 = vpop.f32.mrf.mxu0
    %v2744 = vadd.f32 0.0, %v2743
    %v2745 = vpop.f32.mrf.mxu0
    %v2746 = vadd.f32 0.0, %v2745
    %2747 = vmatmul.bf16.gmra.mxu0 %v174
    %v2748 = vpop.f32.mrf.mxu0
    %v2749 = vadd.f32 0.0, %v2748
    %v2750 = vpop.f32.mrf.mxu0
    %v2751 = vadd.f32 0.0, %v2750
    %2752 = vmatmul.bf16.gmra.mxu0 %v177
    %v2753 = vpop.f32.mrf.mxu0
    %v2754 = vadd.f32 0.0, %v2753
    %v2755 = vpop.f32.mrf.mxu0
    %v2756 = vadd.f32 0.0, %v2755
    %2757 = vmatmul.bf16.gmra.mxu0 %v180
    %v2758 = vpop.f32.mrf.mxu0
    %v2759 = vadd.f32 0.0, %v2758
    %v2760 = vpop.f32.mrf.mxu0
    %v2761 = vadd.f32 0.0, %v2760
    %2762 = vmatmul.bf16.gmra.mxu0 %v183
    %v2763 = vpop.f32.mrf.mxu0
    %v2764 = vadd.f32 0.0, %v2763
    %v2765 = vpop.f32.mrf.mxu0
    %v2766 = vadd.f32 0.0, %v2765
    %2767 = vmatmul.bf16.gmra.mxu0 %v186
    %v2768 = vpop.f32.mrf.mxu0
    %v2769 = vadd.f32 0.0, %v2768
    %v2770 = vpop.f32.mrf.mxu0
    %v2771 = vadd.f32 0.0, %v2770
    %2772 = vmatmul.bf16.gmra.mxu0 %v189
    %v2773 = vpop.f32.mrf.mxu0
    %v2774 = vadd.f32 0.0, %v2773
    %v2775 = vpop.f32.mrf.mxu0
    %v2776 = vadd.f32 0.0, %v2775
    %2777 = vmatmul.bf16.gmra.mxu0 %v192
    %v2778 = vpop.f32.mrf.mxu0
    %v2779 = vadd.f32 0.0, %v2778
    %v2780 = vpop.f32.mrf.mxu0
    %v2781 = vadd.f32 0.0, %v2780
    %2782 = vmatmul.bf16.gmra.mxu0 %v195
    %v2783 = vpop.f32.mrf.mxu0
    %v2784 = vadd.f32 0.0, %v2783
    %v2785 = vpop.f32.mrf.mxu0
    %v2786 = vadd.f32 0.0, %v2785
    %2787 = vdwg.mxu0
    %v2788 = vld [vmem:[#allocation5 + $0x3f0] sm:$0x7f]
    %v2789 = vld [vmem:[#allocation7 + $0x1d] sm:$0x1]
    %v2790 = vperm.slane %v2788, 0
    %v2791 = vmul.f32 %v2719, %v2790
    %v2792 = vmul.f32 %v2721, %v2790
    %v2793 = vmul.f32 %v2724, %v2790
    %v2794 = vmul.f32 %v2726, %v2790
    %v2795 = vperm.slane %v2789, 0
    %v2796 = vadd.f32 %v2795, %v2791
    %v2797 = vadd.f32 %v2795, %v2792
    %v2798 = vadd.f32 %v2795, %v2793
    %v2799 = vadd.f32 %v2795, %v2794
    %v2800 = vperm.slane %v2788, 1
    %v2801 = vmul.f32 %v2729, %v2800
    %v2802 = vmul.f32 %v2731, %v2800
    %v2803 = vmul.f32 %v2734, %v2800
    %v2804 = vmul.f32 %v2736, %v2800
    %v2805 = vadd.f32 %v2796, %v2801
    %v2806 = vadd.f32 %v2797, %v2802
    %v2807 = vadd.f32 %v2798, %v2803
    %v2808 = vadd.f32 %v2799, %v2804
    %v2809 = vperm.slane %v2788, 2
    %v2810 = vmul.f32 %v2739, %v2809
    %v2811 = vmul.f32 %v2741, %v2809
    %v2812 = vmul.f32 %v2744, %v2809
    %v2813 = vmul.f32 %v2746, %v2809
    %v2814 = vadd.f32 %v2805, %v2810
    %v2815 = vadd.f32 %v2806, %v2811
    %v2816 = vadd.f32 %v2807, %v2812
    %v2817 = vadd.f32 %v2808, %v2813
    %v2818 = vperm.slane %v2788, 3
    %v2819 = vmul.f32 %v2749, %v2818
    %v2820 = vmul.f32 %v2751, %v2818
    %v2821 = vmul.f32 %v2754, %v2818
    %v2822 = vmul.f32 %v2756, %v2818
    %v2823 = vadd.f32 %v2814, %v2819
    %v2824 = vadd.f32 %v2815, %v2820
    %v2825 = vadd.f32 %v2816, %v2821
    %v2826 = vadd.f32 %v2817, %v2822
    %v2827 = vperm.slane %v2788, 4
    %v2828 = vmul.f32 %v2759, %v2827
    %v2829 = vmul.f32 %v2761, %v2827
    %v2830 = vmul.f32 %v2764, %v2827
    %v2831 = vmul.f32 %v2766, %v2827
    %v2832 = vadd.f32 %v2823, %v2828
    %v2833 = vadd.f32 %v2824, %v2829
    %v2834 = vadd.f32 %v2825, %v2830
    %v2835 = vadd.f32 %v2826, %v2831
    %v2836 = vperm.slane %v2788, 5
    %v2837 = vmul.f32 %v2769, %v2836
    %v2838 = vmul.f32 %v2771, %v2836
    %v2839 = vmul.f32 %v2774, %v2836
    %v2840 = vmul.f32 %v2776, %v2836
    %v2841 = vadd.f32 %v2832, %v2837
    %v2842 = vadd.f32 %v2833, %v2838
    %v2843 = vadd.f32 %v2834, %v2839
    %v2844 = vadd.f32 %v2835, %v2840
    %v2845 = vperm.slane %v2788, 6
    %v2846 = vmul.f32 %v2779, %v2845
    %v2847 = vmul.f32 %v2781, %v2845
    %v2848 = vmul.f32 %v2784, %v2845
    %v2849 = vmul.f32 %v2786, %v2845
    %v2850 = vadd.f32 %v2841, %v2846
    %v2851 = vadd.f32 %v2842, %v2847
    %v2852 = vadd.f32 %v2843, %v2848
    %v2853 = vadd.f32 %v2844, %v2849
    %v2854 = vsel %vm154, %v2850, 0.0
    %2855 = vadd.xlane.f32.xlu0 %v2854
    %v2856 = vpop.xlane.xlu0 %2855
    %v2857 = vsel %vm154, %v2851, 0.0
    %2858 = vadd.xlane.f32.xlu0 %v2857
    %v2859 = vpop.xlane.xlu0 %2858
    %v2860 = vsel %vm154, %v2852, 0.0
    %2861 = vadd.xlane.f32.xlu0 %v2860
    %v2862 = vpop.xlane.xlu0 %2861
    %v2863 = vsel %vm154, %v2853, 0.0
    %2864 = vadd.xlane.f32.xlu0 %v2863
    %v2865 = vpop.xlane.xlu0 %2864
    %v2866 = vmul.f32 %v2856, %v488
    %v2867 = vmul.f32 %v2859, %v488
    %v2868 = vmul.f32 %v2862, %v488
    %v2869 = vmul.f32 %v2865, %v488
    %v2870 = vsub.f32 %v2850, %v2866
    %v2871 = vsub.f32 %v2851, %v2867
    %v2872 = vsub.f32 %v2852, %v2868
    %v2873 = vsub.f32 %v2853, %v2869
    %v2874 = vmul.f32 %v2870, %v2870
    %v2875 = vmul.f32 %v2871, %v2871
    %v2876 = vmul.f32 %v2872, %v2872
    %v2877 = vmul.f32 %v2873, %v2873
    %v2878 = vsel %vm154, %v2874, 0.0
    %2879 = vadd.xlane.f32.xlu0 %v2878
    %v2880 = vpop.xlane.xlu0 %2879
    %v2881 = vsel %vm154, %v2875, 0.0
    %2882 = vadd.xlane.f32.xlu0 %v2881
    %v2883 = vpop.xlane.xlu0 %2882
    %v2884 = vsel %vm154, %v2876, 0.0
    %2885 = vadd.xlane.f32.xlu0 %v2884
    %v2886 = vpop.xlane.xlu0 %2885
    %v2887 = vsel %vm154, %v2877, 0.0
    %2888 = vadd.xlane.f32.xlu0 %v2887
    %v2889 = vpop.xlane.xlu0 %2888
    %v2890 = vmul.f32 %v2880, %v488
    %v2891 = vmul.f32 %v2883, %v488
    %v2892 = vmul.f32 %v2886, %v488
    %v2893 = vmul.f32 %v2889, %v488
    %v2894 = vadd.f32 %v2890, 1e-06
    %v2895 = vadd.f32 %v2891, 1e-06
    %v2896 = vadd.f32 %v2892, 1e-06
    %v2897 = vadd.f32 %v2893, 1e-06
    %v2898 = vrsqrt.pop %v2894
    %v2899 = vmul.f32 %v2898, %v2894
    %v2900 = vmul.f32 %v2899, %v2898
    %v2901 = vmul.f32 0.5, %v2900
    %v2902 = vsub.f32 1.5, %v2901
    %v2903 = vmul.f32 %v2898, %v2902
    %vm2904 = vweird.f32 %v2894
    %vm2905 = vweird.f32 %v2898
    %vm2906 = vmor %vm2904, %vm2905
    %v2907 = vsel %vm2906, %v2898, %v2903
    %v2908 = vrsqrt.pop %v2895
    %v2909 = vmul.f32 %v2908, %v2895
    %v2910 = vmul.f32 %v2909, %v2908
    %v2911 = vmul.f32 0.5, %v2910
    %v2912 = vsub.f32 1.5, %v2911
    %v2913 = vmul.f32 %v2908, %v2912
    %vm2914 = vweird.f32 %v2895
    %vm2915 = vweird.f32 %v2908
    %vm2916 = vmor %vm2914, %vm2915
    %v2917 = vsel %vm2916, %v2908, %v2913
    %v2918 = vrsqrt.pop %v2896
    %v2919 = vmul.f32 %v2918, %v2896
    %v2920 = vmul.f32 %v2919, %v2918
    %v2921 = vmul.f32 0.5, %v2920
    %v2922 = vsub.f32 1.5, %v2921
    %v2923 = vmul.f32 %v2918, %v2922
    %vm2924 = vweird.f32 %v2896
    %vm2925 = vweird.f32 %v2918
    %vm2926 = vmor %vm2924, %vm2925
    %v2927 = vsel %vm2926, %v2918, %v2923
    %v2928 = vrsqrt.pop %v2897
    %v2929 = vmul.f32 %v2928, %v2897
    %v2930 = vmul.f32 %v2929, %v2928
    %v2931 = vmul.f32 0.5, %v2930
    %v2932 = vsub.f32 1.5, %v2931
    %v2933 = vmul.f32 %v2928, %v2932
    %vm2934 = vweird.f32 %v2897
    %vm2935 = vweird.f32 %v2928
    %vm2936 = vmor %vm2934, %vm2935
    %v2937 = vsel %vm2936, %v2928, %v2933
    %v2938 = vmul.f32 %v2870, %v2907
    %v2939 = vmul.f32 %v2871, %v2917
    %v2940 = vmul.f32 %v2872, %v2927
    %v2941 = vmul.f32 %v2873, %v2937
    %v2942 = vld [vmem:[#allocation7 + $0x1e] sm:$0x1]
    %v2943 = vperm.slane %v2942, 0
    %v2944 = vmul.f32 %v2938, %v2943
    %v2945 = vmul.f32 %v2939, %v2943
    %v2946 = vmul.f32 %v2940, %v2943
    %v2947 = vmul.f32 %v2941, %v2943
    %v2948 = vld [vmem:[#allocation7 + $0x1f] sm:$0x1]
    %v2949 = vperm.slane %v2948, 0
    %v2950 = vadd.f32 %v2944, %v2949
    %v2951 = vadd.f32 %v2945, %v2949
    %v2952 = vadd.f32 %v2946, %v2949
    %v2953 = vadd.f32 %v2947, %v2949
    %v2954 = vld [vmem:[#allocation5 + $0x3f8] sm:$0xff]
    %v2955 = vld [vmem:[#allocation5 + $0x400] sm:$0xff]
    %v2956 = vld [vmem:[#allocation5 + $0x408] sm:$0xff]
    %v2957 = vld [vmem:[#allocation5 + $0x410] sm:$0xff]
    %v2958 = vpack.c.bf16 %v2951, %v2950
    %v2959 = vpack.c.bf16 %v2953, %v2952
    %v2960 = vpack.c.bf16 %v2955, %v2954
    %v2961 = vpack.c.bf16 %v2957, %v2956
    %v2962 = vld [vmem:[#allocation7 + $0x20] sm:$0x1]
    %v2963 = vperm.slane %v2962, 0
    %v2965 = vsel %vm154, %v2958, 0
    %v2968 = vsel %vm154, %v2959, 0
    %2970 = vmatpush.bf16.msra.mxu0 0
    %2971 = vmatpush.bf16.msra.mxu0 0
    %2972 = vmatpush.bf16.msra.mxu0 0
    %2973 = vmatpush.bf16.msra.mxu0 0
    %2974 = vmatpush.bf16.msra.mxu0 0
    %2975 = vmatpush.bf16.msra.mxu0 0
    %2976 = vmatpush.bf16.msra.mxu0 %v2961
    %2977 = vmatpush.bf16.msra.mxu0 %v2960
    %2978 = vmatmul.bf16.gmra.mxu0 %v2965
    %v2979 = vpop.f32.mrf.mxu0
    %v2980 = vadd.f32 %v2963, %v2979
    %v2981 = vpop.f32.mrf.mxu0
    %v2982 = vadd.f32 %v2963, %v2981
    %2983 = vmatmul.bf16.gmra.mxu0 %v2968
    %v2984 = vpop.f32.mrf.mxu0
    %v2985 = vadd.f32 %v2963, %v2984
    %v2986 = vpop.f32.mrf.mxu0
    %v2987 = vadd.f32 %v2963, %v2986
    %2988 = vdwg.mxu0
    %v2989 = vmul.f32 %v2980, %v2980
    %v2990 = vmul.f32 %v2982, %v2982
    %v2991 = vmul.f32 %v2985, %v2985
    %v2992 = vmul.f32 %v2987, %v2987
    %v2993 = vmul.f32 %v2980, %v2989
    %v2994 = vmul.f32 %v2982, %v2990
    %v2995 = vmul.f32 %v2985, %v2991
    %v2996 = vmul.f32 %v2987, %v2992
    %v2997 = vmul.f32 %v2993, 0.044715
    %v2998 = vmul.f32 %v2994, 0.044715
    %v2999 = vmul.f32 %v2995, 0.044715
    %v3000 = vmul.f32 %v2996, 0.044715
    %v3001 = vadd.f32 %v2980, %v2997
    %v3002 = vadd.f32 %v2982, %v2998
    %v3003 = vadd.f32 %v2985, %v2999
    %v3004 = vadd.f32 %v2987, %v3000
    %v3005 = vmul.f32 %v3001, 0.7978846
    %v3006 = vmul.f32 %v3002, 0.7978846
    %v3007 = vmul.f32 %v3003, 0.7978846
    %v3008 = vmul.f32 %v3004, 0.7978846
    %v3009 = vtanh.pop %v3005
    %v3010 = vtanh.pop %v3006
    %v3011 = vtanh.pop %v3007
    %v3012 = vtanh.pop %v3008
    %v3013 = vadd.f32 %v3009, 1.0
    %v3014 = vadd.f32 %v3010, 1.0
    %v3015 = vadd.f32 %v3011, 1.0
    %v3016 = vadd.f32 %v3012, 1.0
    %v3017 = vmul.f32 %v3013, 0.5
    %v3018 = vmul.f32 %v3014, 0.5
    %v3019 = vmul.f32 %v3015, 0.5
    %v3020 = vmul.f32 %v3016, 0.5
    %v3021 = vmul.f32 %v2980, %v3017
    %v3022 = vmul.f32 %v2982, %v3018
    %v3023 = vmul.f32 %v2985, %v3019
    %v3024 = vmul.f32 %v2987, %v3020
    %v3025 = vld [vmem:[#allocation7 + $0x22] sm:$0x1]
    %v3026 = vld [vmem:[#allocation5 + $0x418] sm:$0xff]
    %v3027 = vld [vmem:[#allocation5 + $0x420] sm:$0xff]
    %v3028 = vld [vmem:[#allocation5 + $0x428] sm:$0xff]
    %v3029 = vld [vmem:[#allocation5 + $0x430] sm:$0xff]
    %v3030 = vld [vmem:[#allocation5 + $0x438] sm:$0xff]
    %v3031 = vld [vmem:[#allocation5 + $0x440] sm:$0xff]
    %v3032 = vld [vmem:[#allocation5 + $0x448] sm:$0xff]
    %v3033 = vld [vmem:[#allocation5 + $0x450] sm:$0xff]
    %v3034 = vpack.c.bf16 %v3022, %v3021
    %v3035 = vpack.c.bf16 %v3024, %v3023
    %v3036 = vpack.c.bf16 %v3027, %v3026
    %v3037 = vpack.c.bf16 %v3029, %v3028
    %v3038 = vpack.c.bf16 %v3031, %v3030
    %v3039 = vpack.c.bf16 %v3033, %v3032
    %v3040 = vld [vmem:[#allocation7 + $0x21] sm:$0x1]
    %v3041 = vperm.slane %v3040, 0
    %v3043 = vsel %vm360, %v3034, 0
    %v3046 = vsel %vm360, %v3035, 0
    %3048 = vmatpush.bf16.msra.mxu0 0
    %3049 = vmatpush.bf16.msra.mxu0 0
    %3050 = vmatpush.bf16.msra.mxu0 0
    %3051 = vmatpush.bf16.msra.mxu0 0
    %3052 = vmatpush.bf16.msra.mxu0 %v3039
    %3053 = vmatpush.bf16.msra.mxu0 %v3038
    %3054 = vmatpush.bf16.msra.mxu0 %v3037
    %3055 = vmatpush.bf16.msra.mxu0 %v3036
    %3056 = vmatmul.bf16.gmra.mxu0 %v3043
    %v3057 = vpop.f32.mrf.mxu0
    %v3058 = vadd.f32 %v3041, %v3057
    %v3059 = vpop.f32.mrf.mxu0
    %v3060 = vadd.f32 %v3041, %v3059
    %3061 = vmatmul.bf16.gmra.mxu0 %v3046
    %v3062 = vpop.f32.mrf.mxu0
    %v3063 = vadd.f32 %v3041, %v3062
    %v3064 = vpop.f32.mrf.mxu0
    %v3065 = vadd.f32 %v3041, %v3064
    %3066 = vdwg.mxu0
    %v3067 = vperm.slane %v3025, 0
    %v3068 = vmul.f32 %v3067, %v3058
    %v3069 = vmul.f32 %v3067, %v3060
    %v3070 = vmul.f32 %v3067, %v3063
    %v3071 = vmul.f32 %v3067, %v3065
    %v3072 = vadd.f32 %v2703, %v3068
    %v3073 = vadd.f32 %v2704, %v3069
    %v3074 = vadd.f32 %v2705, %v3070
    %v3075 = vadd.f32 %v2706, %v3071
    %v3076 = vsel %vm154, %v3072, 0.0
    %3077 = vadd.xlane.f32.xlu0 %v3076
    %v3078 = vpop.xlane.xlu0 %3077
    %v3079 = vsel %vm154, %v3073, 0.0
    %3080 = vadd.xlane.f32.xlu0 %v3079
    %v3081 = vpop.xlane.xlu0 %3080
    %v3082 = vsel %vm154, %v3074, 0.0
    %3083 = vadd.xlane.f32.xlu0 %v3082
    %v3084 = vpop.xlane.xlu0 %3083
    %v3085 = vsel %vm154, %v3075, 0.0
    %3086 = vadd.xlane.f32.xlu0 %v3085
    %v3087 = vpop.xlane.xlu0 %3086
    %v3088 = vmul.f32 %v3078, %v488
    %v3089 = vmul.f32 %v3081, %v488
    %v3090 = vmul.f32 %v3084, %v488
    %v3091 = vmul.f32 %v3087, %v488
    %v3092 = vsub.f32 %v3072, %v3088
    %v3093 = vsub.f32 %v3073, %v3089
    %v3094 = vsub.f32 %v3074, %v3090
    %v3095 = vsub.f32 %v3075, %v3091
    %v3096 = vmul.f32 %v3092, %v3092
    %v3097 = vmul.f32 %v3093, %v3093
    %v3098 = vmul.f32 %v3094, %v3094
    %v3099 = vmul.f32 %v3095, %v3095
    %v3100 = vsel %vm154, %v3096, 0.0
    %3101 = vadd.xlane.f32.xlu0 %v3100
    %v3102 = vpop.xlane.xlu0 %3101
    %v3103 = vsel %vm154, %v3097, 0.0
    %3104 = vadd.xlane.f32.xlu0 %v3103
    %v3105 = vpop.xlane.xlu0 %3104
    %v3106 = vsel %vm154, %v3098, 0.0
    %3107 = vadd.xlane.f32.xlu0 %v3106
    %v3108 = vpop.xlane.xlu0 %3107
    %v3109 = vsel %vm154, %v3099, 0.0
    %3110 = vadd.xlane.f32.xlu0 %v3109
    %v3111 = vpop.xlane.xlu0 %3110
    %v3112 = vmul.f32 %v3102, %v488
    %v3113 = vmul.f32 %v3105, %v488
    %v3114 = vmul.f32 %v3108, %v488
    %v3115 = vmul.f32 %v3111, %v488
    %v3116 = vadd.f32 %v3112, 1e-06
    %v3117 = vadd.f32 %v3113, 1e-06
    %v3118 = vadd.f32 %v3114, 1e-06
    %v3119 = vadd.f32 %v3115, 1e-06
    %v3120 = vrsqrt.pop %v3116
    %v3121 = vmul.f32 %v3120, %v3116
    %v3122 = vmul.f32 %v3121, %v3120
    %v3123 = vmul.f32 0.5, %v3122
    %v3124 = vsub.f32 1.5, %v3123
    %v3125 = vmul.f32 %v3120, %v3124
    %vm3126 = vweird.f32 %v3116
    %vm3127 = vweird.f32 %v3120
    %vm3128 = vmor %vm3126, %vm3127
    %v3129 = vsel %vm3128, %v3120, %v3125
    %v3130 = vrsqrt.pop %v3117
    %v3131 = vmul.f32 %v3130, %v3117
    %v3132 = vmul.f32 %v3131, %v3130
    %v3133 = vmul.f32 0.5, %v3132
    %v3134 = vsub.f32 1.5, %v3133
    %v3135 = vmul.f32 %v3130, %v3134
    %vm3136 = vweird.f32 %v3117
    %vm3137 = vweird.f32 %v3130
    %vm3138 = vmor %vm3136, %vm3137
    %v3139 = vsel %vm3138, %v3130, %v3135
    %v3140 = vrsqrt.pop %v3118
    %v3141 = vmul.f32 %v3140, %v3118
    %v3142 = vmul.f32 %v3141, %v3140
    %v3143 = vmul.f32 0.5, %v3142
    %v3144 = vsub.f32 1.5, %v3143
    %v3145 = vmul.f32 %v3140, %v3144
    %vm3146 = vweird.f32 %v3118
    %vm3147 = vweird.f32 %v3140
    %vm3148 = vmor %vm3146, %vm3147
    %v3149 = vsel %vm3148, %v3140, %v3145
    %v3150 = vrsqrt.pop %v3119
    %v3151 = vmul.f32 %v3150, %v3119
    %v3152 = vmul.f32 %v3151, %v3150
    %v3153 = vmul.f32 0.5, %v3152
    %v3154 = vsub.f32 1.5, %v3153
    %v3155 = vmul.f32 %v3150, %v3154
    %vm3156 = vweird.f32 %v3119
    %vm3157 = vweird.f32 %v3150
    %vm3158 = vmor %vm3156, %vm3157
    %v3159 = vsel %vm3158, %v3150, %v3155
    %v3160 = vmul.f32 %v3092, %v3129
    %v3161 = vmul.f32 %v3093, %v3139
    %v3162 = vmul.f32 %v3094, %v3149
    %v3163 = vmul.f32 %v3095, %v3159
    %v3164 = vld [vmem:[#allocation7 + $0x15] sm:$0x1]
    %v3165 = vperm.slane %v3164, 0
    %v3166 = vmul.f32 %v3160, %v3165
    %v3167 = vmul.f32 %v3161, %v3165
    %v3168 = vmul.f32 %v3162, %v3165
    %v3169 = vmul.f32 %v3163, %v3165
    %v3170 = vld [vmem:[#allocation7 + $0x16] sm:$0x1]
    %v3171 = vperm.slane %v3170, 0
    %v3172 = vadd.f32 %v3166, %v3171
    %v3173 = vadd.f32 %v3167, %v3171
    %v3174 = vadd.f32 %v3168, %v3171
    %v3175 = vadd.f32 %v3169, %v3171
    %v3176 = vld [vmem:[#allocation5 + $0x4e0] sm:$0xff]
    %v3177 = vld [vmem:[#allocation5 + $0x4e8] sm:$0xff]
    %v3178 = vld [vmem:[#allocation5 + $0x4f0] sm:$0xff]
    %v3179 = vld [vmem:[#allocation5 + $0x4f8] sm:$0xff]
    %v3180 = vpack.c.bf16 %v3173, %v3172
    %v3181 = vpack.c.bf16 %v3175, %v3174
    %v3182 = vpack.c.bf16 %v3177, %v3176
    %v3183 = vpack.c.bf16 %v3179, %v3178
    %v3184 = vld [vmem:[#allocation7 + $0x26] sm:$0x1]
    %v3185 = vperm.slane %v3184, 0
    %v3187 = vsel %vm154, %v3180, 0
    %v3190 = vsel %vm154, %v3181, 0
    %3192 = vmatpush.bf16.msra.mxu0 0
    %3193 = vmatpush.bf16.msra.mxu0 0
    %3194 = vmatpush.bf16.msra.mxu0 0
    %3195 = vmatpush.bf16.msra.mxu0 0
    %3196 = vmatpush.bf16.msra.mxu0 0
    %3197 = vmatpush.bf16.msra.mxu0 0
    %3198 = vmatpush.bf16.msra.mxu0 %v3183
    %3199 = vmatpush.bf16.msra.mxu0 %v3182
    %3200 = vmatmul.bf16.gmra.mxu0 %v3187
    %v3201 = vpop.f32.mrf.mxu0
    %v3202 = vadd.f32 %v3185, %v3201
    %v3203 = vpop.f32.mrf.mxu0
    %v3204 = vadd.f32 %v3185, %v3203
    %3205 = vmatmul.bf16.gmra.mxu0 %v3190
    %v3206 = vpop.f32.mrf.mxu0
    %v3207 = vadd.f32 %v3185, %v3206
    %v3208 = vpop.f32.mrf.mxu0
    %v3209 = vadd.f32 %v3185, %v3208
    %3210 = vdwg.mxu0
    %v3211 = vld [vmem:[#allocation5 + $0x500] sm:$0xff]
    %v3212 = vld [vmem:[#allocation5 + $0x508] sm:$0xff]
    %v3213 = vld [vmem:[#allocation5 + $0x510] sm:$0xff]
    %v3214 = vld [vmem:[#allocation5 + $0x518] sm:$0xff]
    %v3215 = vpack.c.bf16 %v3204, %v3202
    %v3216 = vpack.c.bf16 %v3209, %v3207
    %v3217 = vpack.c.bf16 %v3212, %v3211
    %v3218 = vpack.c.bf16 %v3214, %v3213
    %v3219 = vld [vmem:[#allocation7 + $0x27] sm:$0x1]
    %v3220 = vperm.slane %v3219, 0
    %v3222 = vsel %vm154, %v3215, 0
    %v3225 = vsel %vm154, %v3216, 0
    %3227 = vmatpush.bf16.msra.mxu0 0
    %3228 = vmatpush.bf16.msra.mxu0 0
    %3229 = vmatpush.bf16.msra.mxu0 0
    %3230 = vmatpush.bf16.msra.mxu0 0
    %3231 = vmatpush.bf16.msra.mxu0 0
    %3232 = vmatpush.bf16.msra.mxu0 0
    %3233 = vmatpush.bf16.msra.mxu0 %v3218
    %3234 = vmatpush.bf16.msra.mxu0 %v3217
    %3235 = vmatmul.bf16.gmra.mxu0 %v3222
    %v3236 = vpop.f32.mrf.mxu0
    %v3237 = vadd.f32 %v3220, %v3236
    %v3238 = vpop.f32.mrf.mxu0
    %v3239 = vadd.f32 %v3220, %v3238
    %3240 = vmatmul.bf16.gmra.mxu0 %v3225
    %v3241 = vpop.f32.mrf.mxu0
    %v3242 = vadd.f32 %v3220, %v3241
    %v3243 = vpop.f32.mrf.mxu0
    %v3244 = vadd.f32 %v3220, %v3243
    %3245 = vdwg.mxu0
    %3246 = vst.msk [vmem:[#allocation8] sm:$0xff] %vm108, %v3237
    %3247 = vst.msk [vmem:[#allocation8 + $0x8] sm:$0xff] %vm108, %v3239
    %3248 = vst.msk [vmem:[#allocation8 + $0x10] sm:$0xff] %vm108, %v3242
    %3249 = vst.msk [vmem:[#allocation8 + $0x18] sm:$0xff] %vm108, %v3244
    // Predicated region
    $region26: #{forward.1} parent=1 // pred_check
      _
    $region27: #{forward.1} parent=1 // pred_check_branch
      %3251 = sbr.rel (0) target = $region29
    $region28: #{forward.1} parent=1 // pred_region
      %3253 = vsyncadd [#allocation4], 0
      %s3254 = sshll.u32 [#allocation8], 4
      %s3255 = int_to_ptr.vmem [resolvable:$true] %s3254
      %s3256 = sshll.u32 %s3, 4
      %s3257 = int_to_ptr.hbm [resolvable:$true] %s3256
      %3262 = dma.vmem_to_hbm [thread:$0]  %s3255, 512, %s3257, [#allocation4], 128, 128, 8
    $region29: #{forward.1} parent=1 // pred_fallthru
      _
    // Predicated region
    $region30: #{forward.1} parent=1 // pred_check
      _
    $region31: #{forward.1} parent=1 // pred_check_branch
      %3264 = sbr.rel (0) target = $region33
    $region32: #{forward.1} parent=1 // pred_region
      %3266 = vsyncadd [#allocation10], 0
      %s3268 = sshll.u32 [#allocation9], 4
      %s3269 = int_to_ptr.vmem [resolvable:$true] %s3268
      %s3270 = sshll.u32 %s4, 4
      %s3271 = int_to_ptr.hbm [resolvable:$true] %s3270
      %3273 = dma.vmem_to_hbm [thread:$0]  %s3269, 16, %s3271, [#allocation10]
    $region33: #{forward.1} parent=1 // pred_fallthru
      _
    // Predicated region
    $region34: #{forward.1} parent=1 // pred_check
      _
    $region35: #{forward.1} parent=1 // pred_check_branch
      %3275 = sbr.rel (0) target = $region37
    $region36: #{forward.1} parent=1 // pred_region
      _
    $region37: #{forward.1} parent=1 // pred_fallthru
      _
    // Predicated region
    $region38: #{forward.1} parent=1 // pred_check
      _
    $region39: #{forward.1} parent=1 // pred_check_branch
      %3277 = sbr.rel (0) target = $region41
    $region40: #{forward.1} parent=1 // pred_region
      %3279 = dma.done [#allocation4], 512
    $region41: #{forward.1} parent=1 // pred_fallthru
      _
    // Predicated region
    $region42: #{forward.1} parent=1 // pred_check
      _
    $region43: #{forward.1} parent=1 // pred_check_branch
      %3281 = sbr.rel (0) target = $region45
    $region44: #{forward.1} parent=1 // pred_region
      %3283 = dma.done [#allocation10], 16
    $region45: #{forward.1} parent=1 // pred_fallthru
      _
    // Predicated region
    $region46: #{forward.1} parent=1 // pred_check
      _
    $region47: #{forward.1} parent=1 // pred_check_branch
      %3285 = sbr.rel (0) target = $region49
    $region48: #{forward.1} parent=1 // pred_region
      _
    $region49: #{forward.1} parent=1 // pred_fallthru
      _
    %3286 = vsyncpa [#allocation3], 1
    %3287 = vsyncpa [#allocation6], 1
    %3288 = vsyncpa [#allocation4], 1
    %3289 = vsyncpa [#allocation10], 1

</llo_original>
